<compile_context>
chip_gen: v7x
topology: tpu7x:2x2x1
jax: 0.10.0
libtpu: 0.0.40
codegen_flags: <defaults>
</compile_context>

<pallas_src>
import functools

import jax
import jax.numpy as jnp
from jax.experimental import pallas as pl
from jax.experimental.pallas import tpu as pltpu

LANES = 128  # TPU lane width


def _round_up(x, m):
    return -(-x // m) * m


# -----------------------------------------------------------------------------
# Kernel 1: tap-packed 3x3 / stride-2 / pad-1 conv + bias + ReLU
#           == one big-M bf16 MXU matmul per row tile, dense-lane store.
# -----------------------------------------------------------------------------
def _conv_matmul_kernel(x_ref, w_ref, b_ref, o_ref):
    # x: (TM, Kp) bf16   w: (Kp, Cop) bf16   b: (1, Cop) f32   o: (TM, Cop) bf16
    acc = jnp.dot(x_ref[...], w_ref[...], preferred_element_type=jnp.float32)
    o_ref[...] = jnp.maximum(acc + b_ref[...], 0.0).astype(o_ref.dtype)


def _conv_row_tile(n_groups, G, target_rows=2048):
    """Rows per conv grid step: as many whole row-groups as fit ~target_rows
    (large-M MXU operands, small double-buffered VMEM), and always either a
    multiple of 8 sublanes or the full extent (BlockSpec (8,128) rule)."""
    M = n_groups * G
    if M <= target_rows:
        return M
    TG = max(1, target_rows // G)
    while TG > 1 and n_groups % TG:
        TG -= 1
    TM = TG * G
    if TM % 8:
        return M            # rare fallback: a single whole-extent block is always legal
    return TM


def conv3x3_s2_relu(x_nhwc, w, b, *, col_phase_split):
    """3x3 / stride-2 / pad-1 conv + bias + ReLU.

    Returns ((N, Ho*Wo, Cout padded to 128 lanes) bf16, (Ho, Wo)).
    Row order is row-major over (i, j); with col_phase_split it is
    [even output columns ; odd output columns], each row-major over (i, j//2),
    which is exactly the layout the fused decoder consumes (no relayout later).
    """
    N, H, W, Cin = x_nhwc.shape
    Cout = w.shape[3]
    Ho, Wo = (H - 1) // 2 + 1, (W - 1) // 2 + 1

    xb = x_nhwc.astype(jnp.bfloat16)
    xp = jnp.pad(xb, ((0, 0), (1, 2 * Ho - H), (1, 2 * Wo - W), (0, 0)))
    # The nine taps are packed along the contraction axis (K = 9*Cin), so the MXU
    # sees a dense K instead of a Cin->128 zero-padded one and the input DMA moves
    # Ho*Wo*K elements instead of a 9x/42x-amplified padded image.
    taps = [xp[:, di:di + 2 * Ho:2, dj:dj + 2 * Wo:2, :]
            for di in range(3) for dj in range(3)]
    col = jnp.concatenate(taps, axis=-1)                         # (N, Ho, Wo, 9*Cin)

    if col_phase_split:
        assert Wo % 2 == 0
        G = Wo // 2
        col = jnp.concatenate([col[:, :, 0::2, :], col[:, :, 1::2, :]], axis=1)
        n_groups = 2 * Ho                                        # (col-parity, i) groups
    else:
        G = Wo
        n_groups = Ho

    K = 9 * Cin
    Kp = _round_up(K, LANES)          # one dot even if Kp > 128 (Mosaic splits K)
    Cop = _round_up(Cout, LANES)
    M = n_groups * G
    TM = _conv_row_tile(n_groups, G)

    colp = jnp.pad(col.reshape(N, M, K), ((0, 0), (0, 0), (0, Kp - K)))
    wp = jnp.pad(w.astype(jnp.bfloat16).reshape(9 * Cin, Cout),
                 ((0, Kp - K), (0, Cop - Cout)))
    bp = jnp.pad(b.astype(jnp.float32).reshape(1, Cout), ((0, 0), (0, Cop - Cout)))

    out = pl.pallas_call(
        _conv_matmul_kernel,
        out_shape=jax.ShapeDtypeStruct((N, M, Cop), jnp.bfloat16),
        grid=(N, M // TM),
        in_specs=[
            pl.BlockSpec((None, TM, Kp), lambda n, m: (n, m, 0)),
            pl.BlockSpec((Kp, Cop), lambda n, m: (0, 0)),
            pl.BlockSpec((1, Cop), lambda n, m: (0, 0)),
        ],
        out_specs=pl.BlockSpec((None, TM, Cop), lambda n, m: (n, m, 0)),
        compiler_params=pltpu.CompilerParams(
            dimension_semantics=("parallel", "parallel"),
            vmem_limit_bytes=32 * 1024 * 1024),
    )(colp, wp, bp)
    return out, (Ho, Wo)


# -----------------------------------------------------------------------------
# Kernel 2: fused decoder.
#   s1 = head1(f1); s2 = head2(f2); merged = s1 + up2x_crop(s2);
#   out = up2x_crop(merged)  -- all in one kernel, tiled over stage-2 rows with a
#   one-row halo per input (clamped index map + in-kernel mask on the last tile).
# -----------------------------------------------------------------------------
def _decode_kernel(f2_ref, f2h_ref, f1e_ref, f1eh_ref, f1o_ref, f1oh_ref,
                   wh2_ref, bh2_ref, wh1_ref, bh1_ref,
                   o_ref, s2_scr, s1e_scr, s1o_scr,
                   *, T2, W2, nT2, out_dim):
    live = jnp.where(pl.program_id(1) == nT2 - 1, 0.0, 1.0)   # halo row validity

    wh2, bh2 = wh2_ref[...], bh2_ref[...]
    wh1, bh1 = wh1_ref[...], bh1_ref[...]
    M2b = T2 * W2            # stage-2 rows in this block (flat)
    M1b = 2 * T2 * W2        # stage-1 rows in this block (flat, per column parity)

    def head(x, wgt, bias):  # bf16 MXU dot, f32 accumulate + bias
        return jnp.dot(x, wgt, preferred_element_type=jnp.float32) + bias

    # 1x1 heads (large-M dots); the halo row is zeroed beyond the image bottom.
    s2_scr[0:M2b, :] = head(f2_ref[...], wh2, bh2)
    s2_scr[M2b:M2b + W2, :] = live * head(f2h_ref[0], wh2, bh2)
    s1e_scr[0:M1b, :] = head(f1e_ref[...], wh1, bh1)
    s1e_scr[M1b:M1b + W2, :] = live * head(f1eh_ref[0], wh1, bh1)
    s1o_scr[0:M1b, :] = head(f1o_ref[...], wh1, bh1)
    s1o_scr[M1b:M1b + W2, :] = live * head(f1oh_ref[0], wh1, bh1)

    # right-neighbour along the (half-)width: res[k] = v[k+1], 0 past the edge.
    wmask = (jax.lax.broadcasted_iota(jnp.int32, (W2, 1), 0) < (W2 - 1)
             ).astype(jnp.float32)

    def right(v):            # XLU roll + tiny edge mask (no data copies)
        return wmask * pltpu.roll(v, W2 - 1, axis=0)

    def s2row(i):
        return s2_scr[i * W2:(i + 1) * W2, :]

    def merged_row(i):
        # merged stage-1 row i (local, 0..2*T2; 2*T2 == halo), split into
        # even-/odd-column halves of width W2.  The shifted even half is returned
        # so both output rows that need it reuse one roll.
        if i % 2 == 0:
            a = s2row(i // 2)
        else:
            a = 0.5 * (s2row(i // 2) + s2row(i // 2 + 1))
        me = s1e_scr[i * W2:(i + 1) * W2, :] + a
        mo = s1o_scr[i * W2:(i + 1) * W2, :] + 0.5 * (a + right(a))
        return me, mo, right(me)

    def emit(r, q, v):       # streamed store: output col w = 4*k + q
        o_ref[r, q, :, :] = v[:, :out_dim]

    cur = merged_row(0)
    for i in range(2 * T2):  # short static loop (<= 16 at production tiles)
        nxt = merged_row(i + 1)
        me, mo, rme = cur
        me2, mo2, rme2 = nxt
        emit(2 * i, 0, me)
        emit(2 * i, 1, 0.5 * (me + mo))
        emit(2 * i, 2, mo)
        emit(2 * i, 3, 0.5 * (mo + rme))
        hme = 0.5 * (me + me2)
        hmo = 0.5 * (mo + mo2)
        hrme = 0.5 * (rme + rme2)
        emit(2 * i + 1, 0, hme)
        emit(2 * i + 1, 1, 0.5 * (hme + hmo))
        emit(2 * i + 1, 2, hmo)
        emit(2 * i + 1, 3, 0.5 * (hmo + hrme))
        cur = nxt


def _pick_t2(H2, W2):
    """Stage-2 row-block size: divides H2, keeps flat row blocks sublane aligned
    (T2*W2 % 8 == 0), small enough for a few-MB per-step VMEM footprint, and
    prefers >=2 blocks so both v7x TensorCores get work."""
    cap = max(1, min(8, H2 // 2))
    for cand in range(cap, 0, -1):
        if H2 % cand == 0 and (cand * W2) % 8 == 0:
            return cand
    for cand in range(cap + 1, H2 + 1):
        if H2 % cand == 0 and (cand * W2) % 8 == 0:
            return cand
    return None


def skip_decode(f1_flat, hw1, f2_flat, hw2, wh1, bh1, wh2, bh2):
    N = f1_flat.shape[0]
    H1, W1 = hw1
    H2, W2 = hw2
    assert H1 == 2 * H2 and W1 == 2 * W2
    C1, out_dim = wh1.shape
    C2 = wh2.shape[0]
    Hout = 4 * H2

    T2 = _pick_t2(H2, W2)
    assert T2 is not None, "TODO(synk): unsupported (tiny/odd) spatial extent"
    nT2 = H2 // T2

    # free reshapes exposing one spatial row (per column parity) per leading index,
    # used only by the one-row halo BlockSpecs
    f1g = f1_flat.reshape(N, 2 * H1, W2, LANES)
    f2g = f2_flat.reshape(N, H2, W2, LANES)

    wh1p = jnp.pad(wh1.astype(jnp.bfloat16), ((0, LANES - C1), (0, LANES - out_dim)))
    wh2p = jnp.pad(wh2.astype(jnp.bfloat16), ((0, LANES - C2), (0, LANES - out_dim)))
    bh1p = jnp.pad(bh1.astype(jnp.float32).reshape(1, out_dim),
                   ((0, 0), (0, LANES - out_dim)))
    bh2p = jnp.pad(bh2.astype(jnp.float32).reshape(1, out_dim),
                   ((0, 0), (0, LANES - out_dim)))

    kernel = functools.partial(_decode_kernel, T2=T2, W2=W2, nT2=nT2, out_dim=out_dim)
    return pl.pallas_call(
        kernel,
        out_shape=jax.ShapeDtypeStruct((N, Hout, 4, W2, out_dim), jnp.float32),
        grid=(N, nT2),
        in_specs=[
            # stage-2 rows of this block + one halo row (clamped; masked in-kernel)
            pl.BlockSpec((None, T2 * W2, LANES), lambda n, t: (n, t, 0)),
            pl.BlockSpec((None, 1, W2, LANES),
                         lambda n, t: (n, jnp.minimum((t + 1) * T2, H2 - 1), 0, 0)),
            # stage-1 feature, even columns: rows + one halo row
            pl.BlockSpec((None, 2 * T2 * W2, LANES), lambda n, t: (n, t, 0)),
            pl.BlockSpec((None, 1, W2, LANES),
                         lambda n, t: (n, jnp.minimum(2 * (t + 1) * T2, H1 - 1), 0, 0)),
            # stage-1 feature, odd columns: rows + one halo row
            pl.BlockSpec((None, 2 * T2 * W2, LANES), lambda n, t: (n, nT2 + t, 0)),
            pl.BlockSpec((None, 1, W2, LANES),
                         lambda n, t: (n, H1 + jnp.minimum(2 * (t + 1) * T2, H1 - 1),
                                       0, 0)),
            # resident head weights / biases
            pl.BlockSpec((LANES, LANES), lambda n, t: (0, 0)),
            pl.BlockSpec((1, LANES), lambda n, t: (0, 0)),
            pl.BlockSpec((LANES, LANES), lambda n, t: (0, 0)),
            pl.BlockSpec((1, LANES), lambda n, t: (0, 0)),
        ],
        out_specs=pl.BlockSpec((None, 4 * T2, 4, W2, out_dim),
                               lambda n, t: (n, t, 0, 0, 0)),
        scratch_shapes=[
            pltpu.VMEM(((T2 + 1) * W2, LANES), jnp.float32),      # s2 (+ halo row)
            pltpu.VMEM(((2 * T2 + 1) * W2, LANES), jnp.float32),  # s1, even columns
            pltpu.VMEM(((2 * T2 + 1) * W2, LANES), jnp.float32),  # s1, odd columns
        ],
        compiler_params=pltpu.CompilerParams(
            dimension_semantics=("parallel", "parallel"),
            vmem_limit_bytes=32 * 1024 * 1024),
    )(f2_flat, f2g, f1_flat, f1g, f1_flat, f1g, wh2p, bh2p, wh1p, bh1p)


# -----------------------------------------------------------------------------
# SkipArch forward (Pallas path) and the pure-lax reference.
# -----------------------------------------------------------------------------
def skip_arch_forward(x_nchw, p):
    N, _, H, W = x_nchw.shape
    assert H % 4 == 0 and W % 4 == 0, "TODO(synk): odd/unaligned spatial sizes"
    out_dim = p["wh1"].shape[1]
    C1 = p["w1"].shape[3]

    x = jnp.transpose(x_nchw, (0, 2, 3, 1))                     # NCHW -> NHWC
    # encoder stage 1 (stride 2), emitted column-parity split for the decoder
    f1, (H1, W1) = conv3x3_s2_relu(x, p["w1"], p["b1"], col_phase_split=True)
    # small C1-lane spatial view only to feed conv2's tap-packing glue
    G1 = W1 // 2
    fe = f1[:, :H1 * G1, :C1].reshape(N, H1, G1, C1)
    fo = f1[:, H1 * G1:, :C1].reshape(N, H1, G1, C1)
    f1_nhwc = jnp.stack([fe, fo], axis=3).reshape(N, H1, W1, C1)
    # encoder stage 2 (stride 4)
    f2, (H2, W2) = conv3x3_s2_relu(f1_nhwc, p["w2"], p["b2"], col_phase_split=False)

    # fused decoder: heads + deep->shallow merge + full 2x upsample, one kernel
    y = skip_decode(f1, (H1, W1), f2, (H2, W2),
                    p["wh1"], p["bh1"], p["wh2"], p["bh2"])
    # y: (N, H, 4, W//4, out_dim) with w = 4*k + q; the mandatory NHWC->NCHW
    # permute absorbs the column de-interleave for free.
    return jnp.transpose(y, (0, 4, 1, 3, 2)).reshape(N, out_dim, H, W)


def ref_forward(x_nchw, p):
    dn = ("NHWC", "HWIO", "NHWC")
    x = jnp.transpose(x_nchw, (0, 2, 3, 1)).astype(jnp.float32)

    def conv(z, w, b):
        y = jax.lax.conv_general_dilated(z, w, (2, 2), [(1, 1), (1, 1)],
                                         dimension_numbers=dn)
        return jax.nn.relu(y + b)

    f1 = conv(x, p["w1"], p["b1"])
    f2 = conv(f1, p["w2"], p["b2"])
    s1 = jnp.einsum("nhwc,co->nhwo", f1, p["wh1"]) + p["bh1"]
    s2 = jnp.einsum("nhwc,co->nhwo", f2, p["wh2"]) + p["bh2"]
    C = p["wh1"].shape[1]
    k1 = jnp.array([0.5, 1.0, 0.5], jnp.float32)
    kd = jnp.tile(jnp.outer(k1, k1)[:, :, None, None], (1, 1, 1, C))  # (3,3,1,C)

    def up_crop(z, h, w, off):
        y = jax.lax.conv_general_dilated(
            z, kd, window_strides=(1, 1), padding=[(2, 2), (2, 2)],
            lhs_dilation=(2, 2), dimension_numbers=dn, feature_group_count=C)
        return y[:, off:off + h, off:off + w, :]

    merged = s1 + up_crop(s2, s1.shape[1], s1.shape[2], 1)
    out = up_crop(merged, x.shape[1], x.shape[2], 1)
    return jnp.transpose(out, (0, 3, 1, 2))


if __name__ == "__main__":
    N, Cin, H, W = 2, 3, 16, 16
    C1, C2, out_dim = 8, 16, 4

    key = jax.random.PRNGKey(0)
    ks = jax.random.split(key, 9)
    params = {
        "w1": 0.1 * jax.random.normal(ks[0], (3, 3, Cin, C1), jnp.float32),
        "b1": 0.1 * jax.random.normal(ks[1], (C1,), jnp.float32),
        "w2": 0.1 * jax.random.normal(ks[2], (3, 3, C1, C2), jnp.float32),
        "b2": 0.1 * jax.random.normal(ks[3], (C2,), jnp.float32),
        "wh1": 0.1 * jax.random.normal(ks[4], (C1, out_dim), jnp.float32),
        "bh1": 0.1 * jax.random.normal(ks[5], (out_dim,), jnp.float32),
        "wh2": 0.1 * jax.random.normal(ks[6], (C2, out_dim), jnp.float32),
        "bh2": 0.1 * jax.random.normal(ks[7], (out_dim,), jnp.float32),
    }
    x = jax.random.normal(ks[8], (N, Cin, H, W), jnp.float32)   # NCHW like PyTorch

    out = jax.block_until_ready(jax.jit(skip_arch_forward)(x, params))
    assert out.shape == (N, out_dim, H, W), out.shape

    ref = jax.block_until_ready(ref_forward(x, params))
    err = float(jnp.max(jnp.abs(out - ref)))
    assert jnp.allclose(out, ref, rtol=2e-2, atol=2e-2), err

    print("KERNEL_OK")
</pallas_src>

<mosaic_0001>
module attributes {stable_mosaic.version = 11 : i64} {
  func.func @_conv_matmul_kernel(%arg0: i32, %arg1: i32, %arg2: memref<1x64x128xbf16, #tpu.memory_space<vmem>>, %arg3: memref<128x128xbf16, #tpu.memory_space<vmem>>, %arg4: memref<1x128xf32, #tpu.memory_space<vmem>>, %arg5: memref<1x64x128xbf16, #tpu.memory_space<vmem>>) attributes {dimension_semantics = [#tpu.dimension_semantics<parallel>, #tpu.dimension_semantics<parallel>], iteration_bounds = array<i64: 2, 1>, scalar_prefetch = 0 : i64, scratch_operands = 0 : i64, tpu.core_type = #tpu.core_type<tc>, window_params = [{transform_indices = @transform_0, window_bounds = array<i64: 1, 64, 128>}, {pipeline_mode = #tpu.pipeline_mode<synchronous>, transform_indices = @transform_1, window_bounds = array<i64: 128, 128>}, {pipeline_mode = #tpu.pipeline_mode<synchronous>, transform_indices = @transform_2, window_bounds = array<i64: 1, 128>}, {transform_indices = @transform_3, window_bounds = array<i64: 1, 64, 128>}]} {
    %c0 = arith.constant 0 : index
    %c0_0 = arith.constant 0 : index
    %c0_1 = arith.constant 0 : index
    %0 = vector.load %arg2[%c0, %c0_0, %c0_1] : memref<1x64x128xbf16, #tpu.memory_space<vmem>>, vector<1x64x128xbf16>
    %1 = vector.shape_cast %0 : vector<1x64x128xbf16> to vector<64x128xbf16>
    %c0_2 = arith.constant 0 : index
    %c0_3 = arith.constant 0 : index
    %2 = vector.load %arg3[%c0_2, %c0_3] : memref<128x128xbf16, #tpu.memory_space<vmem>>, vector<128x128xbf16>
    %cst = arith.constant dense<0.000000e+00> : vector<64x128xf32>
    %3 = tpu.matmul %1, %2, %cst {dimension_numbers = #tpu.dot_dimension_numbers<[1], [0], [0], [1], [0, 0, 1, 1], [], []>} : vector<64x128xbf16>, vector<128x128xbf16>, vector<64x128xf32> -> vector<64x128xf32>
    %c0_4 = arith.constant 0 : index
    %c0_5 = arith.constant 0 : index
    %4 = vector.load %arg4[%c0_4, %c0_5] : memref<1x128xf32, #tpu.memory_space<vmem>>, vector<1x128xf32>
    %5 = vector.broadcast %4 : vector<1x128xf32> to vector<64x128xf32>
    %6 = arith.addf %3, %5 : vector<64x128xf32>
    %cst_6 = arith.constant 0.000000e+00 : f32
    %7 = vector.broadcast %cst_6 : f32 to vector<64x128xf32>
    %8 = arith.maximumf %6, %7 : vector<64x128xf32>
    %9 = arith.truncf %8 : vector<64x128xf32> to vector<64x128xbf16>
    %c0_7 = arith.constant 0 : index
    %c0_8 = arith.constant 0 : index
    %c0_9 = arith.constant 0 : index
    %10 = vector.load %arg5[%c0_7, %c0_8, %c0_9] : memref<1x64x128xbf16, #tpu.memory_space<vmem>>, vector<1x64x128xbf16>
    %11 = vector.shape_cast %10 : vector<1x64x128xbf16> to vector<64x128xbf16>
    %12 = vector.shape_cast %9 : vector<64x128xbf16> to vector<1x64x128xbf16>
    tpu.vector_store %arg5[%c0_7, %c0_8, %c0_9], %12 {strides = array<i32>} : memref<1x64x128xbf16, #tpu.memory_space<vmem>>, vector<1x64x128xbf16>,
    return
  }
  func.func @transform_0(%arg0: i32, %arg1: i32) -> (i32, i32, i32) {
    %c0_i32 = arith.constant 0 : i32
    %c0_i32_0 = arith.constant 0 : i32
    return %arg0, %arg1, %c0_i32 : i32, i32, i32
  }
  func.func @transform_1(%arg0: i32, %arg1: i32) -> (i32, i32) {
    %c0_i32 = arith.constant 0 : i32
    %c0_i32_0 = arith.constant 0 : i32
    %c0_i32_1 = arith.constant 0 : i32
    return %c0_i32, %c0_i32_0 : i32, i32
  }
  func.func @transform_2(%arg0: i32, %arg1: i32) -> (i32, i32) {
    %c0_i32 = arith.constant 0 : i32
    %c0_i32_0 = arith.constant 0 : i32
    %c0_i32_1 = arith.constant 0 : i32
    return %c0_i32, %c0_i32_0 : i32, i32
  }
  func.func @transform_3(%arg0: i32, %arg1: i32) -> (i32, i32, i32) {
    %c0_i32 = arith.constant 0 : i32
    %c0_i32_0 = arith.constant 0 : i32
    return %arg0, %arg1, %c0_i32 : i32, i32, i32
  }
}

module attributes {stable_mosaic.version = 11 : i64} {
  func.func @_conv_matmul_kernel(%arg0: i32, %arg1: i32, %arg2: memref<1x16x128xbf16, #tpu.memory_space<vmem>>, %arg3: memref<128x128xbf16, #tpu.memory_space<vmem>>, %arg4: memref<1x128xf32, #tpu.memory_space<vmem>>, %arg5: memref<1x16x128xbf16, #tpu.memory_space<vmem>>) attributes {dimension_semantics = [#tpu.dimension_semantics<parallel>, #tpu.dimension_semantics<parallel>], iteration_bounds = array<i64: 2, 1>, scalar_prefetch = 0 : i64, scratch_operands = 0 : i64, tpu.core_type = #tpu.core_type<tc>, window_params = [{transform_indices = @transform_0, window_bounds = array<i64: 1, 16, 128>}, {pipeline_mode = #tpu.pipeline_mode<synchronous>, transform_indices = @transform_1, window_bounds = array<i64: 128, 128>}, {pipeline_mode = #tpu.pipeline_mode<synchronous>, transform_indices = @transform_2, window_bounds = array<i64: 1, 128>}, {transform_indices = @transform_3, window_bounds = array<i64: 1, 16, 128>}]} {
    %c0 = arith.constant 0 : index
    %c0_0 = arith.constant 0 : index
    %c0_1 = arith.constant 0 : index
    %0 = vector.load %arg2[%c0, %c0_0, %c0_1] : memref<1x16x128xbf16, #tpu.memory_space<vmem>>, vector<1x16x128xbf16>
    %1 = vector.shape_cast %0 : vector<1x16x128xbf16> to vector<16x128xbf16>
    %c0_2 = arith.constant 0 : index
    %c0_3 = arith.constant 0 : index
    %2 = vector.load %arg3[%c0_2, %c0_3] : memref<128x128xbf16, #tpu.memory_space<vmem>>, vector<128x128xbf16>
    %cst = arith.constant dense<0.000000e+00> : vector<16x128xf32>
    %3 = tpu.matmul %1, %2, %cst {dimension_numbers = #tpu.dot_dimension_numbers<[1], [0], [0], [1], [0, 0, 1, 1], [], []>} : vector<16x128xbf16>, vector<128x128xbf16>, vector<16x128xf32> -> vector<16x128xf32>
    %c0_4 = arith.constant 0 : index
    %c0_5 = arith.constant 0 : index
    %4 = vector.load %arg4[%c0_4, %c0_5] : memref<1x128xf32, #tpu.memory_space<vmem>>, vector<1x128xf32>
    %5 = vector.broadcast %4 : vector<1x128xf32> to vector<16x128xf32>
    %6 = arith.addf %3, %5 : vector<16x128xf32>
    %cst_6 = arith.constant 0.000000e+00 : f32
    %7 = vector.broadcast %cst_6 : f32 to vector<16x128xf32>
    %8 = arith.maximumf %6, %7 : vector<16x128xf32>
    %9 = arith.truncf %8 : vector<16x128xf32> to vector<16x128xbf16>
    %c0_7 = arith.constant 0 : index
    %c0_8 = arith.constant 0 : index
    %c0_9 = arith.constant 0 : index
    %10 = vector.load %arg5[%c0_7, %c0_8, %c0_9] : memref<1x16x128xbf16, #tpu.memory_space<vmem>>, vector<1x16x128xbf16>
    %11 = vector.shape_cast %10 : vector<1x16x128xbf16> to vector<16x128xbf16>
    %12 = vector.shape_cast %9 : vector<16x128xbf16> to vector<1x16x128xbf16>
    tpu.vector_store %arg5[%c0_7, %c0_8, %c0_9], %12 {strides = array<i32>} : memref<1x16x128xbf16, #tpu.memory_space<vmem>>, vector<1x16x128xbf16>,
    return
  }
  func.func @transform_0(%arg0: i32, %arg1: i32) -> (i32, i32, i32) {
    %c0_i32 = arith.constant 0 : i32
    %c0_i32_0 = arith.constant 0 : i32
    return %arg0, %arg1, %c0_i32 : i32, i32, i32
  }
  func.func @transform_1(%arg0: i32, %arg1: i32) -> (i32, i32) {
    %c0_i32 = arith.constant 0 : i32
    %c0_i32_0 = arith.constant 0 : i32
    %c0_i32_1 = arith.constant 0 : i32
    return %c0_i32, %c0_i32_0 : i32, i32
  }
  func.func @transform_2(%arg0: i32, %arg1: i32) -> (i32, i32) {
    %c0_i32 = arith.constant 0 : i32
    %c0_i32_0 = arith.constant 0 : i32
    %c0_i32_1 = arith.constant 0 : i32
    return %c0_i32, %c0_i32_0 : i32, i32
  }
  func.func @transform_3(%arg0: i32, %arg1: i32) -> (i32, i32, i32) {
    %c0_i32 = arith.constant 0 : i32
    %c0_i32_0 = arith.constant 0 : i32
    return %arg0, %arg1, %c0_i32 : i32, i32, i32
  }
}

module attributes {stable_mosaic.version = 11 : i64} {
  func.func @_decode_kernel(%arg0: i32, %arg1: i32, %arg2: memref<1x8x128xbf16, #tpu.memory_space<vmem>>, %arg3: memref<1x1x4x128xbf16, #tpu.memory_space<vmem>>, %arg4: memref<1x16x128xbf16, #tpu.memory_space<vmem>>, %arg5: memref<1x1x4x128xbf16, #tpu.memory_space<vmem>>, %arg6: memref<1x16x128xbf16, #tpu.memory_space<vmem>>, %arg7: memref<1x1x4x128xbf16, #tpu.memory_space<vmem>>, %arg8: memref<128x128xbf16, #tpu.memory_space<vmem>>, %arg9: memref<1x128xf32, #tpu.memory_space<vmem>>, %arg10: memref<128x128xbf16, #tpu.memory_space<vmem>>, %arg11: memref<1x128xf32, #tpu.memory_space<vmem>>, %arg12: memref<1x8x4x4x4xf32, #tpu.memory_space<vmem>>, %arg13: memref<12x128xf32, #tpu.memory_space<vmem>>, %arg14: memref<20x128xf32, #tpu.memory_space<vmem>>, %arg15: memref<20x128xf32, #tpu.memory_space<vmem>>) attributes {dimension_semantics = [#tpu.dimension_semantics<parallel>, #tpu.dimension_semantics<parallel>], iteration_bounds = array<i64: 2, 2>, scalar_prefetch = 0 : i64, scratch_operands = 3 : i64, tpu.core_type = #tpu.core_type<tc>, window_params = [{transform_indices = @transform_0, window_bounds = array<i64: 1, 8, 128>}, {transform_indices = @transform_1, window_bounds = array<i64: 1, 1, 4, 128>}, {transform_indices = @transform_2, window_bounds = array<i64: 1, 16, 128>}, {transform_indices = @transform_3, window_bounds = array<i64: 1, 1, 4, 128>}, {transform_indices = @transform_4, window_bounds = array<i64: 1, 16, 128>}, {transform_indices = @transform_5, window_bounds = array<i64: 1, 1, 4, 128>}, {pipeline_mode = #tpu.pipeline_mode<synchronous>, transform_indices = @transform_6, window_bounds = array<i64: 128, 128>}, {pipeline_mode = #tpu.pipeline_mode<synchronous>, transform_indices = @transform_7, window_bounds = array<i64: 1, 128>}, {pipeline_mode = #tpu.pipeline_mode<synchronous>, transform_indices = @transform_8, window_bounds = array<i64: 128, 128>}, {pipeline_mode = #tpu.pipeline_mode<synchronous>, transform_indices = @transform_9, window_bounds = array<i64: 1, 128>}, {transform_indices = @transform_10, window_bounds = array<i64: 1, 8, 4, 4, 4>}]} {
    %c1_i32 = arith.constant 1 : i32
    %0 = arith.cmpi eq, %arg1, %c1_i32 : i32
    %cst = arith.constant 0.000000e+00 : f32
    %cst_0 = arith.constant 1.000000e+00 : f32
    %1 = arith.select %0, %cst, %cst_0 : f32
    %c0 = arith.constant 0 : index
    %c0_1 = arith.constant 0 : index
    %2 = vector.load %arg8[%c0, %c0_1] : memref<128x128xbf16, #tpu.memory_space<vmem>>, vector<128x128xbf16>
    %c0_2 = arith.constant 0 : index
    %c0_3 = arith.constant 0 : index
    %3 = vector.load %arg9[%c0_2, %c0_3] : memref<1x128xf32, #tpu.memory_space<vmem>>, vector<1x128xf32>
    %c0_4 = arith.constant 0 : index
    %c0_5 = arith.constant 0 : index
    %4 = vector.load %arg10[%c0_4, %c0_5] : memref<128x128xbf16, #tpu.memory_space<vmem>>, vector<128x128xbf16>
    %c0_6 = arith.constant 0 : index
    %c0_7 = arith.constant 0 : index
    %5 = vector.load %arg11[%c0_6, %c0_7] : memref<1x128xf32, #tpu.memory_space<vmem>>, vector<1x128xf32>
    %c0_8 = arith.constant 0 : index
    %c0_9 = arith.constant 0 : index
    %c0_10 = arith.constant 0 : index
    %6 = vector.load %arg2[%c0_8, %c0_9, %c0_10] : memref<1x8x128xbf16, #tpu.memory_space<vmem>>, vector<1x8x128xbf16>
    %7 = vector.shape_cast %6 : vector<1x8x128xbf16> to vector<8x128xbf16>
    %cst_11 = arith.constant dense<0.000000e+00> : vector<8x128xf32>
    %8 = tpu.matmul %7, %2, %cst_11 {dimension_numbers = #tpu.dot_dimension_numbers<[1], [0], [0], [1], [0, 0, 1, 1], [], []>} : vector<8x128xbf16>, vector<128x128xbf16>, vector<8x128xf32> -> vector<8x128xf32>
    %9 = vector.broadcast %3 : vector<1x128xf32> to vector<8x128xf32>
    %10 = arith.addf %8, %9 : vector<8x128xf32>
    %c0_12 = arith.constant 0 : index
    %c0_13 = arith.constant 0 : index
    %11 = vector.load %arg13[%c0_12, %c0_13] : memref<12x128xf32, #tpu.memory_space<vmem>>, vector<8x128xf32>
    tpu.vector_store %arg13[%c0_12, %c0_13], %10 {strides = array<i32>} : memref<12x128xf32, #tpu.memory_space<vmem>>, vector<8x128xf32>,
    %c0_14 = arith.constant 0 : index
    %c0_15 = arith.constant 0 : index
    %c0_16 = arith.constant 0 : index
    %c0_17 = arith.constant 0 : index
    %12 = vector.load %arg3[%c0_14, %c0_15, %c0_16, %c0_17] : memref<1x1x4x128xbf16, #tpu.memory_space<vmem>>, vector<1x1x4x128xbf16>
    %13 = vector.shape_cast %12 : vector<1x1x4x128xbf16> to vector<4x128xbf16>
    %cst_18 = arith.constant dense<0.000000e+00> : vector<4x128xf32>
    %14 = tpu.matmul %13, %2, %cst_18 {dimension_numbers = #tpu.dot_dimension_numbers<[1], [0], [0], [1], [0, 0, 1, 1], [], []>} : vector<4x128xbf16>, vector<128x128xbf16>, vector<4x128xf32> -> vector<4x128xf32>
    %15 = vector.broadcast %3 : vector<1x128xf32> to vector<4x128xf32>
    %16 = arith.addf %14, %15 : vector<4x128xf32>
    %17 = vector.broadcast %1 : f32 to vector<4x128xf32>
    %18 = arith.mulf %17, %16 : vector<4x128xf32>
    %c8 = arith.constant 8 : index
    %c0_19 = arith.constant 0 : index
    %19 = vector.load %arg13[%c8, %c0_19] : memref<12x128xf32, #tpu.memory_space<vmem>>, vector<4x128xf32>
    tpu.vector_store %arg13[%c8, %c0_19], %18 {strides = array<i32>} : memref<12x128xf32, #tpu.memory_space<vmem>>, vector<4x128xf32>,
    %c0_20 = arith.constant 0 : index
    %c0_21 = arith.constant 0 : index
    %c0_22 = arith.constant 0 : index
    %20 = vector.load %arg4[%c0_20, %c0_21, %c0_22] : memref<1x16x128xbf16, #tpu.memory_space<vmem>>, vector<1x16x128xbf16>
    %21 = vector.shape_cast %20 : vector<1x16x128xbf16> to vector<16x128xbf16>
    %cst_23 = arith.constant dense<0.000000e+00> : vector<16x128xf32>
    %22 = tpu.matmul %21, %4, %cst_23 {dimension_numbers = #tpu.dot_dimension_numbers<[1], [0], [0], [1], [0, 0, 1, 1], [], []>} : vector<16x128xbf16>, vector<128x128xbf16>, vector<16x128xf32> -> vector<16x128xf32>
    %23 = vector.broadcast %5 : vector<1x128xf32> to vector<16x128xf32>
    %24 = arith.addf %22, %23 : vector<16x128xf32>
    %c0_24 = arith.constant 0 : index
    %c0_25 = arith.constant 0 : index
    %25 = vector.load %arg14[%c0_24, %c0_25] : memref<20x128xf32, #tpu.memory_space<vmem>>, vector<16x128xf32>
    tpu.vector_store %arg14[%c0_24, %c0_25], %24 {strides = array<i32>} : memref<20x128xf32, #tpu.memory_space<vmem>>, vector<16x128xf32>,
    %c0_26 = arith.constant 0 : index
    %c0_27 = arith.constant 0 : index
    %c0_28 = arith.constant 0 : index
    %c0_29 = arith.constant 0 : index
    %26 = vector.load %arg5[%c0_26, %c0_27, %c0_28, %c0_29] : memref<1x1x4x128xbf16, #tpu.memory_space<vmem>>, vector<1x1x4x128xbf16>
    %27 = vector.shape_cast %26 : vector<1x1x4x128xbf16> to vector<4x128xbf16>
    %cst_30 = arith.constant dense<0.000000e+00> : vector<4x128xf32>
    %28 = tpu.matmul %27, %4, %cst_30 {dimension_numbers = #tpu.dot_dimension_numbers<[1], [0], [0], [1], [0, 0, 1, 1], [], []>} : vector<4x128xbf16>, vector<128x128xbf16>, vector<4x128xf32> -> vector<4x128xf32>
    %29 = vector.broadcast %5 : vector<1x128xf32> to vector<4x128xf32>
    %30 = arith.addf %28, %29 : vector<4x128xf32>
    %31 = vector.broadcast %1 : f32 to vector<4x128xf32>
    %32 = arith.mulf %31, %30 : vector<4x128xf32>
    %c16 = arith.constant 16 : index
    %c0_31 = arith.constant 0 : index
    %33 = vector.load %arg14[%c16, %c0_31] : memref<20x128xf32, #tpu.memory_space<vmem>>, vector<4x128xf32>
    tpu.vector_store %arg14[%c16, %c0_31], %32 {strides = array<i32>} : memref<20x128xf32, #tpu.memory_space<vmem>>, vector<4x128xf32>,
    %c0_32 = arith.constant 0 : index
    %c0_33 = arith.constant 0 : index
    %c0_34 = arith.constant 0 : index
    %34 = vector.load %arg6[%c0_32, %c0_33, %c0_34] : memref<1x16x128xbf16, #tpu.memory_space<vmem>>, vector<1x16x128xbf16>
    %35 = vector.shape_cast %34 : vector<1x16x128xbf16> to vector<16x128xbf16>
    %cst_35 = arith.constant dense<0.000000e+00> : vector<16x128xf32>
    %36 = tpu.matmul %35, %4, %cst_35 {dimension_numbers = #tpu.dot_dimension_numbers<[1], [0], [0], [1], [0, 0, 1, 1], [], []>} : vector<16x128xbf16>, vector<128x128xbf16>, vector<16x128xf32> -> vector<16x128xf32>
    %37 = vector.broadcast %5 : vector<1x128xf32> to vector<16x128xf32>
    %38 = arith.addf %36, %37 : vector<16x128xf32>
    %c0_36 = arith.constant 0 : index
    %c0_37 = arith.constant 0 : index
    %39 = vector.load %arg15[%c0_36, %c0_37] : memref<20x128xf32, #tpu.memory_space<vmem>>, vector<16x128xf32>
    tpu.vector_store %arg15[%c0_36, %c0_37], %38 {strides = array<i32>} : memref<20x128xf32, #tpu.memory_space<vmem>>, vector<16x128xf32>,
    %c0_38 = arith.constant 0 : index
    %c0_39 = arith.constant 0 : index
    %c0_40 = arith.constant 0 : index
    %c0_41 = arith.constant 0 : index
    %40 = vector.load %arg7[%c0_38, %c0_39, %c0_40, %c0_41] : memref<1x1x4x128xbf16, #tpu.memory_space<vmem>>, vector<1x1x4x128xbf16>
    %41 = vector.shape_cast %40 : vector<1x1x4x128xbf16> to vector<4x128xbf16>
    %cst_42 = arith.constant dense<0.000000e+00> : vector<4x128xf32>
    %42 = tpu.matmul %41, %4, %cst_42 {dimension_numbers = #tpu.dot_dimension_numbers<[1], [0], [0], [1], [0, 0, 1, 1], [], []>} : vector<4x128xbf16>, vector<128x128xbf16>, vector<4x128xf32> -> vector<4x128xf32>
    %43 = vector.broadcast %5 : vector<1x128xf32> to vector<4x128xf32>
    %44 = arith.addf %42, %43 : vector<4x128xf32>
    %45 = vector.broadcast %1 : f32 to vector<4x128xf32>
    %46 = arith.mulf %45, %44 : vector<4x128xf32>
    %c16_43 = arith.constant 16 : index
    %c0_44 = arith.constant 0 : index
    %47 = vector.load %arg15[%c16_43, %c0_44] : memref<20x128xf32, #tpu.memory_space<vmem>>, vector<4x128xf32>
    tpu.vector_store %arg15[%c16_43, %c0_44], %46 {strides = array<i32>} : memref<20x128xf32, #tpu.memory_space<vmem>>, vector<4x128xf32>,
    %48 = tpu.iota {dimensions = array<i32: 0>} : vector<4x1xi32>
    %c3_i32 = arith.constant 3 : i32
    %49 = vector.broadcast %c3_i32 : i32 to vector<4x1xi32>
    %50 = arith.cmpi slt, %48, %49 : vector<4x1xi32>
    %51 = arith.extui %50 : vector<4x1xi1> to vector<4x1xi32>
    %52 = arith.sitofp %51 : vector<4x1xi32> to vector<4x1xf32>
    %c0_45 = arith.constant 0 : index
    %c0_46 = arith.constant 0 : index
    %53 = vector.load %arg13[%c0_45, %c0_46] : memref<12x128xf32, #tpu.memory_space<vmem>>, vector<4x128xf32>
    %c0_47 = arith.constant 0 : index
    %c0_48 = arith.constant 0 : index
    %54 = vector.load %arg14[%c0_47, %c0_48] : memref<20x128xf32, #tpu.memory_space<vmem>>, vector<4x128xf32>
    %55 = arith.addf %54, %53 : vector<4x128xf32>
    %c0_49 = arith.constant 0 : index
    %c0_50 = arith.constant 0 : index
    %56 = vector.load %arg15[%c0_49, %c0_50] : memref<20x128xf32, #tpu.memory_space<vmem>>, vector<4x128xf32>
    %c3_i32_51 = arith.constant 3 : i32
    %57 = tpu.dynamic_rotate %53 by %c3_i32_51 dim 0 : vector<4x128xf32>, i32 -> vector<4x128xf32>
    %58 = vector.broadcast %52 : vector<4x1xf32> to vector<4x128xf32>
    %59 = arith.mulf %58, %57 : vector<4x128xf32>
    %60 = arith.addf %53, %59 : vector<4x128xf32>
    %cst_52 = arith.constant 5.000000e-01 : f32
    %61 = vector.broadcast %cst_52 : f32 to vector<4x128xf32>
    %62 = arith.mulf %61, %60 : vector<4x128xf32>
    %63 = arith.addf %56, %62 : vector<4x128xf32>
    %c3_i32_53 = arith.constant 3 : i32
    %64 = tpu.dynamic_rotate %55 by %c3_i32_53 dim 0 : vector<4x128xf32>, i32 -> vector<4x128xf32>
    %65 = vector.broadcast %52 : vector<4x1xf32> to vector<4x128xf32>
    %66 = arith.mulf %65, %64 : vector<4x128xf32>
    %c0_54 = arith.constant 0 : index
    %c0_55 = arith.constant 0 : index
    %67 = vector.load %arg13[%c0_54, %c0_55] : memref<12x128xf32, #tpu.memory_space<vmem>>, vector<4x128xf32>
    %c4 = arith.constant 4 : index
    %c0_56 = arith.constant 0 : index
    %68 = vector.load %arg13[%c4, %c0_56] : memref<12x128xf32, #tpu.memory_space<vmem>>, vector<4x128xf32>
    %69 = arith.addf %67, %68 : vector<4x128xf32>
    %cst_57 = arith.constant 5.000000e-01 : f32
    %70 = vector.broadcast %cst_57 : f32 to vector<4x128xf32>
    %71 = arith.mulf %70, %69 : vector<4x128xf32>
    %c4_58 = arith.constant 4 : index
    %c0_59 = arith.constant 0 : index
    %72 = vector.load %arg14[%c4_58, %c0_59] : memref<20x128xf32, #tpu.memory_space<vmem>>, vector<4x128xf32>
    %73 = arith.addf %72, %71 : vector<4x128xf32>
    %c4_60 = arith.constant 4 : index
    %c0_61 = arith.constant 0 : index
    %74 = vector.load %arg15[%c4_60, %c0_61] : memref<20x128xf32, #tpu.memory_space<vmem>>, vector<4x128xf32>
    %c3_i32_62 = arith.constant 3 : i32
    %75 = tpu.dynamic_rotate %71 by %c3_i32_62 dim 0 : vector<4x128xf32>, i32 -> vector<4x128xf32>
    %76 = vector.broadcast %52 : vector<4x1xf32> to vector<4x128xf32>
    %77 = arith.mulf %76, %75 : vector<4x128xf32>
    %78 = arith.addf %71, %77 : vector<4x128xf32>
    %cst_63 = arith.constant 5.000000e-01 : f32
    %79 = vector.broadcast %cst_63 : f32 to vector<4x128xf32>
    %80 = arith.mulf %79, %78 : vector<4x128xf32>
    %81 = arith.addf %74, %80 : vector<4x128xf32>
    %c3_i32_64 = arith.constant 3 : i32
    %82 = tpu.dynamic_rotate %73 by %c3_i32_64 dim 0 : vector<4x128xf32>, i32 -> vector<4x128xf32>
    %83 = vector.broadcast %52 : vector<4x1xf32> to vector<4x128xf32>
    %84 = arith.mulf %83, %82 : vector<4x128xf32>
    %85 = vector.extract_strided_slice %55 {offsets = [0, 0], sizes = [4, 4], strides = [1, 1]} : vector<4x128xf32> to vector<4x4xf32>
    %c0_65 = arith.constant 0 : index
    %c0_66 = arith.constant 0 : index
    %c0_67 = arith.constant 0 : index
    %c0_68 = arith.constant 0 : index
    %c0_69 = arith.constant 0 : index
    %86 = vector.load %arg12[%c0_65, %c0_66, %c0_67, %c0_68, %c0_69] : memref<1x8x4x4x4xf32, #tpu.memory_space<vmem>>, vector<1x1x1x4x4xf32>
    %87 = vector.shape_cast %86 : vector<1x1x1x4x4xf32> to vector<4x4xf32>
    %88 = vector.shape_cast %85 : vector<4x4xf32> to vector<1x1x1x4x4xf32>
    tpu.vector_store %arg12[%c0_65, %c0_66, %c0_67, %c0_68, %c0_69], %88 {strides = array<i32>} : memref<1x8x4x4x4xf32, #tpu.memory_space<vmem>>, vector<1x1x1x4x4xf32>,
    %89 = arith.addf %55, %63 : vector<4x128xf32>
    %cst_70 = arith.constant 5.000000e-01 : f32
    %90 = vector.broadcast %cst_70 : f32 to vector<4x128xf32>
    %91 = arith.mulf %90, %89 : vector<4x128xf32>
    %92 = vector.extract_strided_slice %91 {offsets = [0, 0], sizes = [4, 4], strides = [1, 1]} : vector<4x128xf32> to vector<4x4xf32>
    %c0_71 = arith.constant 0 : index
    %c0_72 = arith.constant 0 : index
    %c1 = arith.constant 1 : index
    %c0_73 = arith.constant 0 : index
    %c0_74 = arith.constant 0 : index
    %93 = vector.load %arg12[%c0_71, %c0_72, %c1, %c0_73, %c0_74] : memref<1x8x4x4x4xf32, #tpu.memory_space<vmem>>, vector<1x1x1x4x4xf32>
    %94 = vector.shape_cast %93 : vector<1x1x1x4x4xf32> to vector<4x4xf32>
    %95 = vector.shape_cast %92 : vector<4x4xf32> to vector<1x1x1x4x4xf32>
    tpu.vector_store %arg12[%c0_71, %c0_72, %c1, %c0_73, %c0_74], %95 {strides = array<i32>} : memref<1x8x4x4x4xf32, #tpu.memory_space<vmem>>, vector<1x1x1x4x4xf32>,
    %96 = vector.extract_strided_slice %63 {offsets = [0, 0], sizes = [4, 4], strides = [1, 1]} : vector<4x128xf32> to vector<4x4xf32>
    %c0_75 = arith.constant 0 : index
    %c0_76 = arith.constant 0 : index
    %c2 = arith.constant 2 : index
    %c0_77 = arith.constant 0 : index
    %c0_78 = arith.constant 0 : index
    %97 = vector.load %arg12[%c0_75, %c0_76, %c2, %c0_77, %c0_78] : memref<1x8x4x4x4xf32, #tpu.memory_space<vmem>>, vector<1x1x1x4x4xf32>
    %98 = vector.shape_cast %97 : vector<1x1x1x4x4xf32> to vector<4x4xf32>
    %99 = vector.shape_cast %96 : vector<4x4xf32> to vector<1x1x1x4x4xf32>
    tpu.vector_store %arg12[%c0_75, %c0_76, %c2, %c0_77, %c0_78], %99 {strides = array<i32>} : memref<1x8x4x4x4xf32, #tpu.memory_space<vmem>>, vector<1x1x1x4x4xf32>,
    %100 = arith.addf %63, %66 : vector<4x128xf32>
    %cst_79 = arith.constant 5.000000e-01 : f32
    %101 = vector.broadcast %cst_79 : f32 to vector<4x128xf32>
    %102 = arith.mulf %101, %100 : vector<4x128xf32>
    %103 = vector.extract_strided_slice %102 {offsets = [0, 0], sizes = [4, 4], strides = [1, 1]} : vector<4x128xf32> to vector<4x4xf32>
    %c0_80 = arith.constant 0 : index
    %c0_81 = arith.constant 0 : index
    %c3 = arith.constant 3 : index
    %c0_82 = arith.constant 0 : index
    %c0_83 = arith.constant 0 : index
    %104 = vector.load %arg12[%c0_80, %c0_81, %c3, %c0_82, %c0_83] : memref<1x8x4x4x4xf32, #tpu.memory_space<vmem>>, vector<1x1x1x4x4xf32>
    %105 = vector.shape_cast %104 : vector<1x1x1x4x4xf32> to vector<4x4xf32>
    %106 = vector.shape_cast %103 : vector<4x4xf32> to vector<1x1x1x4x4xf32>
    tpu.vector_store %arg12[%c0_80, %c0_81, %c3, %c0_82, %c0_83], %106 {strides = array<i32>} : memref<1x8x4x4x4xf32, #tpu.memory_space<vmem>>, vector<1x1x1x4x4xf32>,
    %107 = arith.addf %55, %73 : vector<4x128xf32>
    %cst_84 = arith.constant 5.000000e-01 : f32
    %108 = vector.broadcast %cst_84 : f32 to vector<4x128xf32>
    %109 = arith.mulf %108, %107 : vector<4x128xf32>
    %110 = arith.addf %63, %81 : vector<4x128xf32>
    %cst_85 = arith.constant 5.000000e-01 : f32
    %111 = vector.broadcast %cst_85 : f32 to vector<4x128xf32>
    %112 = arith.mulf %111, %110 : vector<4x128xf32>
    %113 = arith.addf %66, %84 : vector<4x128xf32>
    %cst_86 = arith.constant 5.000000e-01 : f32
    %114 = vector.broadcast %cst_86 : f32 to vector<4x128xf32>
    %115 = arith.mulf %114, %113 : vector<4x128xf32>
    %116 = vector.extract_strided_slice %109 {offsets = [0, 0], sizes = [4, 4], strides = [1, 1]} : vector<4x128xf32> to vector<4x4xf32>
    %c0_87 = arith.constant 0 : index
    %c1_88 = arith.constant 1 : index
    %c0_89 = arith.constant 0 : index
    %c0_90 = arith.constant 0 : index
    %c0_91 = arith.constant 0 : index
    %117 = vector.load %arg12[%c0_87, %c1_88, %c0_89, %c0_90, %c0_91] : memref<1x8x4x4x4xf32, #tpu.memory_space<vmem>>, vector<1x1x1x4x4xf32>
    %118 = vector.shape_cast %117 : vector<1x1x1x4x4xf32> to vector<4x4xf32>
    %119 = vector.shape_cast %116 : vector<4x4xf32> to vector<1x1x1x4x4xf32>
    tpu.vector_store %arg12[%c0_87, %c1_88, %c0_89, %c0_90, %c0_91], %119 {strides = array<i32>} : memref<1x8x4x4x4xf32, #tpu.memory_space<vmem>>, vector<1x1x1x4x4xf32>,
    %120 = arith.addf %109, %112 : vector<4x128xf32>
    %cst_92 = arith.constant 5.000000e-01 : f32
    %121 = vector.broadcast %cst_92 : f32 to vector<4x128xf32>
    %122 = arith.mulf %121, %120 : vector<4x128xf32>
    %123 = vector.extract_strided_slice %122 {offsets = [0, 0], sizes = [4, 4], strides = [1, 1]} : vector<4x128xf32> to vector<4x4xf32>
    %c0_93 = arith.constant 0 : index
    %c1_94 = arith.constant 1 : index
    %c1_95 = arith.constant 1 : index
    %c0_96 = arith.constant 0 : index
    %c0_97 = arith.constant 0 : index
    %124 = vector.load %arg12[%c0_93, %c1_94, %c1_95, %c0_96, %c0_97] : memref<1x8x4x4x4xf32, #tpu.memory_space<vmem>>, vector<1x1x1x4x4xf32>
    %125 = vector.shape_cast %124 : vector<1x1x1x4x4xf32> to vector<4x4xf32>
    %126 = vector.shape_cast %123 : vector<4x4xf32> to vector<1x1x1x4x4xf32>
    tpu.vector_store %arg12[%c0_93, %c1_94, %c1_95, %c0_96, %c0_97], %126 {strides = array<i32>} : memref<1x8x4x4x4xf32, #tpu.memory_space<vmem>>, vector<1x1x1x4x4xf32>,
    %127 = vector.extract_strided_slice %112 {offsets = [0, 0], sizes = [4, 4], strides = [1, 1]} : vector<4x128xf32> to vector<4x4xf32>
    %c0_98 = arith.constant 0 : index
    %c1_99 = arith.constant 1 : index
    %c2_100 = arith.constant 2 : index
    %c0_101 = arith.constant 0 : index
    %c0_102 = arith.constant 0 : index
    %128 = vector.load %arg12[%c0_98, %c1_99, %c2_100, %c0_101, %c0_102] : memref<1x8x4x4x4xf32, #tpu.memory_space<vmem>>, vector<1x1x1x4x4xf32>
    %129 = vector.shape_cast %128 : vector<1x1x1x4x4xf32> to vector<4x4xf32>
    %130 = vector.shape_cast %127 : vector<4x4xf32> to vector<1x1x1x4x4xf32>
    tpu.vector_store %arg12[%c0_98, %c1_99, %c2_100, %c0_101, %c0_102], %130 {strides = array<i32>} : memref<1x8x4x4x4xf32, #tpu.memory_space<vmem>>, vector<1x1x1x4x4xf32>,
    %131 = arith.addf %112, %115 : vector<4x128xf32>
    %cst_103 = arith.constant 5.000000e-01 : f32
    %132 = vector.broadcast %cst_103 : f32 to vector<4x128xf32>
    %133 = arith.mulf %132, %131 : vector<4x128xf32>
    %134 = vector.extract_strided_slice %133 {offsets = [0, 0], sizes = [4, 4], strides = [1, 1]} : vector<4x128xf32> to vector<4x4xf32>
    %c0_104 = arith.constant 0 : index
    %c1_105 = arith.constant 1 : index
    %c3_106 = arith.constant 3 : index
    %c0_107 = arith.constant 0 : index
    %c0_108 = arith.constant 0 : index
    %135 = vector.load %arg12[%c0_104, %c1_105, %c3_106, %c0_107, %c0_108] : memref<1x8x4x4x4xf32, #tpu.memory_space<vmem>>, vector<1x1x1x4x4xf32>
    %136 = vector.shape_cast %135 : vector<1x1x1x4x4xf32> to vector<4x4xf32>
    %137 = vector.shape_cast %134 : vector<4x4xf32> to vector<1x1x1x4x4xf32>
    tpu.vector_store %arg12[%c0_104, %c1_105, %c3_106, %c0_107, %c0_108], %137 {strides = array<i32>} : memref<1x8x4x4x4xf32, #tpu.memory_space<vmem>>, vector<1x1x1x4x4xf32>,
    %c4_109 = arith.constant 4 : index
    %c0_110 = arith.constant 0 : index
    %138 = vector.load %arg13[%c4_109, %c0_110] : memref<12x128xf32, #tpu.memory_space<vmem>>, vector<4x128xf32>
    %c8_111 = arith.constant 8 : index
    %c0_112 = arith.constant 0 : index
    %139 = vector.load %arg14[%c8_111, %c0_112] : memref<20x128xf32, #tpu.memory_space<vmem>>, vector<4x128xf32>
    %140 = arith.addf %139, %138 : vector<4x128xf32>
    %c8_113 = arith.constant 8 : index
    %c0_114 = arith.constant 0 : index
    %141 = vector.load %arg15[%c8_113, %c0_114] : memref<20x128xf32, #tpu.memory_space<vmem>>, vector<4x128xf32>
    %c3_i32_115 = arith.constant 3 : i32
    %142 = tpu.dynamic_rotate %138 by %c3_i32_115 dim 0 : vector<4x128xf32>, i32 -> vector<4x128xf32>
    %143 = vector.broadcast %52 : vector<4x1xf32> to vector<4x128xf32>
    %144 = arith.mulf %143, %142 : vector<4x128xf32>
    %145 = arith.addf %138, %144 : vector<4x128xf32>
    %cst_116 = arith.constant 5.000000e-01 : f32
    %146 = vector.broadcast %cst_116 : f32 to vector<4x128xf32>
    %147 = arith.mulf %146, %145 : vector<4x128xf32>
    %148 = arith.addf %141, %147 : vector<4x128xf32>
    %c3_i32_117 = arith.constant 3 : i32
    %149 = tpu.dynamic_rotate %140 by %c3_i32_117 dim 0 : vector<4x128xf32>, i32 -> vector<4x128xf32>
    %150 = vector.broadcast %52 : vector<4x1xf32> to vector<4x128xf32>
    %151 = arith.mulf %150, %149 : vector<4x128xf32>
    %152 = vector.extract_strided_slice %73 {offsets = [0, 0], sizes = [4, 4], strides = [1, 1]} : vector<4x128xf32> to vector<4x4xf32>
    %c0_118 = arith.constant 0 : index
    %c2_119 = arith.constant 2 : index
    %c0_120 = arith.constant 0 : index
    %c0_121 = arith.constant 0 : index
    %c0_122 = arith.constant 0 : index
    %153 = vector.load %arg12[%c0_118, %c2_119, %c0_120, %c0_121, %c0_122] : memref<1x8x4x4x4xf32, #tpu.memory_space<vmem>>, vector<1x1x1x4x4xf32>
    %154 = vector.shape_cast %153 : vector<1x1x1x4x4xf32> to vector<4x4xf32>
    %155 = vector.shape_cast %152 : vector<4x4xf32> to vector<1x1x1x4x4xf32>
    tpu.vector_store %arg12[%c0_118, %c2_119, %c0_120, %c0_121, %c0_122], %155 {strides = array<i32>} : memref<1x8x4x4x4xf32, #tpu.memory_space<vmem>>, vector<1x1x1x4x4xf32>,
    %156 = arith.addf %73, %81 : vector<4x128xf32>
    %cst_123 = arith.constant 5.000000e-01 : f32
    %157 = vector.broadcast %cst_123 : f32 to vector<4x128xf32>
    %158 = arith.mulf %157, %156 : vector<4x128xf32>
    %159 = vector.extract_strided_slice %158 {offsets = [0, 0], sizes = [4, 4], strides = [1, 1]} : vector<4x128xf32> to vector<4x4xf32>
    %c0_124 = arith.constant 0 : index
    %c2_125 = arith.constant 2 : index
    %c1_126 = arith.constant 1 : index
    %c0_127 = arith.constant 0 : index
    %c0_128 = arith.constant 0 : index
    %160 = vector.load %arg12[%c0_124, %c2_125, %c1_126, %c0_127, %c0_128] : memref<1x8x4x4x4xf32, #tpu.memory_space<vmem>>, vector<1x1x1x4x4xf32>
    %161 = vector.shape_cast %160 : vector<1x1x1x4x4xf32> to vector<4x4xf32>
    %162 = vector.shape_cast %159 : vector<4x4xf32> to vector<1x1x1x4x4xf32>
    tpu.vector_store %arg12[%c0_124, %c2_125, %c1_126, %c0_127, %c0_128], %162 {strides = array<i32>} : memref<1x8x4x4x4xf32, #tpu.memory_space<vmem>>, vector<1x1x1x4x4xf32>,
    %163 = vector.extract_strided_slice %81 {offsets = [0, 0], sizes = [4, 4], strides = [1, 1]} : vector<4x128xf32> to vector<4x4xf32>
    %c0_129 = arith.constant 0 : index
    %c2_130 = arith.constant 2 : index
    %c2_131 = arith.constant 2 : index
    %c0_132 = arith.constant 0 : index
    %c0_133 = arith.constant 0 : index
    %164 = vector.load %arg12[%c0_129, %c2_130, %c2_131, %c0_132, %c0_133] : memref<1x8x4x4x4xf32, #tpu.memory_space<vmem>>, vector<1x1x1x4x4xf32>
    %165 = vector.shape_cast %164 : vector<1x1x1x4x4xf32> to vector<4x4xf32>
    %166 = vector.shape_cast %163 : vector<4x4xf32> to vector<1x1x1x4x4xf32>
    tpu.vector_store %arg12[%c0_129, %c2_130, %c2_131, %c0_132, %c0_133], %166 {strides = array<i32>} : memref<1x8x4x4x4xf32, #tpu.memory_space<vmem>>, vector<1x1x1x4x4xf32>,
    %167 = arith.addf %81, %84 : vector<4x128xf32>
    %cst_134 = arith.constant 5.000000e-01 : f32
    %168 = vector.broadcast %cst_134 : f32 to vector<4x128xf32>
    %169 = arith.mulf %168, %167 : vector<4x128xf32>
    %170 = vector.extract_strided_slice %169 {offsets = [0, 0], sizes = [4, 4], strides = [1, 1]} : vector<4x128xf32> to vector<4x4xf32>
    %c0_135 = arith.constant 0 : index
    %c2_136 = arith.constant 2 : index
    %c3_137 = arith.constant 3 : index
    %c0_138 = arith.constant 0 : index
    %c0_139 = arith.constant 0 : index
    %171 = vector.load %arg12[%c0_135, %c2_136, %c3_137, %c0_138, %c0_139] : memref<1x8x4x4x4xf32, #tpu.memory_space<vmem>>, vector<1x1x1x4x4xf32>
    %172 = vector.shape_cast %171 : vector<1x1x1x4x4xf32> to vector<4x4xf32>
    %173 = vector.shape_cast %170 : vector<4x4xf32> to vector<1x1x1x4x4xf32>
    tpu.vector_store %arg12[%c0_135, %c2_136, %c3_137, %c0_138, %c0_139], %173 {strides = array<i32>} : memref<1x8x4x4x4xf32, #tpu.memory_space<vmem>>, vector<1x1x1x4x4xf32>,
    %174 = arith.addf %73, %140 : vector<4x128xf32>
    %cst_140 = arith.constant 5.000000e-01 : f32
    %175 = vector.broadcast %cst_140 : f32 to vector<4x128xf32>
    %176 = arith.mulf %175, %174 : vector<4x128xf32>
    %177 = arith.addf %81, %148 : vector<4x128xf32>
    %cst_141 = arith.constant 5.000000e-01 : f32
    %178 = vector.broadcast %cst_141 : f32 to vector<4x128xf32>
    %179 = arith.mulf %178, %177 : vector<4x128xf32>
    %180 = arith.addf %84, %151 : vector<4x128xf32>
    %cst_142 = arith.constant 5.000000e-01 : f32
    %181 = vector.broadcast %cst_142 : f32 to vector<4x128xf32>
    %182 = arith.mulf %181, %180 : vector<4x128xf32>
    %183 = vector.extract_strided_slice %176 {offsets = [0, 0], sizes = [4, 4], strides = [1, 1]} : vector<4x128xf32> to vector<4x4xf32>
    %c0_143 = arith.constant 0 : index
    %c3_144 = arith.constant 3 : index
    %c0_145 = arith.constant 0 : index
    %c0_146 = arith.constant 0 : index
    %c0_147 = arith.constant 0 : index
    %184 = vector.load %arg12[%c0_143, %c3_144, %c0_145, %c0_146, %c0_147] : memref<1x8x4x4x4xf32, #tpu.memory_space<vmem>>, vector<1x1x1x4x4xf32>
    %185 = vector.shape_cast %184 : vector<1x1x1x4x4xf32> to vector<4x4xf32>
    %186 = vector.shape_cast %183 : vector<4x4xf32> to vector<1x1x1x4x4xf32>
    tpu.vector_store %arg12[%c0_143, %c3_144, %c0_145, %c0_146, %c0_147], %186 {strides = array<i32>} : memref<1x8x4x4x4xf32, #tpu.memory_space<vmem>>, vector<1x1x1x4x4xf32>,
    %187 = arith.addf %176, %179 : vector<4x128xf32>
    %cst_148 = arith.constant 5.000000e-01 : f32
    %188 = vector.broadcast %cst_148 : f32 to vector<4x128xf32>
    %189 = arith.mulf %188, %187 : vector<4x128xf32>
    %190 = vector.extract_strided_slice %189 {offsets = [0, 0], sizes = [4, 4], strides = [1, 1]} : vector<4x128xf32> to vector<4x4xf32>
    %c0_149 = arith.constant 0 : index
    %c3_150 = arith.constant 3 : index
    %c1_151 = arith.constant 1 : index
    %c0_152 = arith.constant 0 : index
    %c0_153 = arith.constant 0 : index
    %191 = vector.load %arg12[%c0_149, %c3_150, %c1_151, %c0_152, %c0_153] : memref<1x8x4x4x4xf32, #tpu.memory_space<vmem>>, vector<1x1x1x4x4xf32>
    %192 = vector.shape_cast %191 : vector<1x1x1x4x4xf32> to vector<4x4xf32>
    %193 = vector.shape_cast %190 : vector<4x4xf32> to vector<1x1x1x4x4xf32>
    tpu.vector_store %arg12[%c0_149, %c3_150, %c1_151, %c0_152, %c0_153], %193 {strides = array<i32>} : memref<1x8x4x4x4xf32, #tpu.memory_space<vmem>>, vector<1x1x1x4x4xf32>,
    %194 = vector.extract_strided_slice %179 {offsets = [0, 0], sizes = [4, 4], strides = [1, 1]} : vector<4x128xf32> to vector<4x4xf32>
    %c0_154 = arith.constant 0 : index
    %c3_155 = arith.constant 3 : index
    %c2_156 = arith.constant 2 : index
    %c0_157 = arith.constant 0 : index
    %c0_158 = arith.constant 0 : index
    %195 = vector.load %arg12[%c0_154, %c3_155, %c2_156, %c0_157, %c0_158] : memref<1x8x4x4x4xf32, #tpu.memory_space<vmem>>, vector<1x1x1x4x4xf32>
    %196 = vector.shape_cast %195 : vector<1x1x1x4x4xf32> to vector<4x4xf32>
    %197 = vector.shape_cast %194 : vector<4x4xf32> to vector<1x1x1x4x4xf32>
    tpu.vector_store %arg12[%c0_154, %c3_155, %c2_156, %c0_157, %c0_158], %197 {strides = array<i32>} : memref<1x8x4x4x4xf32, #tpu.memory_space<vmem>>, vector<1x1x1x4x4xf32>,
    %198 = arith.addf %179, %182 : vector<4x128xf32>
    %cst_159 = arith.constant 5.000000e-01 : f32
    %199 = vector.broadcast %cst_159 : f32 to vector<4x128xf32>
    %200 = arith.mulf %199, %198 : vector<4x128xf32>
    %201 = vector.extract_strided_slice %200 {offsets = [0, 0], sizes = [4, 4], strides = [1, 1]} : vector<4x128xf32> to vector<4x4xf32>
    %c0_160 = arith.constant 0 : index
    %c3_161 = arith.constant 3 : index
    %c3_162 = arith.constant 3 : index
    %c0_163 = arith.constant 0 : index
    %c0_164 = arith.constant 0 : index
    %202 = vector.load %arg12[%c0_160, %c3_161, %c3_162, %c0_163, %c0_164] : memref<1x8x4x4x4xf32, #tpu.memory_space<vmem>>, vector<1x1x1x4x4xf32>
    %203 = vector.shape_cast %202 : vector<1x1x1x4x4xf32> to vector<4x4xf32>
    %204 = vector.shape_cast %201 : vector<4x4xf32> to vector<1x1x1x4x4xf32>
    tpu.vector_store %arg12[%c0_160, %c3_161, %c3_162, %c0_163, %c0_164], %204 {strides = array<i32>} : memref<1x8x4x4x4xf32, #tpu.memory_space<vmem>>, vector<1x1x1x4x4xf32>,
    %c4_165 = arith.constant 4 : index
    %c0_166 = arith.constant 0 : index
    %205 = vector.load %arg13[%c4_165, %c0_166] : memref<12x128xf32, #tpu.memory_space<vmem>>, vector<4x128xf32>
    %c8_167 = arith.constant 8 : index
    %c0_168 = arith.constant 0 : index
    %206 = vector.load %arg13[%c8_167, %c0_168] : memref<12x128xf32, #tpu.memory_space<vmem>>, vector<4x128xf32>
    %207 = arith.addf %205, %206 : vector<4x128xf32>
    %cst_169 = arith.constant 5.000000e-01 : f32
    %208 = vector.broadcast %cst_169 : f32 to vector<4x128xf32>
    %209 = arith.mulf %208, %207 : vector<4x128xf32>
    %c12 = arith.constant 12 : index
    %c0_170 = arith.constant 0 : index
    %210 = vector.load %arg14[%c12, %c0_170] : memref<20x128xf32, #tpu.memory_space<vmem>>, vector<4x128xf32>
    %211 = arith.addf %210, %209 : vector<4x128xf32>
    %c12_171 = arith.constant 12 : index
    %c0_172 = arith.constant 0 : index
    %212 = vector.load %arg15[%c12_171, %c0_172] : memref<20x128xf32, #tpu.memory_space<vmem>>, vector<4x128xf32>
    %c3_i32_173 = arith.constant 3 : i32
    %213 = tpu.dynamic_rotate %209 by %c3_i32_173 dim 0 : vector<4x128xf32>, i32 -> vector<4x128xf32>
    %214 = vector.broadcast %52 : vector<4x1xf32> to vector<4x128xf32>
    %215 = arith.mulf %214, %213 : vector<4x128xf32>
    %216 = arith.addf %209, %215 : vector<4x128xf32>
    %cst_174 = arith.constant 5.000000e-01 : f32
    %217 = vector.broadcast %cst_174 : f32 to vector<4x128xf32>
    %218 = arith.mulf %217, %216 : vector<4x128xf32>
    %219 = arith.addf %212, %218 : vector<4x128xf32>
    %c3_i32_175 = arith.constant 3 : i32
    %220 = tpu.dynamic_rotate %211 by %c3_i32_175 dim 0 : vector<4x128xf32>, i32 -> vector<4x128xf32>
    %221 = vector.broadcast %52 : vector<4x1xf32> to vector<4x128xf32>
    %222 = arith.mulf %221, %220 : vector<4x128xf32>
    %223 = vector.extract_strided_slice %140 {offsets = [0, 0], sizes = [4, 4], strides = [1, 1]} : vector<4x128xf32> to vector<4x4xf32>
    %c0_176 = arith.constant 0 : index
    %c4_177 = arith.constant 4 : index
    %c0_178 = arith.constant 0 : index
    %c0_179 = arith.constant 0 : index
    %c0_180 = arith.constant 0 : index
    %224 = vector.load %arg12[%c0_176, %c4_177, %c0_178, %c0_179, %c0_180] : memref<1x8x4x4x4xf32, #tpu.memory_space<vmem>>, vector<1x1x1x4x4xf32>
    %225 = vector.shape_cast %224 : vector<1x1x1x4x4xf32> to vector<4x4xf32>
    %226 = vector.shape_cast %223 : vector<4x4xf32> to vector<1x1x1x4x4xf32>
    tpu.vector_store %arg12[%c0_176, %c4_177, %c0_178, %c0_179, %c0_180], %226 {strides = array<i32>} : memref<1x8x4x4x4xf32, #tpu.memory_space<vmem>>, vector<1x1x1x4x4xf32>,
    %227 = arith.addf %140, %148 : vector<4x128xf32>
    %cst_181 = arith.constant 5.000000e-01 : f32
    %228 = vector.broadcast %cst_181 : f32 to vector<4x128xf32>
    %229 = arith.mulf %228, %227 : vector<4x128xf32>
    %230 = vector.extract_strided_slice %229 {offsets = [0, 0], sizes = [4, 4], strides = [1, 1]} : vector<4x128xf32> to vector<4x4xf32>
    %c0_182 = arith.constant 0 : index
    %c4_183 = arith.constant 4 : index
    %c1_184 = arith.constant 1 : index
    %c0_185 = arith.constant 0 : index
    %c0_186 = arith.constant 0 : index
    %231 = vector.load %arg12[%c0_182, %c4_183, %c1_184, %c0_185, %c0_186] : memref<1x8x4x4x4xf32, #tpu.memory_space<vmem>>, vector<1x1x1x4x4xf32>
    %232 = vector.shape_cast %231 : vector<1x1x1x4x4xf32> to vector<4x4xf32>
    %233 = vector.shape_cast %230 : vector<4x4xf32> to vector<1x1x1x4x4xf32>
    tpu.vector_store %arg12[%c0_182, %c4_183, %c1_184, %c0_185, %c0_186], %233 {strides = array<i32>} : memref<1x8x4x4x4xf32, #tpu.memory_space<vmem>>, vector<1x1x1x4x4xf32>,
    %234 = vector.extract_strided_slice %148 {offsets = [0, 0], sizes = [4, 4], strides = [1, 1]} : vector<4x128xf32> to vector<4x4xf32>
    %c0_187 = arith.constant 0 : index
    %c4_188 = arith.constant 4 : index
    %c2_189 = arith.constant 2 : index
    %c0_190 = arith.constant 0 : index
    %c0_191 = arith.constant 0 : index
    %235 = vector.load %arg12[%c0_187, %c4_188, %c2_189, %c0_190, %c0_191] : memref<1x8x4x4x4xf32, #tpu.memory_space<vmem>>, vector<1x1x1x4x4xf32>
    %236 = vector.shape_cast %235 : vector<1x1x1x4x4xf32> to vector<4x4xf32>
    %237 = vector.shape_cast %234 : vector<4x4xf32> to vector<1x1x1x4x4xf32>
    tpu.vector_store %arg12[%c0_187, %c4_188, %c2_189, %c0_190, %c0_191], %237 {strides = array<i32>} : memref<1x8x4x4x4xf32, #tpu.memory_space<vmem>>, vector<1x1x1x4x4xf32>,
    %238 = arith.addf %148, %151 : vector<4x128xf32>
    %cst_192 = arith.constant 5.000000e-01 : f32
    %239 = vector.broadcast %cst_192 : f32 to vector<4x128xf32>
    %240 = arith.mulf %239, %238 : vector<4x128xf32>
    %241 = vector.extract_strided_slice %240 {offsets = [0, 0], sizes = [4, 4], strides = [1, 1]} : vector<4x128xf32> to vector<4x4xf32>
    %c0_193 = arith.constant 0 : index
    %c4_194 = arith.constant 4 : index
    %c3_195 = arith.constant 3 : index
    %c0_196 = arith.constant 0 : index
    %c0_197 = arith.constant 0 : index
    %242 = vector.load %arg12[%c0_193, %c4_194, %c3_195, %c0_196, %c0_197] : memref<1x8x4x4x4xf32, #tpu.memory_space<vmem>>, vector<1x1x1x4x4xf32>
    %243 = vector.shape_cast %242 : vector<1x1x1x4x4xf32> to vector<4x4xf32>
    %244 = vector.shape_cast %241 : vector<4x4xf32> to vector<1x1x1x4x4xf32>
    tpu.vector_store %arg12[%c0_193, %c4_194, %c3_195, %c0_196, %c0_197], %244 {strides = array<i32>} : memref<1x8x4x4x4xf32, #tpu.memory_space<vmem>>, vector<1x1x1x4x4xf32>,
    %245 = arith.addf %140, %211 : vector<4x128xf32>
    %cst_198 = arith.constant 5.000000e-01 : f32
    %246 = vector.broadcast %cst_198 : f32 to vector<4x128xf32>
    %247 = arith.mulf %246, %245 : vector<4x128xf32>
    %248 = arith.addf %148, %219 : vector<4x128xf32>
    %cst_199 = arith.constant 5.000000e-01 : f32
    %249 = vector.broadcast %cst_199 : f32 to vector<4x128xf32>
    %250 = arith.mulf %249, %248 : vector<4x128xf32>
    %251 = arith.addf %151, %222 : vector<4x128xf32>
    %cst_200 = arith.constant 5.000000e-01 : f32
    %252 = vector.broadcast %cst_200 : f32 to vector<4x128xf32>
    %253 = arith.mulf %252, %251 : vector<4x128xf32>
    %254 = vector.extract_strided_slice %247 {offsets = [0, 0], sizes = [4, 4], strides = [1, 1]} : vector<4x128xf32> to vector<4x4xf32>
    %c0_201 = arith.constant 0 : index
    %c5 = arith.constant 5 : index
    %c0_202 = arith.constant 0 : index
    %c0_203 = arith.constant 0 : index
    %c0_204 = arith.constant 0 : index
    %255 = vector.load %arg12[%c0_201, %c5, %c0_202, %c0_203, %c0_204] : memref<1x8x4x4x4xf32, #tpu.memory_space<vmem>>, vector<1x1x1x4x4xf32>
    %256 = vector.shape_cast %255 : vector<1x1x1x4x4xf32> to vector<4x4xf32>
    %257 = vector.shape_cast %254 : vector<4x4xf32> to vector<1x1x1x4x4xf32>
    tpu.vector_store %arg12[%c0_201, %c5, %c0_202, %c0_203, %c0_204], %257 {strides = array<i32>} : memref<1x8x4x4x4xf32, #tpu.memory_space<vmem>>, vector<1x1x1x4x4xf32>,
    %258 = arith.addf %247, %250 : vector<4x128xf32>
    %cst_205 = arith.constant 5.000000e-01 : f32
    %259 = vector.broadcast %cst_205 : f32 to vector<4x128xf32>
    %260 = arith.mulf %259, %258 : vector<4x128xf32>
    %261 = vector.extract_strided_slice %260 {offsets = [0, 0], sizes = [4, 4], strides = [1, 1]} : vector<4x128xf32> to vector<4x4xf32>
    %c0_206 = arith.constant 0 : index
    %c5_207 = arith.constant 5 : index
    %c1_208 = arith.constant 1 : index
    %c0_209 = arith.constant 0 : index
    %c0_210 = arith.constant 0 : index
    %262 = vector.load %arg12[%c0_206, %c5_207, %c1_208, %c0_209, %c0_210] : memref<1x8x4x4x4xf32, #tpu.memory_space<vmem>>, vector<1x1x1x4x4xf32>
    %263 = vector.shape_cast %262 : vector<1x1x1x4x4xf32> to vector<4x4xf32>
    %264 = vector.shape_cast %261 : vector<4x4xf32> to vector<1x1x1x4x4xf32>
    tpu.vector_store %arg12[%c0_206, %c5_207, %c1_208, %c0_209, %c0_210], %264 {strides = array<i32>} : memref<1x8x4x4x4xf32, #tpu.memory_space<vmem>>, vector<1x1x1x4x4xf32>,
    %265 = vector.extract_strided_slice %250 {offsets = [0, 0], sizes = [4, 4], strides = [1, 1]} : vector<4x128xf32> to vector<4x4xf32>
    %c0_211 = arith.constant 0 : index
    %c5_212 = arith.constant 5 : index
    %c2_213 = arith.constant 2 : index
    %c0_214 = arith.constant 0 : index
    %c0_215 = arith.constant 0 : index
    %266 = vector.load %arg12[%c0_211, %c5_212, %c2_213, %c0_214, %c0_215] : memref<1x8x4x4x4xf32, #tpu.memory_space<vmem>>, vector<1x1x1x4x4xf32>
    %267 = vector.shape_cast %266 : vector<1x1x1x4x4xf32> to vector<4x4xf32>
    %268 = vector.shape_cast %265 : vector<4x4xf32> to vector<1x1x1x4x4xf32>
    tpu.vector_store %arg12[%c0_211, %c5_212, %c2_213, %c0_214, %c0_215], %268 {strides = array<i32>} : memref<1x8x4x4x4xf32, #tpu.memory_space<vmem>>, vector<1x1x1x4x4xf32>,
    %269 = arith.addf %250, %253 : vector<4x128xf32>
    %cst_216 = arith.constant 5.000000e-01 : f32
    %270 = vector.broadcast %cst_216 : f32 to vector<4x128xf32>
    %271 = arith.mulf %270, %269 : vector<4x128xf32>
    %272 = vector.extract_strided_slice %271 {offsets = [0, 0], sizes = [4, 4], strides = [1, 1]} : vector<4x128xf32> to vector<4x4xf32>
    %c0_217 = arith.constant 0 : index
    %c5_218 = arith.constant 5 : index
    %c3_219 = arith.constant 3 : index
    %c0_220 = arith.constant 0 : index
    %c0_221 = arith.constant 0 : index
    %273 = vector.load %arg12[%c0_217, %c5_218, %c3_219, %c0_220, %c0_221] : memref<1x8x4x4x4xf32, #tpu.memory_space<vmem>>, vector<1x1x1x4x4xf32>
    %274 = vector.shape_cast %273 : vector<1x1x1x4x4xf32> to vector<4x4xf32>
    %275 = vector.shape_cast %272 : vector<4x4xf32> to vector<1x1x1x4x4xf32>
    tpu.vector_store %arg12[%c0_217, %c5_218, %c3_219, %c0_220, %c0_221], %275 {strides = array<i32>} : memref<1x8x4x4x4xf32, #tpu.memory_space<vmem>>, vector<1x1x1x4x4xf32>,
    %c8_222 = arith.constant 8 : index
    %c0_223 = arith.constant 0 : index
    %276 = vector.load %arg13[%c8_222, %c0_223] : memref<12x128xf32, #tpu.memory_space<vmem>>, vector<4x128xf32>
    %c16_224 = arith.constant 16 : index
    %c0_225 = arith.constant 0 : index
    %277 = vector.load %arg14[%c16_224, %c0_225] : memref<20x128xf32, #tpu.memory_space<vmem>>, vector<4x128xf32>
    %278 = arith.addf %277, %276 : vector<4x128xf32>
    %c16_226 = arith.constant 16 : index
    %c0_227 = arith.constant 0 : index
    %279 = vector.load %arg15[%c16_226, %c0_227] : memref<20x128xf32, #tpu.memory_space<vmem>>, vector<4x128xf32>
    %c3_i32_228 = arith.constant 3 : i32
    %280 = tpu.dynamic_rotate %276 by %c3_i32_228 dim 0 : vector<4x128xf32>, i32 -> vector<4x128xf32>
    %281 = vector.broadcast %52 : vector<4x1xf32> to vector<4x128xf32>
    %282 = arith.mulf %281, %280 : vector<4x128xf32>
    %283 = arith.addf %276, %282 : vector<4x128xf32>
    %cst_229 = arith.constant 5.000000e-01 : f32
    %284 = vector.broadcast %cst_229 : f32 to vector<4x128xf32>
    %285 = arith.mulf %284, %283 : vector<4x128xf32>
    %286 = arith.addf %279, %285 : vector<4x128xf32>
    %c3_i32_230 = arith.constant 3 : i32
    %287 = tpu.dynamic_rotate %278 by %c3_i32_230 dim 0 : vector<4x128xf32>, i32 -> vector<4x128xf32>
    %288 = vector.broadcast %52 : vector<4x1xf32> to vector<4x128xf32>
    %289 = arith.mulf %288, %287 : vector<4x128xf32>
    %290 = vector.extract_strided_slice %211 {offsets = [0, 0], sizes = [4, 4], strides = [1, 1]} : vector<4x128xf32> to vector<4x4xf32>
    %c0_231 = arith.constant 0 : index
    %c6 = arith.constant 6 : index
    %c0_232 = arith.constant 0 : index
    %c0_233 = arith.constant 0 : index
    %c0_234 = arith.constant 0 : index
    %291 = vector.load %arg12[%c0_231, %c6, %c0_232, %c0_233, %c0_234] : memref<1x8x4x4x4xf32, #tpu.memory_space<vmem>>, vector<1x1x1x4x4xf32>
    %292 = vector.shape_cast %291 : vector<1x1x1x4x4xf32> to vector<4x4xf32>
    %293 = vector.shape_cast %290 : vector<4x4xf32> to vector<1x1x1x4x4xf32>
    tpu.vector_store %arg12[%c0_231, %c6, %c0_232, %c0_233, %c0_234], %293 {strides = array<i32>} : memref<1x8x4x4x4xf32, #tpu.memory_space<vmem>>, vector<1x1x1x4x4xf32>,
    %294 = arith.addf %211, %219 : vector<4x128xf32>
    %cst_235 = arith.constant 5.000000e-01 : f32
    %295 = vector.broadcast %cst_235 : f32 to vector<4x128xf32>
    %296 = arith.mulf %295, %294 : vector<4x128xf32>
    %297 = vector.extract_strided_slice %296 {offsets = [0, 0], sizes = [4, 4], strides = [1, 1]} : vector<4x128xf32> to vector<4x4xf32>
    %c0_236 = arith.constant 0 : index
    %c6_237 = arith.constant 6 : index
    %c1_238 = arith.constant 1 : index
    %c0_239 = arith.constant 0 : index
    %c0_240 = arith.constant 0 : index
    %298 = vector.load %arg12[%c0_236, %c6_237, %c1_238, %c0_239, %c0_240] : memref<1x8x4x4x4xf32, #tpu.memory_space<vmem>>, vector<1x1x1x4x4xf32>
    %299 = vector.shape_cast %298 : vector<1x1x1x4x4xf32> to vector<4x4xf32>
    %300 = vector.shape_cast %297 : vector<4x4xf32> to vector<1x1x1x4x4xf32>
    tpu.vector_store %arg12[%c0_236, %c6_237, %c1_238, %c0_239, %c0_240], %300 {strides = array<i32>} : memref<1x8x4x4x4xf32, #tpu.memory_space<vmem>>, vector<1x1x1x4x4xf32>,
    %301 = vector.extract_strided_slice %219 {offsets = [0, 0], sizes = [4, 4], strides = [1, 1]} : vector<4x128xf32> to vector<4x4xf32>
    %c0_241 = arith.constant 0 : index
    %c6_242 = arith.constant 6 : index
    %c2_243 = arith.constant 2 : index
    %c0_244 = arith.constant 0 : index
    %c0_245 = arith.constant 0 : index
    %302 = vector.load %arg12[%c0_241, %c6_242, %c2_243, %c0_244, %c0_245] : memref<1x8x4x4x4xf32, #tpu.memory_space<vmem>>, vector<1x1x1x4x4xf32>
    %303 = vector.shape_cast %302 : vector<1x1x1x4x4xf32> to vector<4x4xf32>
    %304 = vector.shape_cast %301 : vector<4x4xf32> to vector<1x1x1x4x4xf32>
    tpu.vector_store %arg12[%c0_241, %c6_242, %c2_243, %c0_244, %c0_245], %304 {strides = array<i32>} : memref<1x8x4x4x4xf32, #tpu.memory_space<vmem>>, vector<1x1x1x4x4xf32>,
    %305 = arith.addf %219, %222 : vector<4x128xf32>
    %cst_246 = arith.constant 5.000000e-01 : f32
    %306 = vector.broadcast %cst_246 : f32 to vector<4x128xf32>
    %307 = arith.mulf %306, %305 : vector<4x128xf32>
    %308 = vector.extract_strided_slice %307 {offsets = [0, 0], sizes = [4, 4], strides = [1, 1]} : vector<4x128xf32> to vector<4x4xf32>
    %c0_247 = arith.constant 0 : index
    %c6_248 = arith.constant 6 : index
    %c3_249 = arith.constant 3 : index
    %c0_250 = arith.constant 0 : index
    %c0_251 = arith.constant 0 : index
    %309 = vector.load %arg12[%c0_247, %c6_248, %c3_249, %c0_250, %c0_251] : memref<1x8x4x4x4xf32, #tpu.memory_space<vmem>>, vector<1x1x1x4x4xf32>
    %310 = vector.shape_cast %309 : vector<1x1x1x4x4xf32> to vector<4x4xf32>
    %311 = vector.shape_cast %308 : vector<4x4xf32> to vector<1x1x1x4x4xf32>
    tpu.vector_store %arg12[%c0_247, %c6_248, %c3_249, %c0_250, %c0_251], %311 {strides = array<i32>} : memref<1x8x4x4x4xf32, #tpu.memory_space<vmem>>, vector<1x1x1x4x4xf32>,
    %312 = arith.addf %211, %278 : vector<4x128xf32>
    %cst_252 = arith.constant 5.000000e-01 : f32
    %313 = vector.broadcast %cst_252 : f32 to vector<4x128xf32>
    %314 = arith.mulf %313, %312 : vector<4x128xf32>
    %315 = arith.addf %219, %286 : vector<4x128xf32>
    %cst_253 = arith.constant 5.000000e-01 : f32
    %316 = vector.broadcast %cst_253 : f32 to vector<4x128xf32>
    %317 = arith.mulf %316, %315 : vector<4x128xf32>
    %318 = arith.addf %222, %289 : vector<4x128xf32>
    %cst_254 = arith.constant 5.000000e-01 : f32
    %319 = vector.broadcast %cst_254 : f32 to vector<4x128xf32>
    %320 = arith.mulf %319, %318 : vector<4x128xf32>
    %321 = vector.extract_strided_slice %314 {offsets = [0, 0], sizes = [4, 4], strides = [1, 1]} : vector<4x128xf32> to vector<4x4xf32>
    %c0_255 = arith.constant 0 : index
    %c7 = arith.constant 7 : index
    %c0_256 = arith.constant 0 : index
    %c0_257 = arith.constant 0 : index
    %c0_258 = arith.constant 0 : index
    %322 = vector.load %arg12[%c0_255, %c7, %c0_256, %c0_257, %c0_258] : memref<1x8x4x4x4xf32, #tpu.memory_space<vmem>>, vector<1x1x1x4x4xf32>
    %323 = vector.shape_cast %322 : vector<1x1x1x4x4xf32> to vector<4x4xf32>
    %324 = vector.shape_cast %321 : vector<4x4xf32> to vector<1x1x1x4x4xf32>
    tpu.vector_store %arg12[%c0_255, %c7, %c0_256, %c0_257, %c0_258], %324 {strides = array<i32>} : memref<1x8x4x4x4xf32, #tpu.memory_space<vmem>>, vector<1x1x1x4x4xf32>,
    %325 = arith.addf %314, %317 : vector<4x128xf32>
    %cst_259 = arith.constant 5.000000e-01 : f32
    %326 = vector.broadcast %cst_259 : f32 to vector<4x128xf32>
    %327 = arith.mulf %326, %325 : vector<4x128xf32>
    %328 = vector.extract_strided_slice %327 {offsets = [0, 0], sizes = [4, 4], strides = [1, 1]} : vector<4x128xf32> to vector<4x4xf32>
    %c0_260 = arith.constant 0 : index
    %c7_261 = arith.constant 7 : index
    %c1_262 = arith.constant 1 : index
    %c0_263 = arith.constant 0 : index
    %c0_264 = arith.constant 0 : index
    %329 = vector.load %arg12[%c0_260, %c7_261, %c1_262, %c0_263, %c0_264] : memref<1x8x4x4x4xf32, #tpu.memory_space<vmem>>, vector<1x1x1x4x4xf32>
    %330 = vector.shape_cast %329 : vector<1x1x1x4x4xf32> to vector<4x4xf32>
    %331 = vector.shape_cast %328 : vector<4x4xf32> to vector<1x1x1x4x4xf32>
    tpu.vector_store %arg12[%c0_260, %c7_261, %c1_262, %c0_263, %c0_264], %331 {strides = array<i32>} : memref<1x8x4x4x4xf32, #tpu.memory_space<vmem>>, vector<1x1x1x4x4xf32>,
    %332 = vector.extract_strided_slice %317 {offsets = [0, 0], sizes = [4, 4], strides = [1, 1]} : vector<4x128xf32> to vector<4x4xf32>
    %c0_265 = arith.constant 0 : index
    %c7_266 = arith.constant 7 : index
    %c2_267 = arith.constant 2 : index
    %c0_268 = arith.constant 0 : index
    %c0_269 = arith.constant 0 : index
    %333 = vector.load %arg12[%c0_265, %c7_266, %c2_267, %c0_268, %c0_269] : memref<1x8x4x4x4xf32, #tpu.memory_space<vmem>>, vector<1x1x1x4x4xf32>
    %334 = vector.shape_cast %333 : vector<1x1x1x4x4xf32> to vector<4x4xf32>
    %335 = vector.shape_cast %332 : vector<4x4xf32> to vector<1x1x1x4x4xf32>
    tpu.vector_store %arg12[%c0_265, %c7_266, %c2_267, %c0_268, %c0_269], %335 {strides = array<i32>} : memref<1x8x4x4x4xf32, #tpu.memory_space<vmem>>, vector<1x1x1x4x4xf32>,
    %336 = arith.addf %317, %320 : vector<4x128xf32>
    %cst_270 = arith.constant 5.000000e-01 : f32
    %337 = vector.broadcast %cst_270 : f32 to vector<4x128xf32>
    %338 = arith.mulf %337, %336 : vector<4x128xf32>
    %339 = vector.extract_strided_slice %338 {offsets = [0, 0], sizes = [4, 4], strides = [1, 1]} : vector<4x128xf32> to vector<4x4xf32>
    %c0_271 = arith.constant 0 : index
    %c7_272 = arith.constant 7 : index
    %c3_273 = arith.constant 3 : index
    %c0_274 = arith.constant 0 : index
    %c0_275 = arith.constant 0 : index
    %340 = vector.load %arg12[%c0_271, %c7_272, %c3_273, %c0_274, %c0_275] : memref<1x8x4x4x4xf32, #tpu.memory_space<vmem>>, vector<1x1x1x4x4xf32>
    %341 = vector.shape_cast %340 : vector<1x1x1x4x4xf32> to vector<4x4xf32>
    %342 = vector.shape_cast %339 : vector<4x4xf32> to vector<1x1x1x4x4xf32>
    tpu.vector_store %arg12[%c0_271, %c7_272, %c3_273, %c0_274, %c0_275], %342 {strides = array<i32>} : memref<1x8x4x4x4xf32, #tpu.memory_space<vmem>>, vector<1x1x1x4x4xf32>,
    return
  }
  func.func @transform_0(%arg0: i32, %arg1: i32) -> (i32, i32, i32) {
    %c0_i32 = arith.constant 0 : i32
    %c0_i32_0 = arith.constant 0 : i32
    return %arg0, %arg1, %c0_i32 : i32, i32, i32
  }
  func.func @transform_1(%arg0: i32, %arg1: i32) -> (i32, i32, i32, i32) {
    %c1_i32 = arith.constant 1 : i32
    %0 = arith.addi %arg1, %c1_i32 : i32
    %c2_i32 = arith.constant 2 : i32
    %1 = arith.muli %0, %c2_i32 : i32
    %c3_i32 = arith.constant 3 : i32
    %2 = arith.minsi %1, %c3_i32 : i32
    %c0_i32 = arith.constant 0 : i32
    %c0_i32_0 = arith.constant 0 : i32
    %c0_i32_1 = arith.constant 0 : i32
    return %arg0, %2, %c0_i32, %c0_i32_0 : i32, i32, i32, i32
  }
  func.func @transform_2(%arg0: i32, %arg1: i32) -> (i32, i32, i32) {
    %c0_i32 = arith.constant 0 : i32
    %c0_i32_0 = arith.constant 0 : i32
    return %arg0, %arg1, %c0_i32 : i32, i32, i32
  }
  func.func @transform_3(%arg0: i32, %arg1: i32) -> (i32, i32, i32, i32) {
    %c1_i32 = arith.constant 1 : i32
    %0 = arith.addi %arg1, %c1_i32 : i32
    %c2_i32 = arith.constant 2 : i32
    %1 = arith.muli %c2_i32, %0 : i32
    %c2_i32_0 = arith.constant 2 : i32
    %2 = arith.muli %1, %c2_i32_0 : i32
    %c7_i32 = arith.constant 7 : i32
    %3 = arith.minsi %2, %c7_i32 : i32
    %c0_i32 = arith.constant 0 : i32
    %c0_i32_1 = arith.constant 0 : i32
    %c0_i32_2 = arith.constant 0 : i32
    return %arg0, %3, %c0_i32, %c0_i32_1 : i32, i32, i32, i32
  }
  func.func @transform_4(%arg0: i32, %arg1: i32) -> (i32, i32, i32) {
    %c2_i32 = arith.constant 2 : i32
    %0 = arith.addi %c2_i32, %arg1 : i32
    %c0_i32 = arith.constant 0 : i32
    %c0_i32_0 = arith.constant 0 : i32
    return %arg0, %0, %c0_i32 : i32, i32, i32
  }
  func.func @transform_5(%arg0: i32, %arg1: i32) -> (i32, i32, i32, i32) {
    %c1_i32 = arith.constant 1 : i32
    %0 = arith.addi %arg1, %c1_i32 : i32
    %c2_i32 = arith.constant 2 : i32
    %1 = arith.muli %c2_i32, %0 : i32
    %c2_i32_0 = arith.constant 2 : i32
    %2 = arith.muli %1, %c2_i32_0 : i32
    %c7_i32 = arith.constant 7 : i32
    %3 = arith.minsi %2, %c7_i32 : i32
    %c8_i32 = arith.constant 8 : i32
    %4 = arith.addi %c8_i32, %3 : i32
    %c0_i32 = arith.constant 0 : i32
    %c0_i32_1 = arith.constant 0 : i32
    %c0_i32_2 = arith.constant 0 : i32
    return %arg0, %4, %c0_i32, %c0_i32_1 : i32, i32, i32, i32
  }
  func.func @transform_6(%arg0: i32, %arg1: i32) -> (i32, i32) {
    %c0_i32 = arith.constant 0 : i32
    %c0_i32_0 = arith.constant 0 : i32
    %c0_i32_1 = arith.constant 0 : i32
    return %c0_i32, %c0_i32_0 : i32, i32
  }
  func.func @transform_7(%arg0: i32, %arg1: i32) -> (i32, i32) {
    %c0_i32 = arith.constant 0 : i32
    %c0_i32_0 = arith.constant 0 : i32
    %c0_i32_1 = arith.constant 0 : i32
    return %c0_i32, %c0_i32_0 : i32, i32
  }
  func.func @transform_8(%arg0: i32, %arg1: i32) -> (i32, i32) {
    %c0_i32 = arith.constant 0 : i32
    %c0_i32_0 = arith.constant 0 : i32
    %c0_i32_1 = arith.constant 0 : i32
    return %c0_i32, %c0_i32_0 : i32, i32
  }
  func.func @transform_9(%arg0: i32, %arg1: i32) -> (i32, i32) {
    %c0_i32 = arith.constant 0 : i32
    %c0_i32_0 = arith.constant 0 : i32
    %c0_i32_1 = arith.constant 0 : i32
    return %c0_i32, %c0_i32_0 : i32, i32
  }
  func.func @transform_10(%arg0: i32, %arg1: i32) -> (i32, i32, i32, i32, i32) {
    %c0_i32 = arith.constant 0 : i32
    %c0_i32_0 = arith.constant 0 : i32
    %c0_i32_1 = arith.constant 0 : i32
    %c0_i32_2 = arith.constant 0 : i32
    return %arg0, %arg1, %c0_i32, %c0_i32_0, %c0_i32_1 : i32, i32, i32, i32, i32
  }
}

</mosaic_0001>

<llo_original>
// kernel: skip_arch_forward.3
$region0: #{skip_arch_forward.3}
  #allocation0 [shape = 'u32[]', space=smem, size = 0x4, offset = 0x4, fixed_abs, tag = 'smem constant byte address 0x4 - core index']
  #allocation1 [shape = 'u32[144,128]{1,0:T(1,128)}', space=vmem, size = 0x12000, scoped, tag = 'internal scratch']
  %s0 = inlined_call_operand.vmem [shape: bf16[2,64,128], index: 0, kind: input, shape index: {}]
  %s1 = inlined_call_operand.vmem [shape: bf16[128,128], index: 1, kind: input, shape index: {}]
  %s2 = inlined_call_operand.vmem [shape: f32[1,128], index: 2, kind: input, shape index: {}]
  %s3 = inlined_call_operand.vmem [shape: bf16[2,64,128], index: 3, kind: output, shape index: {}]
  %s4 = sld [smem:[#allocation0]]
  $region45: #{skip_arch_forward.3} parent=0
    _
  %s6 = ssub.s32 1, %s4
  %s7 = scalar_select 0, %s6, %s4
  loop: start=0, step=1, limit=4
  $region2: #{skip_arch_forward.3} parent=0 // loop_pre_header
    _
  $region3: #{skip_arch_forward.3} parent=0 // loop_header
    %s9 = sphi 0, %s13
    %p10 = scmp.ge.s32.totalorder %s9, 4
    %s16 = sphi 0, %s28
    %s17 = sphi 0, %s24
    %s18 = sphi 0, %s16
    %s19 = sphi 0, %s17
    %s20 = sphi 0, %s18
    %s21 = sphi 0, %s19
    %s33 = sphi 0, %s35
    %s36 = sphi 0, %s33
    %s37 = sphi 0, %s36
    %s53 = sphi 0, %s37
    %s57 = sphi 0, %s57
    %s59 = sphi 0, %s57
    %s60 = sphi 0, %s59
    %s74 = sphi 0, %s60
    %s78 = sphi 0, %s78
    %s80 = sphi 0, %s78
    %s81 = sphi 0, %s80
    %s95 = sphi 0, %s81
    %s103 = sphi 0, %s105
    %s106 = sphi 0, %s103
    %s107 = sphi 0, %s106
    %s123 = sphi 0, %s107
  $region4: #{skip_arch_forward.3} parent=0 // loop_header_branch
    %12 = sbr.rel (%p10) target = $region8
  $region5: #{skip_arch_forward.3} parent=0 // loop_body
    %s14 = ssub.s32 %s9, 1
    %s15 = ssub.s32 %s9, 2
    %s22 = sadd.s32 1, %s17
    %p23 = scmp.ge.s32.totalorder %s22, 1
    %s24 = scalar_select %p23, 0, %s22
    %s25 = sadd.s32 1, %s16
    %s26 = scalar_select %p23, %s25, %s16
    %p27 = scmp.ge.s32.totalorder %s26, 2
    %s28 = scalar_select %p27, 0, %s26
    %s29 = ssub.s32 %s16, %s28
    %s30 = ssub.s32 %s17, %s24
    %s31 = sor.u32 %s29, %s30
    %p32 = scmp.eq.s32.totalorder %s31, 0
    %s34 = sadd.s32 %s33, 1
    %s35 = scalar_select %p32, %s33, %s34
    %p38 = pneg %p32
    %p39 = scmp.eq.s32.totalorder %s9, 1
    %p40 = por %p38, %p39
    %p41 = scmp.ne.s32.totalorder %s33, %s36
    %p42 = scmp.eq.s32.totalorder %s9, 0
    %p43 = por %p41, %p42
    %p44 = scmp.ne.s32.totalorder %s33, %s36
    %p45 = scmp.eq.s32.totalorder %s14, 1
    %p46 = por %p44, %p45
    %p47 = scmp.ne.s32.totalorder %s36, %s37
    %p48 = scmp.eq.s32.totalorder %s14, 0
    %p49 = por %p47, %p48
    %p50 = scmp.ne.s32.totalorder %s36, %s37
    %p51 = scmp.eq.s32.totalorder %s15, 1
    %p52 = por %p50, %p51
    %p54 = scmp.ne.s32.totalorder %s37, %s53
    %p55 = scmp.eq.s32.totalorder %s15, 0
    %p56 = por %p54, %p55
    %s58 = sadd.s32 %s57, 1
    %p61 = scmp.eq.s32.totalorder %s9, 1
    %p62 = scmp.ne.s32.totalorder %s57, %s59
    %p63 = scmp.eq.s32.totalorder %s9, 0
    %p64 = por %p62, %p63
    %p65 = scmp.ne.s32.totalorder %s57, %s59
    %p66 = scmp.eq.s32.totalorder %s14, 1
    %p67 = por %p65, %p66
    %p68 = scmp.ne.s32.totalorder %s59, %s60
    %p69 = scmp.eq.s32.totalorder %s14, 0
    %p70 = por %p68, %p69
    %p71 = scmp.ne.s32.totalorder %s59, %s60
    %p72 = scmp.eq.s32.totalorder %s15, 1
    %p73 = por %p71, %p72
    %p75 = scmp.ne.s32.totalorder %s60, %s74
    %p76 = scmp.eq.s32.totalorder %s15, 0
    %p77 = por %p75, %p76
    %s79 = sadd.s32 %s78, 1
    %p82 = scmp.eq.s32.totalorder %s9, 1
    %p83 = scmp.ne.s32.totalorder %s78, %s80
    %p84 = scmp.eq.s32.totalorder %s9, 0
    %p85 = por %p83, %p84
    %p86 = scmp.ne.s32.totalorder %s78, %s80
    %p87 = scmp.eq.s32.totalorder %s14, 1
    %p88 = por %p86, %p87
    %p89 = scmp.ne.s32.totalorder %s80, %s81
    %p90 = scmp.eq.s32.totalorder %s14, 0
    %p91 = por %p89, %p90
    %p92 = scmp.ne.s32.totalorder %s80, %s81
    %p93 = scmp.eq.s32.totalorder %s15, 1
    %p94 = por %p92, %p93
    %p96 = scmp.ne.s32.totalorder %s81, %s95
    %p97 = scmp.eq.s32.totalorder %s15, 0
    %p98 = por %p96, %p97
    %s99 = ssub.s32 %s16, %s28
    %s100 = ssub.s32 %s17, %s24
    %s101 = sor.u32 %s99, %s100
    %p102 = scmp.eq.s32.totalorder %s101, 0
    %s104 = sadd.s32 %s103, 1
    %s105 = scalar_select %p102, %s103, %s104
    %p108 = pneg %p102
    %p109 = scmp.eq.s32.totalorder %s9, 1
    %p110 = por %p108, %p109
    %p111 = scmp.ne.s32.totalorder %s103, %s106
    %p112 = scmp.eq.s32.totalorder %s9, 0
    %p113 = por %p111, %p112
    %p114 = scmp.ne.s32.totalorder %s103, %s106
    %p115 = scmp.eq.s32.totalorder %s14, 1
    %p116 = por %p114, %p115
    %p117 = scmp.ne.s32.totalorder %s106, %s107
    %p118 = scmp.eq.s32.totalorder %s14, 0
    %p119 = por %p117, %p118
    %p120 = scmp.ne.s32.totalorder %s106, %s107
    %p121 = scmp.eq.s32.totalorder %s15, 1
    %p122 = por %p120, %p121
    %p124 = scmp.ne.s32.totalorder %s107, %s123
    %p125 = scmp.eq.s32.totalorder %s15, 0
    %p126 = por %p124, %p125
    %p127 = scmp.le.s32.totalorder 1, %s9
    %p128 = scmp.lt.s32.totalorder %s9, 3
    %p129 = pnand %p127, %p128
    %p130 = pneg %p129
    // Predicated region
    $region9: #{skip_arch_forward.3} parent=5 // pred_check
      _
    $region10: #{skip_arch_forward.3} parent=5 // pred_check_branch
      %132 = sbr.rel (%p129) target = $region12
    $region11: #{skip_arch_forward.3} parent=5 // pred_region
      %s133 = ssub.s32 %s9, 1
      // Predicated region
      $region13: #{skip_arch_forward.3} parent=11 // pred_check
        %p134 = pneg %p70
      $region14: #{skip_arch_forward.3} parent=11 // pred_check_branch
        %136 = sbr.rel (%p134) target = $region16
      $region15: #{skip_arch_forward.3} parent=11 // pred_region
        _
      $region16: #{skip_arch_forward.3} parent=11 // pred_fallthru
        _
      // Predicated region
      $region17: #{skip_arch_forward.3} parent=11 // pred_check
        %p137 = pneg %p91
      $region18: #{skip_arch_forward.3} parent=11 // pred_check_branch
        %139 = sbr.rel (%p137) target = $region20
      $region19: #{skip_arch_forward.3} parent=11 // pred_region
        _
      $region20: #{skip_arch_forward.3} parent=11 // pred_fallthru
        _
    $region12: #{skip_arch_forward.3} parent=5 // pred_fallthru
      _
    %p140 = scmp.lt.s32.totalorder %s9, 2
    // Predicated region
    $region21: #{skip_arch_forward.3} parent=5 // pred_check
      %p141 = pneg %p140
    $region22: #{skip_arch_forward.3} parent=5 // pred_check_branch
      %143 = sbr.rel (%p141) target = $region24
    $region23: #{skip_arch_forward.3} parent=5 // pred_region
      // Predicated region
      $region25: #{skip_arch_forward.3} parent=23 // pred_check
        %p144 = pneg %p43
      $region26: #{skip_arch_forward.3} parent=23 // pred_check_branch
        %146 = sbr.rel (%p144) target = $region28
      $region27: #{skip_arch_forward.3} parent=23 // pred_region
        %s147 = smul.u32 8, %s17
        %p148 = scmp.lt.s32.totalorder %s16, 1
        %s149 = scalar_select %p148, %s16, 1
        %p150 = scmp.lt.s32.totalorder %s147, 7
        %s151 = scalar_select %p150, %s147, 7
        %s152 = smul.addr %s149, 8
        %s153 = sadd.s32 %s151, %s152
        %s154 = smul.addr %s153, 4
        %s155 = scalar_lea.vmem %s0, %s154
        %s156 = smul.u32 8, %s17
      $region28: #{skip_arch_forward.3} parent=23 // pred_fallthru
        _
    $region24: #{skip_arch_forward.3} parent=5 // pred_fallthru
      _
    %p157 = scmp.le.s32.totalorder 1, %s9
    %p158 = scmp.lt.s32.totalorder %s9, 3
    %p159 = pnand %p157, %p158
    %p160 = pneg %p159
    // Predicated region
    $region29: #{skip_arch_forward.3} parent=5 // pred_check
      _
    $region30: #{skip_arch_forward.3} parent=5 // pred_check_branch
      %162 = sbr.rel (%p159) target = $region32
    $region31: #{skip_arch_forward.3} parent=5 // pred_region
      %s163 = ssub.s32 %s9, 1
      %s164 = smul.u32 8, %s19
      %p165 = scmp.lt.s32.totalorder %s18, 1
      %s166 = scalar_select %p165, %s18, 1
      %p167 = scmp.lt.s32.totalorder %s164, 7
      %s168 = scalar_select %p167, %s164, 7
      %s169 = smul.addr %s166, 8
      %s170 = sadd.s32 %s168, %s169
      %s171 = smul.addr %s170, 4
      %s172 = scalar_lea.vmem %s0, %s171
      %p173 = pneg %p49
      %p174 = pneg %p46
      %p175 = pneg %p70
      %p176 = pneg %p67
      %p177 = pneg %p91
      %p178 = pneg %p88
      %p179 = pneg %p119
      %p180 = pneg %p116
      %s181 = smul.u32 8, %s19
      %p182 = scmp.lt.s32.totalorder %s18, 1
      %s183 = scalar_select %p182, %s18, 1
      %p184 = scmp.lt.s32.totalorder %s181, 7
      %s185 = scalar_select %p184, %s181, 7
      %s186 = smul.addr %s183, 8
      %s187 = sadd.s32 %s185, %s186
      %s188 = smul.addr %s187, 4
      %s189 = scalar_lea.vmem %s3, %s188
      %s190 = smul.u32 8, %s19
      %p191 = scmp.lt.s32.totalorder %s18, 1
      %s192 = scalar_select %p191, %s18, 1
      %p193 = scmp.lt.s32.totalorder %s190, 7
      %s194 = scalar_select %p193, %s190, 7
      %s195 = smul.addr %s192, 8
      %s196 = sadd.s32 %s194, %s195
      %s197 = smul.addr %s196, 4
      %s198 = scalar_lea.vmem %s0, %s197
      %s199 = smul.u32 8, %s19
      %s200 = smul.u32 8, %s19
      %p201 = scmp.lt.s32.totalorder %s18, 1
      %s202 = scalar_select %p201, %s18, 1
      %p203 = scmp.lt.s32.totalorder %s200, 7
      %s204 = scalar_select %p203, %s200, 7
      %s205 = smul.addr %s202, 8
      %s206 = sadd.s32 %s204, %s205
      %s207 = smul.addr %s206, 4
      %s208 = scalar_lea.vmem %s3, %s207
      %s209 = smul.u32 8, %s19
      %v211 = vld [vmem:[%s198] sm:$0xf]
      %v212 = vld [vmem:[%s198 + $0x4] sm:$0xf]
      %v213 = vld [vmem:[%s198 + $0x8] sm:$0xf]
      %v214 = vld [vmem:[%s198 + $0xc] sm:$0xf]
      %v215 = vld [vmem:[%s198 + $0x10] sm:$0xf]
      %v216 = vld [vmem:[%s198 + $0x14] sm:$0xf]
      %v217 = vld [vmem:[%s198 + $0x18] sm:$0xf]
      %v218 = vld [vmem:[%s198 + $0x1c] sm:$0xf]
      %v219 = vld [vmem:[%s1] sm:$0xf]
      %v220 = vld [vmem:[%s1 + $0x4] sm:$0xf]
      %v221 = vld [vmem:[%s1 + $0x8] sm:$0xf]
      %v222 = vld [vmem:[%s1 + $0xc] sm:$0xf]
      %v223 = vld [vmem:[%s1 + $0x10] sm:$0xf]
      %v224 = vld [vmem:[%s1 + $0x14] sm:$0xf]
      %v225 = vld [vmem:[%s1 + $0x18] sm:$0xf]
      %v226 = vld [vmem:[%s1 + $0x1c] sm:$0xf]
      %v227 = vld [vmem:[%s1 + $0x20] sm:$0xf]
      %v228 = vld [vmem:[%s1 + $0x24] sm:$0xf]
      %v229 = vld [vmem:[%s1 + $0x28] sm:$0xf]
      %v230 = vld [vmem:[%s1 + $0x2c] sm:$0xf]
      %v231 = vld [vmem:[%s1 + $0x30] sm:$0xf]
      %v232 = vld [vmem:[%s1 + $0x34] sm:$0xf]
      %v233 = vld [vmem:[%s1 + $0x38] sm:$0xf]
      %v234 = vld [vmem:[%s1 + $0x3c] sm:$0xf]
      %v235 = vld [vmem:[%s2] sm:$0x1]
      %v237 = vlaneseq
      %v238 = vshrl.u32 %v237, 7
      %v239 = vsub.s32 0, %v238
      %v240 = vrot.slane %v235, %v239
      %v250 = vunpack.c.l.b16 %v211
      %v251 = vunpack.c.l.b16 %v212
      %v252 = vunpack.c.l.b16 %v213
      %v253 = vunpack.c.l.b16 %v214
      %v254 = vunpack.c.l.b16 %v215
      %v255 = vunpack.c.l.b16 %v216
      %v256 = vunpack.c.l.b16 %v217
      %v257 = vunpack.c.l.b16 %v218
      %v258 = vpack.c.b16 %v251, %v250
      %v259 = vpack.c.b16 %v253, %v252
      %v260 = vpack.c.b16 %v255, %v254
      %v261 = vpack.c.b16 %v257, %v256
      %v282 = vunpack.c.l.b16 %v219
      %v283 = vunpack.c.l.b16 %v220
      %v284 = vunpack.c.l.b16 %v221
      %v285 = vunpack.c.l.b16 %v222
      %v286 = vunpack.c.l.b16 %v223
      %v287 = vunpack.c.l.b16 %v224
      %v288 = vunpack.c.l.b16 %v225
      %v289 = vunpack.c.l.b16 %v226
      %v290 = vunpack.c.l.b16 %v227
      %v291 = vunpack.c.l.b16 %v228
      %v292 = vunpack.c.l.b16 %v229
      %v293 = vunpack.c.l.b16 %v230
      %v294 = vunpack.c.l.b16 %v231
      %v295 = vunpack.c.l.b16 %v232
      %v296 = vunpack.c.l.b16 %v233
      %v297 = vunpack.c.l.b16 %v234
      %v298 = vpack.c.b16 %v283, %v282
      %v299 = vpack.c.b16 %v285, %v284
      %v300 = vpack.c.b16 %v287, %v286
      %v301 = vpack.c.b16 %v289, %v288
      %v302 = vpack.c.b16 %v291, %v290
      %v303 = vpack.c.b16 %v293, %v292
      %v304 = vpack.c.b16 %v295, %v294
      %v305 = vpack.c.b16 %v297, %v296
      %314 = vmatprep.subr.bf16.mxu0 0
      %315 = vmatpush1.bf16.msra.mxu0 %v298
      %316 = vmatprep.subr.bf16.mxu0 0
      %317 = vmatpush1.bf16.msra.mxu0 %v299
      %318 = vmatprep.subr.bf16.mxu0 0
      %319 = vmatpush1.bf16.msra.mxu0 %v300
      %320 = vmatprep.subr.bf16.mxu0 0
      %321 = vmatpush1.bf16.msra.mxu0 %v301
      %322 = vmatprep.subr.bf16.mxu0 0
      %323 = vmatpush1.bf16.msra.mxu0 %v302
      %324 = vmatprep.subr.bf16.mxu0 0
      %325 = vmatpush1.bf16.msra.mxu0 %v303
      %326 = vmatprep.subr.bf16.mxu0 0
      %327 = vmatpush1.bf16.msra.mxu0 %v304
      %328 = vmatprep.subr.bf16.mxu0 0
      %329 = vmatpush1.bf16.msra.mxu0 %v305
      %330 = vmatprep.subr.bf16.mxu0 0
      %331 = vmatpush1.bf16.msra.mxu0 0
      %332 = vmatprep.subr.bf16.mxu0 0
      %333 = vmatpush1.bf16.msra.mxu0 0
      %334 = vmatprep.subr.bf16.mxu0 0
      %335 = vmatpush1.bf16.msra.mxu0 0
      %336 = vmatprep.subr.bf16.mxu0 0
      %337 = vmatpush1.bf16.msra.mxu0 0
      %338 = vmatprep.subr.bf16.mxu0 0
      %339 = vmatpush1.bf16.msra.mxu0 0
      %340 = vmatprep.subr.bf16.mxu0 0
      %341 = vmatpush1.bf16.msra.mxu0 0
      %342 = vmatprep.subr.bf16.mxu0 0
      %343 = vmatpush1.bf16.msra.mxu0 0
      %344 = vmatprep.subr.bf16.mxu0 0
      %345 = vmatpush1.bf16.msra.mxu0 0
      %346 = vmatprep.mubr.bf16.mxu0 0
      %347 = vmatmul.mubr.bf16.gmra.mrb[0].mxu0 %v258
      %v348 = vpop.f32.mrb[0].mxu0
      %v349 = vadd.f32 %v240, %v348
      %v350 = vpop.f32.mrb[0].mxu0
      %v351 = vpop.f32.mrb[0].mxu0
      %v352 = vadd.f32 %v240, %v351
      %v353 = vpop.f32.mrb[0].mxu0
      %354 = vmatprep.mubr.bf16.mxu0 0
      %355 = vmatmul.mubr.bf16.gmra.mrb[0].mxu0 %v259
      %v356 = vpop.f32.mrb[0].mxu0
      %v357 = vadd.f32 %v240, %v356
      %v358 = vpop.f32.mrb[0].mxu0
      %v359 = vpop.f32.mrb[0].mxu0
      %v360 = vadd.f32 %v240, %v359
      %v361 = vpop.f32.mrb[0].mxu0
      %362 = vmatprep.mubr.bf16.mxu0 0
      %363 = vmatmul.mubr.bf16.gmra.mrb[0].mxu0 %v260
      %v364 = vpop.f32.mrb[0].mxu0
      %v365 = vadd.f32 %v240, %v364
      %v366 = vpop.f32.mrb[0].mxu0
      %v367 = vpop.f32.mrb[0].mxu0
      %v368 = vadd.f32 %v240, %v367
      %v369 = vpop.f32.mrb[0].mxu0
      %370 = vmatprep.mubr.bf16.mxu0 0
      %371 = vmatmul.mubr.bf16.gmra.mrb[0].mxu0 %v261
      %v372 = vpop.f32.mrb[0].mxu0
      %v373 = vadd.f32 %v240, %v372
      %v374 = vpop.f32.mrb[0].mxu0
      %v375 = vpop.f32.mrb[0].mxu0
      %v376 = vadd.f32 %v240, %v375
      %v377 = vpop.f32.mrb[0].mxu0
      %378 = vdwg.mxu0
      %v379 = vmax.f32 %v349, 0.0
      %v380 = vmax.f32 %v352, 0.0
      %v381 = vmax.f32 %v357, 0.0
      %v382 = vmax.f32 %v360, 0.0
      %v383 = vmax.f32 %v365, 0.0
      %v384 = vmax.f32 %v368, 0.0
      %v385 = vmax.f32 %v373, 0.0
      %v386 = vmax.f32 %v376, 0.0
      %v387 = vpack.c.bf16 %v380, %v379
      %v388 = vpack.c.bf16 %v382, %v381
      %v389 = vpack.c.bf16 %v384, %v383
      %v390 = vpack.c.bf16 %v386, %v385
      %v395 = vunpack.c.l.b16 %v387
      %v396 = vunpack.c.h.b16 %v387
      %v397 = vunpack.c.l.b16 %v388
      %v398 = vunpack.c.h.b16 %v388
      %v399 = vunpack.c.l.b16 %v389
      %v400 = vunpack.c.h.b16 %v389
      %v401 = vunpack.c.l.b16 %v390
      %v402 = vunpack.c.h.b16 %v390
      %v403 = vpack.c.b16 %v395, %v395
      %v404 = vpack.c.b16 %v396, %v396
      %v405 = vpack.c.b16 %v397, %v397
      %v406 = vpack.c.b16 %v398, %v398
      %v407 = vpack.c.b16 %v399, %v399
      %v408 = vpack.c.b16 %v400, %v400
      %v409 = vpack.c.b16 %v401, %v401
      %v410 = vpack.c.b16 %v402, %v402
      %419 = vst [vmem:[%s208] sm:$0xf] %v403
      %420 = vst [vmem:[%s208 + $0x4] sm:$0xf] %v404
      %421 = vst [vmem:[%s208 + $0x8] sm:$0xf] %v405
      %422 = vst [vmem:[%s208 + $0xc] sm:$0xf] %v406
      %423 = vst [vmem:[%s208 + $0x10] sm:$0xf] %v407
      %424 = vst [vmem:[%s208 + $0x14] sm:$0xf] %v408
      %425 = vst [vmem:[%s208 + $0x18] sm:$0xf] %v409
      %426 = vst [vmem:[%s208 + $0x1c] sm:$0xf] %v410
      %s427 = smul.u32 8, %s19
      %p428 = scmp.lt.s32.totalorder %s18, 1
      %s429 = scalar_select %p428, %s18, 1
      %p430 = scmp.lt.s32.totalorder %s427, 7
      %s431 = scalar_select %p430, %s427, 7
      %s432 = smul.addr %s429, 8
      %s433 = sadd.s32 %s431, %s432
      %s434 = smul.addr %s433, 4
      %s435 = scalar_lea.vmem %s3, %s434
      // Predicated region
      $region33: #{skip_arch_forward.3} parent=31 // pred_check
        %p436 = pneg %p116
      $region34: #{skip_arch_forward.3} parent=31 // pred_check_branch
        %438 = sbr.rel (%p436) target = $region36
      $region35: #{skip_arch_forward.3} parent=31 // pred_region
        %s439 = smul.u32 8, %s19
      $region36: #{skip_arch_forward.3} parent=31 // pred_fallthru
        _
    $region32: #{skip_arch_forward.3} parent=5 // pred_fallthru
      _
    %p440 = scmp.le.s32.totalorder 2, %s9
    // Predicated region
    $region37: #{skip_arch_forward.3} parent=5 // pred_check
      %p441 = pneg %p440
    $region38: #{skip_arch_forward.3} parent=5 // pred_check_branch
      %443 = sbr.rel (%p441) target = $region40
    $region39: #{skip_arch_forward.3} parent=5 // pred_region
      %s444 = ssub.s32 %s9, 2
      // Predicated region
      $region41: #{skip_arch_forward.3} parent=39 // pred_check
        %p445 = pneg %p122
      $region42: #{skip_arch_forward.3} parent=39 // pred_check_branch
        %447 = sbr.rel (%p445) target = $region44
      $region43: #{skip_arch_forward.3} parent=39 // pred_region
        %s448 = smul.u32 8, %s21
        %p449 = scmp.lt.s32.totalorder %s20, 1
        %s450 = scalar_select %p449, %s20, 1
        %p451 = scmp.lt.s32.totalorder %s448, 7
        %s452 = scalar_select %p451, %s448, 7
        %s453 = smul.addr %s450, 8
        %s454 = sadd.s32 %s452, %s453
        %s455 = smul.addr %s454, 4
        %s456 = scalar_lea.vmem %s3, %s455
      $region44: #{skip_arch_forward.3} parent=39 // pred_fallthru
        _
    $region40: #{skip_arch_forward.3} parent=5 // pred_fallthru
      _
  $region6: #{skip_arch_forward.3} parent=0 // loop_footer
    %s13 = sadd.s32 1, %s9
  $region7: #{skip_arch_forward.3} parent=0 // loop_footer_branch
    %8 = sbr.rel target = $region3
  $region8: #{skip_arch_forward.3} parent=0 // loop_exit
    _

// kernel: skip_arch_forward.4
$region0: #{skip_arch_forward.4}
  #allocation0 [shape = 'u32[]', space=smem, size = 0x4, offset = 0x4, fixed_abs, tag = 'smem constant byte address 0x4 - core index']
  #allocation1 [shape = 'u32[144,128]{1,0:T(1,128)}', space=vmem, size = 0x12000, scoped, tag = 'internal scratch']
  %s0 = inlined_call_operand.vmem [shape: bf16[2,16,128], index: 0, kind: input, shape index: {}]
  %s1 = inlined_call_operand.vmem [shape: bf16[128,128], index: 1, kind: input, shape index: {}]
  %s2 = inlined_call_operand.vmem [shape: f32[1,128], index: 2, kind: input, shape index: {}]
  %s3 = inlined_call_operand.vmem [shape: bf16[2,16,128], index: 3, kind: output, shape index: {}]
  %s4 = sld [smem:[#allocation0]]
  $region45: #{skip_arch_forward.4} parent=0
    _
  %s6 = ssub.s32 1, %s4
  %s7 = scalar_select 0, %s6, %s4
  loop: start=0, step=1, limit=4
  $region2: #{skip_arch_forward.4} parent=0 // loop_pre_header
    _
  $region3: #{skip_arch_forward.4} parent=0 // loop_header
    %s9 = sphi 0, %s13
    %p10 = scmp.ge.s32.totalorder %s9, 4
    %s16 = sphi 0, %s28
    %s17 = sphi 0, %s24
    %s18 = sphi 0, %s16
    %s19 = sphi 0, %s17
    %s20 = sphi 0, %s18
    %s21 = sphi 0, %s19
    %s33 = sphi 0, %s35
    %s36 = sphi 0, %s33
    %s37 = sphi 0, %s36
    %s53 = sphi 0, %s37
    %s57 = sphi 0, %s57
    %s59 = sphi 0, %s57
    %s60 = sphi 0, %s59
    %s74 = sphi 0, %s60
    %s78 = sphi 0, %s78
    %s80 = sphi 0, %s78
    %s81 = sphi 0, %s80
    %s95 = sphi 0, %s81
    %s103 = sphi 0, %s105
    %s106 = sphi 0, %s103
    %s107 = sphi 0, %s106
    %s123 = sphi 0, %s107
  $region4: #{skip_arch_forward.4} parent=0 // loop_header_branch
    %12 = sbr.rel (%p10) target = $region8
  $region5: #{skip_arch_forward.4} parent=0 // loop_body
    %s14 = ssub.s32 %s9, 1
    %s15 = ssub.s32 %s9, 2
    %s22 = sadd.s32 1, %s17
    %p23 = scmp.ge.s32.totalorder %s22, 1
    %s24 = scalar_select %p23, 0, %s22
    %s25 = sadd.s32 1, %s16
    %s26 = scalar_select %p23, %s25, %s16
    %p27 = scmp.ge.s32.totalorder %s26, 2
    %s28 = scalar_select %p27, 0, %s26
    %s29 = ssub.s32 %s16, %s28
    %s30 = ssub.s32 %s17, %s24
    %s31 = sor.u32 %s29, %s30
    %p32 = scmp.eq.s32.totalorder %s31, 0
    %s34 = sadd.s32 %s33, 1
    %s35 = scalar_select %p32, %s33, %s34
    %p38 = pneg %p32
    %p39 = scmp.eq.s32.totalorder %s9, 1
    %p40 = por %p38, %p39
    %p41 = scmp.ne.s32.totalorder %s33, %s36
    %p42 = scmp.eq.s32.totalorder %s9, 0
    %p43 = por %p41, %p42
    %p44 = scmp.ne.s32.totalorder %s33, %s36
    %p45 = scmp.eq.s32.totalorder %s14, 1
    %p46 = por %p44, %p45
    %p47 = scmp.ne.s32.totalorder %s36, %s37
    %p48 = scmp.eq.s32.totalorder %s14, 0
    %p49 = por %p47, %p48
    %p50 = scmp.ne.s32.totalorder %s36, %s37
    %p51 = scmp.eq.s32.totalorder %s15, 1
    %p52 = por %p50, %p51
    %p54 = scmp.ne.s32.totalorder %s37, %s53
    %p55 = scmp.eq.s32.totalorder %s15, 0
    %p56 = por %p54, %p55
    %s58 = sadd.s32 %s57, 1
    %p61 = scmp.eq.s32.totalorder %s9, 1
    %p62 = scmp.ne.s32.totalorder %s57, %s59
    %p63 = scmp.eq.s32.totalorder %s9, 0
    %p64 = por %p62, %p63
    %p65 = scmp.ne.s32.totalorder %s57, %s59
    %p66 = scmp.eq.s32.totalorder %s14, 1
    %p67 = por %p65, %p66
    %p68 = scmp.ne.s32.totalorder %s59, %s60
    %p69 = scmp.eq.s32.totalorder %s14, 0
    %p70 = por %p68, %p69
    %p71 = scmp.ne.s32.totalorder %s59, %s60
    %p72 = scmp.eq.s32.totalorder %s15, 1
    %p73 = por %p71, %p72
    %p75 = scmp.ne.s32.totalorder %s60, %s74
    %p76 = scmp.eq.s32.totalorder %s15, 0
    %p77 = por %p75, %p76
    %s79 = sadd.s32 %s78, 1
    %p82 = scmp.eq.s32.totalorder %s9, 1
    %p83 = scmp.ne.s32.totalorder %s78, %s80
    %p84 = scmp.eq.s32.totalorder %s9, 0
    %p85 = por %p83, %p84
    %p86 = scmp.ne.s32.totalorder %s78, %s80
    %p87 = scmp.eq.s32.totalorder %s14, 1
    %p88 = por %p86, %p87
    %p89 = scmp.ne.s32.totalorder %s80, %s81
    %p90 = scmp.eq.s32.totalorder %s14, 0
    %p91 = por %p89, %p90
    %p92 = scmp.ne.s32.totalorder %s80, %s81
    %p93 = scmp.eq.s32.totalorder %s15, 1
    %p94 = por %p92, %p93
    %p96 = scmp.ne.s32.totalorder %s81, %s95
    %p97 = scmp.eq.s32.totalorder %s15, 0
    %p98 = por %p96, %p97
    %s99 = ssub.s32 %s16, %s28
    %s100 = ssub.s32 %s17, %s24
    %s101 = sor.u32 %s99, %s100
    %p102 = scmp.eq.s32.totalorder %s101, 0
    %s104 = sadd.s32 %s103, 1
    %s105 = scalar_select %p102, %s103, %s104
    %p108 = pneg %p102
    %p109 = scmp.eq.s32.totalorder %s9, 1
    %p110 = por %p108, %p109
    %p111 = scmp.ne.s32.totalorder %s103, %s106
    %p112 = scmp.eq.s32.totalorder %s9, 0
    %p113 = por %p111, %p112
    %p114 = scmp.ne.s32.totalorder %s103, %s106
    %p115 = scmp.eq.s32.totalorder %s14, 1
    %p116 = por %p114, %p115
    %p117 = scmp.ne.s32.totalorder %s106, %s107
    %p118 = scmp.eq.s32.totalorder %s14, 0
    %p119 = por %p117, %p118
    %p120 = scmp.ne.s32.totalorder %s106, %s107
    %p121 = scmp.eq.s32.totalorder %s15, 1
    %p122 = por %p120, %p121
    %p124 = scmp.ne.s32.totalorder %s107, %s123
    %p125 = scmp.eq.s32.totalorder %s15, 0
    %p126 = por %p124, %p125
    %p127 = scmp.le.s32.totalorder 1, %s9
    %p128 = scmp.lt.s32.totalorder %s9, 3
    %p129 = pnand %p127, %p128
    %p130 = pneg %p129
    // Predicated region
    $region9: #{skip_arch_forward.4} parent=5 // pred_check
      _
    $region10: #{skip_arch_forward.4} parent=5 // pred_check_branch
      %132 = sbr.rel (%p129) target = $region12
    $region11: #{skip_arch_forward.4} parent=5 // pred_region
      %s133 = ssub.s32 %s9, 1
      // Predicated region
      $region13: #{skip_arch_forward.4} parent=11 // pred_check
        %p134 = pneg %p70
      $region14: #{skip_arch_forward.4} parent=11 // pred_check_branch
        %136 = sbr.rel (%p134) target = $region16
      $region15: #{skip_arch_forward.4} parent=11 // pred_region
        _
      $region16: #{skip_arch_forward.4} parent=11 // pred_fallthru
        _
      // Predicated region
      $region17: #{skip_arch_forward.4} parent=11 // pred_check
        %p137 = pneg %p91
      $region18: #{skip_arch_forward.4} parent=11 // pred_check_branch
        %139 = sbr.rel (%p137) target = $region20
      $region19: #{skip_arch_forward.4} parent=11 // pred_region
        _
      $region20: #{skip_arch_forward.4} parent=11 // pred_fallthru
        _
    $region12: #{skip_arch_forward.4} parent=5 // pred_fallthru
      _
    %p140 = scmp.lt.s32.totalorder %s9, 2
    // Predicated region
    $region21: #{skip_arch_forward.4} parent=5 // pred_check
      %p141 = pneg %p140
    $region22: #{skip_arch_forward.4} parent=5 // pred_check_branch
      %143 = sbr.rel (%p141) target = $region24
    $region23: #{skip_arch_forward.4} parent=5 // pred_region
      // Predicated region
      $region25: #{skip_arch_forward.4} parent=23 // pred_check
        %p144 = pneg %p43
      $region26: #{skip_arch_forward.4} parent=23 // pred_check_branch
        %146 = sbr.rel (%p144) target = $region28
      $region27: #{skip_arch_forward.4} parent=23 // pred_region
        %s147 = smul.u32 2, %s17
        %p148 = scmp.lt.s32.totalorder %s16, 1
        %s149 = scalar_select %p148, %s16, 1
        %p150 = scmp.lt.s32.totalorder %s147, 1
        %s151 = scalar_select %p150, %s147, 1
        %s152 = smul.addr %s149, 2
        %s153 = sadd.s32 %s151, %s152
        %s154 = smul.addr %s153, 4
        %s155 = scalar_lea.vmem %s0, %s154
        %s156 = smul.u32 2, %s17
      $region28: #{skip_arch_forward.4} parent=23 // pred_fallthru
        _
    $region24: #{skip_arch_forward.4} parent=5 // pred_fallthru
      _
    %p157 = scmp.le.s32.totalorder 1, %s9
    %p158 = scmp.lt.s32.totalorder %s9, 3
    %p159 = pnand %p157, %p158
    %p160 = pneg %p159
    // Predicated region
    $region29: #{skip_arch_forward.4} parent=5 // pred_check
      _
    $region30: #{skip_arch_forward.4} parent=5 // pred_check_branch
      %162 = sbr.rel (%p159) target = $region32
    $region31: #{skip_arch_forward.4} parent=5 // pred_region
      %s163 = ssub.s32 %s9, 1
      %s164 = smul.u32 2, %s19
      %p165 = scmp.lt.s32.totalorder %s18, 1
      %s166 = scalar_select %p165, %s18, 1
      %p167 = scmp.lt.s32.totalorder %s164, 1
      %s168 = scalar_select %p167, %s164, 1
      %s169 = smul.addr %s166, 2
      %s170 = sadd.s32 %s168, %s169
      %s171 = smul.addr %s170, 4
      %s172 = scalar_lea.vmem %s0, %s171
      %p173 = pneg %p49
      %p174 = pneg %p46
      %p175 = pneg %p70
      %p176 = pneg %p67
      %p177 = pneg %p91
      %p178 = pneg %p88
      %p179 = pneg %p119
      %p180 = pneg %p116
      %s181 = smul.u32 2, %s19
      %p182 = scmp.lt.s32.totalorder %s18, 1
      %s183 = scalar_select %p182, %s18, 1
      %p184 = scmp.lt.s32.totalorder %s181, 1
      %s185 = scalar_select %p184, %s181, 1
      %s186 = smul.addr %s183, 2
      %s187 = sadd.s32 %s185, %s186
      %s188 = smul.addr %s187, 4
      %s189 = scalar_lea.vmem %s3, %s188
      %s190 = smul.u32 2, %s19
      %p191 = scmp.lt.s32.totalorder %s18, 1
      %s192 = scalar_select %p191, %s18, 1
      %p193 = scmp.lt.s32.totalorder %s190, 1
      %s194 = scalar_select %p193, %s190, 1
      %s195 = smul.addr %s192, 2
      %s196 = sadd.s32 %s194, %s195
      %s197 = smul.addr %s196, 4
      %s198 = scalar_lea.vmem %s0, %s197
      %s199 = smul.u32 2, %s19
      %s200 = smul.u32 2, %s19
      %p201 = scmp.lt.s32.totalorder %s18, 1
      %s202 = scalar_select %p201, %s18, 1
      %p203 = scmp.lt.s32.totalorder %s200, 1
      %s204 = scalar_select %p203, %s200, 1
      %s205 = smul.addr %s202, 2
      %s206 = sadd.s32 %s204, %s205
      %s207 = smul.addr %s206, 4
      %s208 = scalar_lea.vmem %s3, %s207
      %s209 = smul.u32 2, %s19
      %v211 = vld [vmem:[%s198] sm:$0xf]
      %v212 = vld [vmem:[%s198 + $0x4] sm:$0xf]
      %v213 = vld [vmem:[%s1] sm:$0xf]
      %v214 = vld [vmem:[%s1 + $0x4] sm:$0xf]
      %v215 = vld [vmem:[%s1 + $0x8] sm:$0xf]
      %v216 = vld [vmem:[%s1 + $0xc] sm:$0xf]
      %v217 = vld [vmem:[%s1 + $0x10] sm:$0xf]
      %v218 = vld [vmem:[%s1 + $0x14] sm:$0xf]
      %v219 = vld [vmem:[%s1 + $0x18] sm:$0xf]
      %v220 = vld [vmem:[%s1 + $0x1c] sm:$0xf]
      %v221 = vld [vmem:[%s1 + $0x20] sm:$0xf]
      %v222 = vld [vmem:[%s1 + $0x24] sm:$0xf]
      %v223 = vld [vmem:[%s1 + $0x28] sm:$0xf]
      %v224 = vld [vmem:[%s1 + $0x2c] sm:$0xf]
      %v225 = vld [vmem:[%s1 + $0x30] sm:$0xf]
      %v226 = vld [vmem:[%s1 + $0x34] sm:$0xf]
      %v227 = vld [vmem:[%s1 + $0x38] sm:$0xf]
      %v228 = vld [vmem:[%s1 + $0x3c] sm:$0xf]
      %v229 = vld [vmem:[%s2] sm:$0x1]
      %v231 = vlaneseq
      %v232 = vshrl.u32 %v231, 7
      %v233 = vsub.s32 0, %v232
      %v234 = vrot.slane %v229, %v233
      %v238 = vunpack.c.l.b16 %v211
      %v239 = vunpack.c.l.b16 %v212
      %v240 = vpack.c.b16 %v239, %v238
      %v258 = vunpack.c.l.b16 %v213
      %v259 = vunpack.c.l.b16 %v214
      %v260 = vunpack.c.l.b16 %v215
      %v261 = vunpack.c.l.b16 %v216
      %v262 = vunpack.c.l.b16 %v217
      %v263 = vunpack.c.l.b16 %v218
      %v264 = vunpack.c.l.b16 %v219
      %v265 = vunpack.c.l.b16 %v220
      %v266 = vunpack.c.l.b16 %v221
      %v267 = vunpack.c.l.b16 %v222
      %v268 = vunpack.c.l.b16 %v223
      %v269 = vunpack.c.l.b16 %v224
      %v270 = vunpack.c.l.b16 %v225
      %v271 = vunpack.c.l.b16 %v226
      %v272 = vunpack.c.l.b16 %v227
      %v273 = vunpack.c.l.b16 %v228
      %v274 = vpack.c.b16 %v259, %v258
      %v275 = vpack.c.b16 %v261, %v260
      %v276 = vpack.c.b16 %v263, %v262
      %v277 = vpack.c.b16 %v265, %v264
      %v278 = vpack.c.b16 %v267, %v266
      %v279 = vpack.c.b16 %v269, %v268
      %v280 = vpack.c.b16 %v271, %v270
      %v281 = vpack.c.b16 %v273, %v272
      %290 = vmatprep.subr.bf16.mxu0 0
      %291 = vmatpush1.bf16.msra.mxu0 %v274
      %292 = vmatprep.subr.bf16.mxu0 0
      %293 = vmatpush1.bf16.msra.mxu0 %v275
      %294 = vmatprep.subr.bf16.mxu0 0
      %295 = vmatpush1.bf16.msra.mxu0 %v276
      %296 = vmatprep.subr.bf16.mxu0 0
      %297 = vmatpush1.bf16.msra.mxu0 %v277
      %298 = vmatprep.subr.bf16.mxu0 0
      %299 = vmatpush1.bf16.msra.mxu0 %v278
      %300 = vmatprep.subr.bf16.mxu0 0
      %301 = vmatpush1.bf16.msra.mxu0 %v279
      %302 = vmatprep.subr.bf16.mxu0 0
      %303 = vmatpush1.bf16.msra.mxu0 %v280
      %304 = vmatprep.subr.bf16.mxu0 0
      %305 = vmatpush1.bf16.msra.mxu0 %v281
      %306 = vmatprep.subr.bf16.mxu0 0
      %307 = vmatpush1.bf16.msra.mxu0 0
      %308 = vmatprep.subr.bf16.mxu0 0
      %309 = vmatpush1.bf16.msra.mxu0 0
      %310 = vmatprep.subr.bf16.mxu0 0
      %311 = vmatpush1.bf16.msra.mxu0 0
      %312 = vmatprep.subr.bf16.mxu0 0
      %313 = vmatpush1.bf16.msra.mxu0 0
      %314 = vmatprep.subr.bf16.mxu0 0
      %315 = vmatpush1.bf16.msra.mxu0 0
      %316 = vmatprep.subr.bf16.mxu0 0
      %317 = vmatpush1.bf16.msra.mxu0 0
      %318 = vmatprep.subr.bf16.mxu0 0
      %319 = vmatpush1.bf16.msra.mxu0 0
      %320 = vmatprep.subr.bf16.mxu0 0
      %321 = vmatpush1.bf16.msra.mxu0 0
      %322 = vmatprep.mubr.bf16.mxu0 0
      %323 = vmatmul.mubr.bf16.gmra.mrb[0].mxu0 %v240
      %v324 = vpop.f32.mrb[0].mxu0
      %v325 = vadd.f32 %v234, %v324
      %v326 = vpop.f32.mrb[0].mxu0
      %v327 = vpop.f32.mrb[0].mxu0
      %v328 = vadd.f32 %v234, %v327
      %v329 = vpop.f32.mrb[0].mxu0
      %330 = vdwg.mxu0
      %v331 = vmax.f32 %v325, 0.0
      %v332 = vmax.f32 %v328, 0.0
      %v333 = vpack.c.bf16 %v332, %v331
      %v335 = vunpack.c.l.b16 %v333
      %v336 = vunpack.c.h.b16 %v333
      %v337 = vpack.c.b16 %v335, %v335
      %v338 = vpack.c.b16 %v336, %v336
      %341 = vst [vmem:[%s208] sm:$0xf] %v337
      %342 = vst [vmem:[%s208 + $0x4] sm:$0xf] %v338
      %s343 = smul.u32 2, %s19
      %p344 = scmp.lt.s32.totalorder %s18, 1
      %s345 = scalar_select %p344, %s18, 1
      %p346 = scmp.lt.s32.totalorder %s343, 1
      %s347 = scalar_select %p346, %s343, 1
      %s348 = smul.addr %s345, 2
      %s349 = sadd.s32 %s347, %s348
      %s350 = smul.addr %s349, 4
      %s351 = scalar_lea.vmem %s3, %s350
      // Predicated region
      $region33: #{skip_arch_forward.4} parent=31 // pred_check
        %p352 = pneg %p116
      $region34: #{skip_arch_forward.4} parent=31 // pred_check_branch
        %354 = sbr.rel (%p352) target = $region36
      $region35: #{skip_arch_forward.4} parent=31 // pred_region
        %s355 = smul.u32 2, %s19
      $region36: #{skip_arch_forward.4} parent=31 // pred_fallthru
        _
    $region32: #{skip_arch_forward.4} parent=5 // pred_fallthru
      _
    %p356 = scmp.le.s32.totalorder 2, %s9
    // Predicated region
    $region37: #{skip_arch_forward.4} parent=5 // pred_check
      %p357 = pneg %p356
    $region38: #{skip_arch_forward.4} parent=5 // pred_check_branch
      %359 = sbr.rel (%p357) target = $region40
    $region39: #{skip_arch_forward.4} parent=5 // pred_region
      %s360 = ssub.s32 %s9, 2
      // Predicated region
      $region41: #{skip_arch_forward.4} parent=39 // pred_check
        %p361 = pneg %p122
      $region42: #{skip_arch_forward.4} parent=39 // pred_check_branch
        %363 = sbr.rel (%p361) target = $region44
      $region43: #{skip_arch_forward.4} parent=39 // pred_region
        %s364 = smul.u32 2, %s21
        %p365 = scmp.lt.s32.totalorder %s20, 1
        %s366 = scalar_select %p365, %s20, 1
        %p367 = scmp.lt.s32.totalorder %s364, 1
        %s368 = scalar_select %p367, %s364, 1
        %s369 = smul.addr %s366, 2
        %s370 = sadd.s32 %s368, %s369
        %s371 = smul.addr %s370, 4
        %s372 = scalar_lea.vmem %s3, %s371
      $region44: #{skip_arch_forward.4} parent=39 // pred_fallthru
        _
    $region40: #{skip_arch_forward.4} parent=5 // pred_fallthru
      _
  $region6: #{skip_arch_forward.4} parent=0 // loop_footer
    %s13 = sadd.s32 1, %s9
  $region7: #{skip_arch_forward.4} parent=0 // loop_footer_branch
    %8 = sbr.rel target = $region3
  $region8: #{skip_arch_forward.4} parent=0 // loop_exit
    _

// kernel: skip_arch_forward.5
$region0: #{skip_arch_forward.5}
  #allocation0 [shape = 'u32[]', space=smem, size = 0x4, offset = 0x4, fixed_abs, tag = 'smem constant byte address 0x4 - core index']
  #allocation1 [shape = 'u32[144,128]{1,0:T(1,128)}', space=vmem, size = 0x12000, scoped, tag = 'internal scratch']
  #allocation2 [shape = 'f32[12,128]{1,0:T(8,128)}', space=vmem, size = 0x2000, scoped, tag = 'scratch operand']
  #allocation3 [shape = 'f32[20,128]{1,0:T(8,128)}', space=vmem, size = 0x3000, scoped, tag = 'scratch operand']
  #allocation4 [shape = 'f32[20,128]{1,0:T(8,128)}', space=vmem, size = 0x3000, scoped, tag = 'scratch operand']
  %s0 = inlined_call_operand.vmem [shape: bf16[2,16,128], index: 0, kind: input, shape index: {}, may-alias: {0,1}]
  %s1 = inlined_call_operand.vmem [shape: bf16[2,4,4,128], index: 1, kind: input, shape index: {}, may-alias: {0,1}]
  %s2 = inlined_call_operand.vmem [shape: bf16[2,64,128], index: 2, kind: input, shape index: {}, may-alias: {2,3,4,5}]
  %s3 = inlined_call_operand.vmem [shape: bf16[2,16,4,128], index: 3, kind: input, shape index: {}, may-alias: {2,3,4,5}]
  %s4 = inlined_call_operand.vmem [shape: bf16[2,64,128], index: 4, kind: input, shape index: {}, may-alias: {2,3,4,5}]
  %s5 = inlined_call_operand.vmem [shape: bf16[2,16,4,128], index: 5, kind: input, shape index: {}, may-alias: {2,3,4,5}]
  %s6 = inlined_call_operand.vmem [shape: bf16[128,128], index: 6, kind: input, shape index: {}]
  %s7 = inlined_call_operand.vmem [shape: f32[1,128], index: 7, kind: input, shape index: {}]
  %s8 = inlined_call_operand.vmem [shape: bf16[128,128], index: 8, kind: input, shape index: {}]
  %s9 = inlined_call_operand.vmem [shape: f32[1,128], index: 9, kind: input, shape index: {}]
  %s10 = inlined_call_operand.vmem [shape: f32[2,16,4,4,4], index: 10, kind: output, shape index: {}]
  %s11 = sld [smem:[#allocation0]]
  $region73: #{skip_arch_forward.5} parent=0
    _
  %s13 = ssub.s32 1, %s11
  %s14 = scalar_select 0, %s13, %s11
  loop: start=0, step=1, limit=6
  $region2: #{skip_arch_forward.5} parent=0 // loop_pre_header
    _
  $region3: #{skip_arch_forward.5} parent=0 // loop_header
    %s16 = sphi 0, %s20
    %p17 = scmp.ge.s32.totalorder %s16, 6
    %s23 = sphi 0, %s35
    %s24 = sphi 0, %s31
    %s25 = sphi 0, %s23
    %s26 = sphi 0, %s24
    %s27 = sphi 0, %s25
    %s28 = sphi 0, %s26
    %s40 = sphi 0, %s42
    %s43 = sphi 0, %s40
    %s44 = sphi 0, %s43
    %s60 = sphi 0, %s44
    %s76 = sphi 0, %s78
    %s79 = sphi 0, %s76
    %s80 = sphi 0, %s79
    %s96 = sphi 0, %s80
    %s104 = sphi 0, %s106
    %s107 = sphi 0, %s104
    %s108 = sphi 0, %s107
    %s124 = sphi 0, %s108
    %s140 = sphi 0, %s142
    %s143 = sphi 0, %s140
    %s144 = sphi 0, %s143
    %s160 = sphi 0, %s144
    %s170 = sphi 0, %s172
    %s173 = sphi 0, %s170
    %s174 = sphi 0, %s173
    %s190 = sphi 0, %s174
    %s208 = sphi 0, %s210
    %s211 = sphi 0, %s208
    %s212 = sphi 0, %s211
    %s228 = sphi 0, %s212
    %s232 = sphi 0, %s232
    %s234 = sphi 0, %s232
    %s235 = sphi 0, %s234
    %s249 = sphi 0, %s235
    %s253 = sphi 0, %s253
    %s255 = sphi 0, %s253
    %s256 = sphi 0, %s255
    %s270 = sphi 0, %s256
    %s274 = sphi 0, %s274
    %s276 = sphi 0, %s274
    %s277 = sphi 0, %s276
    %s291 = sphi 0, %s277
    %s295 = sphi 0, %s295
    %s297 = sphi 0, %s295
    %s298 = sphi 0, %s297
    %s312 = sphi 0, %s298
    %s320 = sphi 0, %s322
    %s323 = sphi 0, %s320
    %s324 = sphi 0, %s323
    %s340 = sphi 0, %s324
  $region4: #{skip_arch_forward.5} parent=0 // loop_header_branch
    %19 = sbr.rel (%p17) target = $region8
  $region5: #{skip_arch_forward.5} parent=0 // loop_body
    %s21 = ssub.s32 %s16, 1
    %s22 = ssub.s32 %s16, 2
    %s29 = sadd.s32 1, %s24
    %p30 = scmp.ge.s32.totalorder %s29, 2
    %s31 = scalar_select %p30, 0, %s29
    %s32 = sadd.s32 1, %s23
    %s33 = scalar_select %p30, %s32, %s23
    %p34 = scmp.ge.s32.totalorder %s33, 2
    %s35 = scalar_select %p34, 0, %s33
    %s36 = ssub.s32 %s23, %s35
    %s37 = ssub.s32 %s24, %s31
    %s38 = sor.u32 %s36, %s37
    %p39 = scmp.eq.s32.totalorder %s38, 0
    %s41 = sadd.s32 %s40, 1
    %s42 = scalar_select %p39, %s40, %s41
    %p45 = pneg %p39
    %p46 = scmp.eq.s32.totalorder %s16, 3
    %p47 = por %p45, %p46
    %p48 = scmp.ne.s32.totalorder %s40, %s43
    %p49 = scmp.eq.s32.totalorder %s16, 0
    %p50 = por %p48, %p49
    %p51 = scmp.ne.s32.totalorder %s40, %s43
    %p52 = scmp.eq.s32.totalorder %s21, 3
    %p53 = por %p51, %p52
    %p54 = scmp.ne.s32.totalorder %s43, %s44
    %p55 = scmp.eq.s32.totalorder %s21, 0
    %p56 = por %p54, %p55
    %p57 = scmp.ne.s32.totalorder %s43, %s44
    %p58 = scmp.eq.s32.totalorder %s22, 3
    %p59 = por %p57, %p58
    %p61 = scmp.ne.s32.totalorder %s44, %s60
    %p62 = scmp.eq.s32.totalorder %s22, 0
    %p63 = por %p61, %p62
    %s64 = sadd.s32 %s24, 1
    %s65 = smul.u32 %s64, 2
    %p66 = scmp.lt.s32.totalorder %s65, 3
    %s67 = scalar_select %p66, %s65, 3
    %s68 = sadd.s32 %s31, 1
    %s69 = smul.u32 %s68, 2
    %p70 = scmp.lt.s32.totalorder %s69, 3
    %s71 = scalar_select %p70, %s69, 3
    %s72 = ssub.s32 %s23, %s35
    %s73 = ssub.s32 %s67, %s71
    %s74 = sor.u32 %s72, %s73
    %p75 = scmp.eq.s32.totalorder %s74, 0
    %s77 = sadd.s32 %s76, 1
    %s78 = scalar_select %p75, %s76, %s77
    %p81 = pneg %p75
    %p82 = scmp.eq.s32.totalorder %s16, 3
    %p83 = por %p81, %p82
    %p84 = scmp.ne.s32.totalorder %s76, %s79
    %p85 = scmp.eq.s32.totalorder %s16, 0
    %p86 = por %p84, %p85
    %p87 = scmp.ne.s32.totalorder %s76, %s79
    %p88 = scmp.eq.s32.totalorder %s21, 3
    %p89 = por %p87, %p88
    %p90 = scmp.ne.s32.totalorder %s79, %s80
    %p91 = scmp.eq.s32.totalorder %s21, 0
    %p92 = por %p90, %p91
    %p93 = scmp.ne.s32.totalorder %s79, %s80
    %p94 = scmp.eq.s32.totalorder %s22, 3
    %p95 = por %p93, %p94
    %p97 = scmp.ne.s32.totalorder %s80, %s96
    %p98 = scmp.eq.s32.totalorder %s22, 0
    %p99 = por %p97, %p98
    %s100 = ssub.s32 %s23, %s35
    %s101 = ssub.s32 %s24, %s31
    %s102 = sor.u32 %s100, %s101
    %p103 = scmp.eq.s32.totalorder %s102, 0
    %s105 = sadd.s32 %s104, 1
    %s106 = scalar_select %p103, %s104, %s105
    %p109 = pneg %p103
    %p110 = scmp.eq.s32.totalorder %s16, 3
    %p111 = por %p109, %p110
    %p112 = scmp.ne.s32.totalorder %s104, %s107
    %p113 = scmp.eq.s32.totalorder %s16, 0
    %p114 = por %p112, %p113
    %p115 = scmp.ne.s32.totalorder %s104, %s107
    %p116 = scmp.eq.s32.totalorder %s21, 3
    %p117 = por %p115, %p116
    %p118 = scmp.ne.s32.totalorder %s107, %s108
    %p119 = scmp.eq.s32.totalorder %s21, 0
    %p120 = por %p118, %p119
    %p121 = scmp.ne.s32.totalorder %s107, %s108
    %p122 = scmp.eq.s32.totalorder %s22, 3
    %p123 = por %p121, %p122
    %p125 = scmp.ne.s32.totalorder %s108, %s124
    %p126 = scmp.eq.s32.totalorder %s22, 0
    %p127 = por %p125, %p126
    %s128 = sadd.s32 %s24, 1
    %s129 = smul.u32 %s128, 4
    %p130 = scmp.lt.s32.totalorder %s129, 7
    %s131 = scalar_select %p130, %s129, 7
    %s132 = sadd.s32 %s31, 1
    %s133 = smul.u32 %s132, 4
    %p134 = scmp.lt.s32.totalorder %s133, 7
    %s135 = scalar_select %p134, %s133, 7
    %s136 = ssub.s32 %s23, %s35
    %s137 = ssub.s32 %s131, %s135
    %s138 = sor.u32 %s136, %s137
    %p139 = scmp.eq.s32.totalorder %s138, 0
    %s141 = sadd.s32 %s140, 1
    %s142 = scalar_select %p139, %s140, %s141
    %p145 = pneg %p139
    %p146 = scmp.eq.s32.totalorder %s16, 3
    %p147 = por %p145, %p146
    %p148 = scmp.ne.s32.totalorder %s140, %s143
    %p149 = scmp.eq.s32.totalorder %s16, 0
    %p150 = por %p148, %p149
    %p151 = scmp.ne.s32.totalorder %s140, %s143
    %p152 = scmp.eq.s32.totalorder %s21, 3
    %p153 = por %p151, %p152
    %p154 = scmp.ne.s32.totalorder %s143, %s144
    %p155 = scmp.eq.s32.totalorder %s21, 0
    %p156 = por %p154, %p155
    %p157 = scmp.ne.s32.totalorder %s143, %s144
    %p158 = scmp.eq.s32.totalorder %s22, 3
    %p159 = por %p157, %p158
    %p161 = scmp.ne.s32.totalorder %s144, %s160
    %p162 = scmp.eq.s32.totalorder %s22, 0
    %p163 = por %p161, %p162
    %s164 = sadd.s32 %s24, 2
    %s165 = sadd.s32 %s31, 2
    %s166 = ssub.s32 %s23, %s35
    %s167 = ssub.s32 %s164, %s165
    %s168 = sor.u32 %s166, %s167
    %p169 = scmp.eq.s32.totalorder %s168, 0
    %s171 = sadd.s32 %s170, 1
    %s172 = scalar_select %p169, %s170, %s171
    %p175 = pneg %p169
    %p176 = scmp.eq.s32.totalorder %s16, 3
    %p177 = por %p175, %p176
    %p178 = scmp.ne.s32.totalorder %s170, %s173
    %p179 = scmp.eq.s32.totalorder %s16, 0
    %p180 = por %p178, %p179
    %p181 = scmp.ne.s32.totalorder %s170, %s173
    %p182 = scmp.eq.s32.totalorder %s21, 3
    %p183 = por %p181, %p182
    %p184 = scmp.ne.s32.totalorder %s173, %s174
    %p185 = scmp.eq.s32.totalorder %s21, 0
    %p186 = por %p184, %p185
    %p187 = scmp.ne.s32.totalorder %s173, %s174
    %p188 = scmp.eq.s32.totalorder %s22, 3
    %p189 = por %p187, %p188
    %p191 = scmp.ne.s32.totalorder %s174, %s190
    %p192 = scmp.eq.s32.totalorder %s22, 0
    %p193 = por %p191, %p192
    %s194 = sadd.s32 %s24, 1
    %s195 = smul.u32 %s194, 4
    %p196 = scmp.lt.s32.totalorder %s195, 7
    %s197 = scalar_select %p196, %s195, 7
    %s198 = sadd.s32 %s197, 8
    %s199 = sadd.s32 %s31, 1
    %s200 = smul.u32 %s199, 4
    %p201 = scmp.lt.s32.totalorder %s200, 7
    %s202 = scalar_select %p201, %s200, 7
    %s203 = sadd.s32 %s202, 8
    %s204 = ssub.s32 %s23, %s35
    %s205 = ssub.s32 %s198, %s203
    %s206 = sor.u32 %s204, %s205
    %p207 = scmp.eq.s32.totalorder %s206, 0
    %s209 = sadd.s32 %s208, 1
    %s210 = scalar_select %p207, %s208, %s209
    %p213 = pneg %p207
    %p214 = scmp.eq.s32.totalorder %s16, 3
    %p215 = por %p213, %p214
    %p216 = scmp.ne.s32.totalorder %s208, %s211
    %p217 = scmp.eq.s32.totalorder %s16, 0
    %p218 = por %p216, %p217
    %p219 = scmp.ne.s32.totalorder %s208, %s211
    %p220 = scmp.eq.s32.totalorder %s21, 3
    %p221 = por %p219, %p220
    %p222 = scmp.ne.s32.totalorder %s211, %s212
    %p223 = scmp.eq.s32.totalorder %s21, 0
    %p224 = por %p222, %p223
    %p225 = scmp.ne.s32.totalorder %s211, %s212
    %p226 = scmp.eq.s32.totalorder %s22, 3
    %p227 = por %p225, %p226
    %p229 = scmp.ne.s32.totalorder %s212, %s228
    %p230 = scmp.eq.s32.totalorder %s22, 0
    %p231 = por %p229, %p230
    %s233 = sadd.s32 %s232, 1
    %p236 = scmp.eq.s32.totalorder %s16, 3
    %p237 = scmp.ne.s32.totalorder %s232, %s234
    %p238 = scmp.eq.s32.totalorder %s16, 0
    %p239 = por %p237, %p238
    %p240 = scmp.ne.s32.totalorder %s232, %s234
    %p241 = scmp.eq.s32.totalorder %s21, 3
    %p242 = por %p240, %p241
    %p243 = scmp.ne.s32.totalorder %s234, %s235
    %p244 = scmp.eq.s32.totalorder %s21, 0
    %p245 = por %p243, %p244
    %p246 = scmp.ne.s32.totalorder %s234, %s235
    %p247 = scmp.eq.s32.totalorder %s22, 3
    %p248 = por %p246, %p247
    %p250 = scmp.ne.s32.totalorder %s235, %s249
    %p251 = scmp.eq.s32.totalorder %s22, 0
    %p252 = por %p250, %p251
    %s254 = sadd.s32 %s253, 1
    %p257 = scmp.eq.s32.totalorder %s16, 3
    %p258 = scmp.ne.s32.totalorder %s253, %s255
    %p259 = scmp.eq.s32.totalorder %s16, 0
    %p260 = por %p258, %p259
    %p261 = scmp.ne.s32.totalorder %s253, %s255
    %p262 = scmp.eq.s32.totalorder %s21, 3
    %p263 = por %p261, %p262
    %p264 = scmp.ne.s32.totalorder %s255, %s256
    %p265 = scmp.eq.s32.totalorder %s21, 0
    %p266 = por %p264, %p265
    %p267 = scmp.ne.s32.totalorder %s255, %s256
    %p268 = scmp.eq.s32.totalorder %s22, 3
    %p269 = por %p267, %p268
    %p271 = scmp.ne.s32.totalorder %s256, %s270
    %p272 = scmp.eq.s32.totalorder %s22, 0
    %p273 = por %p271, %p272
    %s275 = sadd.s32 %s274, 1
    %p278 = scmp.eq.s32.totalorder %s16, 3
    %p279 = scmp.ne.s32.totalorder %s274, %s276
    %p280 = scmp.eq.s32.totalorder %s16, 0
    %p281 = por %p279, %p280
    %p282 = scmp.ne.s32.totalorder %s274, %s276
    %p283 = scmp.eq.s32.totalorder %s21, 3
    %p284 = por %p282, %p283
    %p285 = scmp.ne.s32.totalorder %s276, %s277
    %p286 = scmp.eq.s32.totalorder %s21, 0
    %p287 = por %p285, %p286
    %p288 = scmp.ne.s32.totalorder %s276, %s277
    %p289 = scmp.eq.s32.totalorder %s22, 3
    %p290 = por %p288, %p289
    %p292 = scmp.ne.s32.totalorder %s277, %s291
    %p293 = scmp.eq.s32.totalorder %s22, 0
    %p294 = por %p292, %p293
    %s296 = sadd.s32 %s295, 1
    %p299 = scmp.eq.s32.totalorder %s16, 3
    %p300 = scmp.ne.s32.totalorder %s295, %s297
    %p301 = scmp.eq.s32.totalorder %s16, 0
    %p302 = por %p300, %p301
    %p303 = scmp.ne.s32.totalorder %s295, %s297
    %p304 = scmp.eq.s32.totalorder %s21, 3
    %p305 = por %p303, %p304
    %p306 = scmp.ne.s32.totalorder %s297, %s298
    %p307 = scmp.eq.s32.totalorder %s21, 0
    %p308 = por %p306, %p307
    %p309 = scmp.ne.s32.totalorder %s297, %s298
    %p310 = scmp.eq.s32.totalorder %s22, 3
    %p311 = por %p309, %p310
    %p313 = scmp.ne.s32.totalorder %s298, %s312
    %p314 = scmp.eq.s32.totalorder %s22, 0
    %p315 = por %p313, %p314
    %s316 = ssub.s32 %s23, %s35
    %s317 = ssub.s32 %s24, %s31
    %s318 = sor.u32 %s316, %s317
    %p319 = scmp.eq.s32.totalorder %s318, 0
    %s321 = sadd.s32 %s320, 1
    %s322 = scalar_select %p319, %s320, %s321
    %p325 = pneg %p319
    %p326 = scmp.eq.s32.totalorder %s16, 3
    %p327 = por %p325, %p326
    %p328 = scmp.ne.s32.totalorder %s320, %s323
    %p329 = scmp.eq.s32.totalorder %s16, 0
    %p330 = por %p328, %p329
    %p331 = scmp.ne.s32.totalorder %s320, %s323
    %p332 = scmp.eq.s32.totalorder %s21, 3
    %p333 = por %p331, %p332
    %p334 = scmp.ne.s32.totalorder %s323, %s324
    %p335 = scmp.eq.s32.totalorder %s21, 0
    %p336 = por %p334, %p335
    %p337 = scmp.ne.s32.totalorder %s323, %s324
    %p338 = scmp.eq.s32.totalorder %s22, 3
    %p339 = por %p337, %p338
    %p341 = scmp.ne.s32.totalorder %s324, %s340
    %p342 = scmp.eq.s32.totalorder %s22, 0
    %p343 = por %p341, %p342
    %p344 = scmp.le.s32.totalorder 1, %s16
    %p345 = scmp.lt.s32.totalorder %s16, 5
    %p346 = pnand %p344, %p345
    %p347 = pneg %p346
    // Predicated region
    $region9: #{skip_arch_forward.5} parent=5 // pred_check
      _
    $region10: #{skip_arch_forward.5} parent=5 // pred_check_branch
      %349 = sbr.rel (%p346) target = $region12
    $region11: #{skip_arch_forward.5} parent=5 // pred_region
      %s350 = ssub.s32 %s16, 1
      // Predicated region
      $region13: #{skip_arch_forward.5} parent=11 // pred_check
        %p351 = pneg %p245
      $region14: #{skip_arch_forward.5} parent=11 // pred_check_branch
        %353 = sbr.rel (%p351) target = $region16
      $region15: #{skip_arch_forward.5} parent=11 // pred_region
        _
      $region16: #{skip_arch_forward.5} parent=11 // pred_fallthru
        _
      // Predicated region
      $region17: #{skip_arch_forward.5} parent=11 // pred_check
        %p354 = pneg %p266
      $region18: #{skip_arch_forward.5} parent=11 // pred_check_branch
        %356 = sbr.rel (%p354) target = $region20
      $region19: #{skip_arch_forward.5} parent=11 // pred_region
        _
      $region20: #{skip_arch_forward.5} parent=11 // pred_fallthru
        _
      // Predicated region
      $region21: #{skip_arch_forward.5} parent=11 // pred_check
        %p357 = pneg %p287
      $region22: #{skip_arch_forward.5} parent=11 // pred_check_branch
        %359 = sbr.rel (%p357) target = $region24
      $region23: #{skip_arch_forward.5} parent=11 // pred_region
        _
      $region24: #{skip_arch_forward.5} parent=11 // pred_fallthru
        _
      // Predicated region
      $region25: #{skip_arch_forward.5} parent=11 // pred_check
        %p360 = pneg %p308
      $region26: #{skip_arch_forward.5} parent=11 // pred_check_branch
        %362 = sbr.rel (%p360) target = $region28
      $region27: #{skip_arch_forward.5} parent=11 // pred_region
        _
      $region28: #{skip_arch_forward.5} parent=11 // pred_fallthru
        _
    $region12: #{skip_arch_forward.5} parent=5 // pred_fallthru
      _
    %p363 = scmp.lt.s32.totalorder %s16, 4
    // Predicated region
    $region29: #{skip_arch_forward.5} parent=5 // pred_check
      %p364 = pneg %p363
    $region30: #{skip_arch_forward.5} parent=5 // pred_check_branch
      %366 = sbr.rel (%p364) target = $region32
    $region31: #{skip_arch_forward.5} parent=5 // pred_region
      // Predicated region
      $region33: #{skip_arch_forward.5} parent=31 // pred_check
        %p367 = pneg %p50
      $region34: #{skip_arch_forward.5} parent=31 // pred_check_branch
        %369 = sbr.rel (%p367) target = $region36
      $region35: #{skip_arch_forward.5} parent=31 // pred_region
        %p370 = scmp.lt.s32.totalorder %s23, 1
        %s371 = scalar_select %p370, %s23, 1
        %p372 = scmp.lt.s32.totalorder %s24, 1
        %s373 = scalar_select %p372, %s24, 1
        %s374 = smul.addr %s371, 2
        %s375 = sadd.s32 %s373, %s374
        %s376 = smul.addr %s375, 4
        %s377 = scalar_lea.vmem %s0, %s376
      $region36: #{skip_arch_forward.5} parent=31 // pred_fallthru
        _
      // Predicated region
      $region37: #{skip_arch_forward.5} parent=31 // pred_check
        %p378 = pneg %p86
      $region38: #{skip_arch_forward.5} parent=31 // pred_check_branch
        %380 = sbr.rel (%p378) target = $region40
      $region39: #{skip_arch_forward.5} parent=31 // pred_region
        %s381 = sadd.s32 %s24, 1
        %s382 = smul.u32 %s381, 2
        %p383 = scmp.lt.s32.totalorder %s382, 3
        %s384 = scalar_select %p383, %s382, 3
        %p385 = scmp.lt.s32.totalorder %s23, 1
        %s386 = scalar_select %p385, %s23, 1
        %p387 = scmp.lt.s32.totalorder %s384, 3
        %s388 = scalar_select %p387, %s384, 3
        %s389 = smul.addr %s386, 4
        %s390 = sadd.s32 %s388, %s389
        %s391 = smul.addr %s390, 2
        %s392 = scalar_lea.vmem %s1, %s391
        %s393 = sadd.s32 %s24, 1
        %s394 = smul.u32 %s393, 2
        %p395 = scmp.lt.s32.totalorder %s394, 3
        %s396 = scalar_select %p395, %s394, 3
      $region40: #{skip_arch_forward.5} parent=31 // pred_fallthru
        _
      // Predicated region
      $region41: #{skip_arch_forward.5} parent=31 // pred_check
        %p397 = pneg %p114
      $region42: #{skip_arch_forward.5} parent=31 // pred_check_branch
        %399 = sbr.rel (%p397) target = $region44
      $region43: #{skip_arch_forward.5} parent=31 // pred_region
        %s400 = smul.u32 2, %s24
        %p401 = scmp.lt.s32.totalorder %s23, 1
        %s402 = scalar_select %p401, %s23, 1
        %p403 = scmp.lt.s32.totalorder %s400, 7
        %s404 = scalar_select %p403, %s400, 7
        %s405 = smul.addr %s402, 8
        %s406 = sadd.s32 %s404, %s405
        %s407 = smul.addr %s406, 4
        %s408 = scalar_lea.vmem %s2, %s407
        %s409 = smul.u32 2, %s24
      $region44: #{skip_arch_forward.5} parent=31 // pred_fallthru
        _
      // Predicated region
      $region45: #{skip_arch_forward.5} parent=31 // pred_check
        %p410 = pneg %p150
      $region46: #{skip_arch_forward.5} parent=31 // pred_check_branch
        %412 = sbr.rel (%p410) target = $region48
      $region47: #{skip_arch_forward.5} parent=31 // pred_region
        %s413 = sadd.s32 %s24, 1
        %s414 = smul.u32 %s413, 4
        %p415 = scmp.lt.s32.totalorder %s414, 7
        %s416 = scalar_select %p415, %s414, 7
        %p417 = scmp.lt.s32.totalorder %s23, 1
        %s418 = scalar_select %p417, %s23, 1
        %p419 = scmp.lt.s32.totalorder %s416, 15
        %s420 = scalar_select %p419, %s416, 15
        %s421 = smul.addr %s418, 16
        %s422 = sadd.s32 %s420, %s421
        %s423 = smul.addr %s422, 2
        %s424 = scalar_lea.vmem %s3, %s423
        %s425 = sadd.s32 %s24, 1
        %s426 = smul.u32 %s425, 4
        %p427 = scmp.lt.s32.totalorder %s426, 7
        %s428 = scalar_select %p427, %s426, 7
      $region48: #{skip_arch_forward.5} parent=31 // pred_fallthru
        _
      // Predicated region
      $region49: #{skip_arch_forward.5} parent=31 // pred_check
        %p429 = pneg %p180
      $region50: #{skip_arch_forward.5} parent=31 // pred_check_branch
        %431 = sbr.rel (%p429) target = $region52
      $region51: #{skip_arch_forward.5} parent=31 // pred_region
        %s432 = sadd.s32 %s24, 2
        %s433 = smul.u32 2, %s432
        %p434 = scmp.lt.s32.totalorder %s23, 1
        %s435 = scalar_select %p434, %s23, 1
        %p436 = scmp.lt.s32.totalorder %s433, 7
        %s437 = scalar_select %p436, %s433, 7
        %s438 = smul.addr %s435, 8
        %s439 = sadd.s32 %s437, %s438
        %s440 = smul.addr %s439, 4
        %s441 = scalar_lea.vmem %s4, %s440
        %s442 = sadd.s32 %s24, 2
        %s443 = smul.u32 2, %s442
      $region52: #{skip_arch_forward.5} parent=31 // pred_fallthru
        _
      // Predicated region
      $region53: #{skip_arch_forward.5} parent=31 // pred_check
        %p444 = pneg %p218
      $region54: #{skip_arch_forward.5} parent=31 // pred_check_branch
        %446 = sbr.rel (%p444) target = $region56
      $region55: #{skip_arch_forward.5} parent=31 // pred_region
        %s447 = sadd.s32 %s24, 1
        %s448 = smul.u32 %s447, 4
        %p449 = scmp.lt.s32.totalorder %s448, 7
        %s450 = scalar_select %p449, %s448, 7
        %s451 = sadd.s32 %s450, 8
        %p452 = scmp.lt.s32.totalorder %s23, 1
        %s453 = scalar_select %p452, %s23, 1
        %p454 = scmp.lt.s32.totalorder %s451, 15
        %s455 = scalar_select %p454, %s451, 15
        %s456 = smul.addr %s453, 16
        %s457 = sadd.s32 %s455, %s456
        %s458 = smul.addr %s457, 2
        %s459 = scalar_lea.vmem %s5, %s458
        %s460 = sadd.s32 %s24, 1
        %s461 = smul.u32 %s460, 4
        %p462 = scmp.lt.s32.totalorder %s461, 7
        %s463 = scalar_select %p462, %s461, 7
        %s464 = sadd.s32 %s463, 8
      $region56: #{skip_arch_forward.5} parent=31 // pred_fallthru
        _
    $region32: #{skip_arch_forward.5} parent=5 // pred_fallthru
      _
    %p465 = scmp.le.s32.totalorder 1, %s16
    %p466 = scmp.lt.s32.totalorder %s16, 5
    %p467 = pnand %p465, %p466
    %p468 = pneg %p467
    // Predicated region
    $region57: #{skip_arch_forward.5} parent=5 // pred_check
      _
    $region58: #{skip_arch_forward.5} parent=5 // pred_check_branch
      %470 = sbr.rel (%p467) target = $region60
    $region59: #{skip_arch_forward.5} parent=5 // pred_region
      %s471 = ssub.s32 %s16, 1
      %p472 = scmp.lt.s32.totalorder %s25, 1
      %s473 = scalar_select %p472, %s25, 1
      %p474 = scmp.lt.s32.totalorder %s26, 1
      %s475 = scalar_select %p474, %s26, 1
      %s476 = smul.addr %s473, 2
      %s477 = sadd.s32 %s475, %s476
      %s478 = smul.addr %s477, 4
      %s479 = scalar_lea.vmem %s0, %s478
      %p480 = pneg %p56
      %p481 = pneg %p53
      %s482 = sadd.s32 %s26, 1
      %s483 = smul.u32 %s482, 2
      %p484 = scmp.lt.s32.totalorder %s483, 3
      %s485 = scalar_select %p484, %s483, 3
      %p486 = scmp.lt.s32.totalorder %s25, 1
      %s487 = scalar_select %p486, %s25, 1
      %p488 = scmp.lt.s32.totalorder %s485, 3
      %s489 = scalar_select %p488, %s485, 3
      %s490 = smul.addr %s487, 4
      %s491 = sadd.s32 %s489, %s490
      %s492 = smul.addr %s491, 2
      %s493 = scalar_lea.vmem %s1, %s492
      %p494 = pneg %p92
      %p495 = pneg %p89
      %s496 = smul.u32 2, %s26
      %p497 = scmp.lt.s32.totalorder %s25, 1
      %s498 = scalar_select %p497, %s25, 1
      %p499 = scmp.lt.s32.totalorder %s496, 7
      %s500 = scalar_select %p499, %s496, 7
      %s501 = smul.addr %s498, 8
      %s502 = sadd.s32 %s500, %s501
      %s503 = smul.addr %s502, 4
      %s504 = scalar_lea.vmem %s2, %s503
      %p505 = pneg %p120
      %p506 = pneg %p117
      %s507 = sadd.s32 %s26, 1
      %s508 = smul.u32 %s507, 4
      %p509 = scmp.lt.s32.totalorder %s508, 7
      %s510 = scalar_select %p509, %s508, 7
      %p511 = scmp.lt.s32.totalorder %s25, 1
      %s512 = scalar_select %p511, %s25, 1
      %p513 = scmp.lt.s32.totalorder %s510, 15
      %s514 = scalar_select %p513, %s510, 15
      %s515 = smul.addr %s512, 16
      %s516 = sadd.s32 %s514, %s515
      %s517 = smul.addr %s516, 2
      %s518 = scalar_lea.vmem %s3, %s517
      %p519 = pneg %p156
      %p520 = pneg %p153
      %s521 = sadd.s32 %s26, 2
      %s522 = smul.u32 2, %s521
      %p523 = scmp.lt.s32.totalorder %s25, 1
      %s524 = scalar_select %p523, %s25, 1
      %p525 = scmp.lt.s32.totalorder %s522, 7
      %s526 = scalar_select %p525, %s522, 7
      %s527 = smul.addr %s524, 8
      %s528 = sadd.s32 %s526, %s527
      %s529 = smul.addr %s528, 4
      %s530 = scalar_lea.vmem %s4, %s529
      %p531 = pneg %p186
      %p532 = pneg %p183
      %s533 = sadd.s32 %s26, 1
      %s534 = smul.u32 %s533, 4
      %p535 = scmp.lt.s32.totalorder %s534, 7
      %s536 = scalar_select %p535, %s534, 7
      %s537 = sadd.s32 %s536, 8
      %p538 = scmp.lt.s32.totalorder %s25, 1
      %s539 = scalar_select %p538, %s25, 1
      %p540 = scmp.lt.s32.totalorder %s537, 15
      %s541 = scalar_select %p540, %s537, 15
      %s542 = smul.addr %s539, 16
      %s543 = sadd.s32 %s541, %s542
      %s544 = smul.addr %s543, 2
      %s545 = scalar_lea.vmem %s5, %s544
      %p546 = pneg %p224
      %p547 = pneg %p221
      %p548 = pneg %p245
      %p549 = pneg %p242
      %p550 = pneg %p266
      %p551 = pneg %p263
      %p552 = pneg %p287
      %p553 = pneg %p284
      %p554 = pneg %p308
      %p555 = pneg %p305
      %p556 = pneg %p336
      %p557 = pneg %p333
      %s558 = smul.u32 8, %s26
      %p559 = scmp.lt.s32.totalorder %s25, 1
      %s560 = scalar_select %p559, %s25, 1
      %p561 = scmp.lt.s32.totalorder %s558, 15
      %s562 = scalar_select %p561, %s558, 15
      %s563 = smul.addr %s562, 4
      %s564 = smul.addr %s560, 64
      %s565 = sadd.s32 %s563, %s564
      %s566 = smul.addr %s565, 4
      %s567 = scalar_lea.vmem %s10, %s566
      %p568 = scmp.lt.s32.totalorder %s25, 1
      %s569 = scalar_select %p568, %s25, 1
      %p570 = scmp.lt.s32.totalorder %s26, 1
      %s571 = scalar_select %p570, %s26, 1
      %s572 = smul.addr %s569, 2
      %s573 = sadd.s32 %s571, %s572
      %s574 = smul.addr %s573, 4
      %s575 = scalar_lea.vmem %s0, %s574
      %s576 = sadd.s32 %s26, 1
      %s577 = smul.u32 %s576, 2
      %p578 = scmp.lt.s32.totalorder %s577, 3
      %s579 = scalar_select %p578, %s577, 3
      %p580 = scmp.lt.s32.totalorder %s25, 1
      %s581 = scalar_select %p580, %s25, 1
      %p582 = scmp.lt.s32.totalorder %s579, 3
      %s583 = scalar_select %p582, %s579, 3
      %s584 = smul.addr %s581, 4
      %s585 = sadd.s32 %s583, %s584
      %s586 = smul.addr %s585, 2
      %s587 = scalar_lea.vmem %s1, %s586
      %s588 = sadd.s32 %s26, 1
      %s589 = smul.u32 %s588, 2
      %p590 = scmp.lt.s32.totalorder %s589, 3
      %s591 = scalar_select %p590, %s589, 3
      %s592 = smul.u32 2, %s26
      %p593 = scmp.lt.s32.totalorder %s25, 1
      %s594 = scalar_select %p593, %s25, 1
      %p595 = scmp.lt.s32.totalorder %s592, 7
      %s596 = scalar_select %p595, %s592, 7
      %s597 = smul.addr %s594, 8
      %s598 = sadd.s32 %s596, %s597
      %s599 = smul.addr %s598, 4
      %s600 = scalar_lea.vmem %s2, %s599
      %s601 = smul.u32 2, %s26
      %s602 = sadd.s32 %s26, 1
      %s603 = smul.u32 %s602, 4
      %p604 = scmp.lt.s32.totalorder %s603, 7
      %s605 = scalar_select %p604, %s603, 7
      %p606 = scmp.lt.s32.totalorder %s25, 1
      %s607 = scalar_select %p606, %s25, 1
      %p608 = scmp.lt.s32.totalorder %s605, 15
      %s609 = scalar_select %p608, %s605, 15
      %s610 = smul.addr %s607, 16
      %s611 = sadd.s32 %s609, %s610
      %s612 = smul.addr %s611, 2
      %s613 = scalar_lea.vmem %s3, %s612
      %s614 = sadd.s32 %s26, 1
      %s615 = smul.u32 %s614, 4
      %p616 = scmp.lt.s32.totalorder %s615, 7
      %s617 = scalar_select %p616, %s615, 7
      %s618 = sadd.s32 %s26, 2
      %s619 = smul.u32 2, %s618
      %p620 = scmp.lt.s32.totalorder %s25, 1
      %s621 = scalar_select %p620, %s25, 1
      %p622 = scmp.lt.s32.totalorder %s619, 7
      %s623 = scalar_select %p622, %s619, 7
      %s624 = smul.addr %s621, 8
      %s625 = sadd.s32 %s623, %s624
      %s626 = smul.addr %s625, 4
      %s627 = scalar_lea.vmem %s4, %s626
      %s628 = sadd.s32 %s26, 2
      %s629 = smul.u32 2, %s628
      %s630 = sadd.s32 %s26, 1
      %s631 = smul.u32 %s630, 4
      %p632 = scmp.lt.s32.totalorder %s631, 7
      %s633 = scalar_select %p632, %s631, 7
      %s634 = sadd.s32 %s633, 8
      %p635 = scmp.lt.s32.totalorder %s25, 1
      %s636 = scalar_select %p635, %s25, 1
      %p637 = scmp.lt.s32.totalorder %s634, 15
      %s638 = scalar_select %p637, %s634, 15
      %s639 = smul.addr %s636, 16
      %s640 = sadd.s32 %s638, %s639
      %s641 = smul.addr %s640, 2
      %s642 = scalar_lea.vmem %s5, %s641
      %s643 = sadd.s32 %s26, 1
      %s644 = smul.u32 %s643, 4
      %p645 = scmp.lt.s32.totalorder %s644, 7
      %s646 = scalar_select %p645, %s644, 7
      %s647 = sadd.s32 %s646, 8
      %s648 = smul.u32 8, %s26
      %p649 = scmp.lt.s32.totalorder %s25, 1
      %s650 = scalar_select %p649, %s25, 1
      %p651 = scmp.lt.s32.totalorder %s648, 15
      %s652 = scalar_select %p651, %s648, 15
      %s653 = smul.addr %s652, 4
      %s654 = smul.addr %s650, 64
      %s655 = sadd.s32 %s653, %s654
      %s656 = smul.addr %s655, 4
      %s657 = scalar_lea.vmem %s10, %s656
      %s658 = smul.u32 8, %s26
      %p660 = scmp.eq.s32.totalorder %s26, 1
      %s661 = scalar_select %p660, 0.0, 1.0
      %v662 = vld [vmem:[%s6] sm:$0xf]
      %v663 = vld [vmem:[%s6 + $0x4] sm:$0xf]
      %v664 = vld [vmem:[%s6 + $0x8] sm:$0xf]
      %v665 = vld [vmem:[%s6 + $0xc] sm:$0xf]
      %v666 = vld [vmem:[%s6 + $0x10] sm:$0xf]
      %v667 = vld [vmem:[%s6 + $0x14] sm:$0xf]
      %v668 = vld [vmem:[%s6 + $0x18] sm:$0xf]
      %v669 = vld [vmem:[%s6 + $0x1c] sm:$0xf]
      %v670 = vld [vmem:[%s6 + $0x20] sm:$0xf]
      %v671 = vld [vmem:[%s6 + $0x24] sm:$0xf]
      %v672 = vld [vmem:[%s6 + $0x28] sm:$0xf]
      %v673 = vld [vmem:[%s6 + $0x2c] sm:$0xf]
      %v674 = vld [vmem:[%s6 + $0x30] sm:$0xf]
      %v675 = vld [vmem:[%s6 + $0x34] sm:$0xf]
      %v676 = vld [vmem:[%s6 + $0x38] sm:$0xf]
      %v677 = vld [vmem:[%s6 + $0x3c] sm:$0xf]
      %v678 = vld [vmem:[%s7] sm:$0x1]
      %v679 = vld [vmem:[%s8] sm:$0xf]
      %v680 = vld [vmem:[%s8 + $0x4] sm:$0xf]
      %v681 = vld [vmem:[%s8 + $0x8] sm:$0xf]
      %v682 = vld [vmem:[%s8 + $0xc] sm:$0xf]
      %v683 = vld [vmem:[%s8 + $0x10] sm:$0xf]
      %v684 = vld [vmem:[%s8 + $0x14] sm:$0xf]
      %v685 = vld [vmem:[%s8 + $0x18] sm:$0xf]
      %v686 = vld [vmem:[%s8 + $0x1c] sm:$0xf]
      %v687 = vld [vmem:[%s8 + $0x20] sm:$0xf]
      %v688 = vld [vmem:[%s8 + $0x24] sm:$0xf]
      %v689 = vld [vmem:[%s8 + $0x28] sm:$0xf]
      %v690 = vld [vmem:[%s8 + $0x2c] sm:$0xf]
      %v691 = vld [vmem:[%s8 + $0x30] sm:$0xf]
      %v692 = vld [vmem:[%s8 + $0x34] sm:$0xf]
      %v693 = vld [vmem:[%s8 + $0x38] sm:$0xf]
      %v694 = vld [vmem:[%s8 + $0x3c] sm:$0xf]
      %v695 = vld [vmem:[%s9] sm:$0x1]
      %v696 = vld [vmem:[%s575] sm:$0xf]
      %v698 = vlaneseq
      %v699 = vshrl.u32 %v698, 7
      %v700 = vsub.s32 0, %v699
      %v701 = vrot.slane %v678, %v700
      %v719 = vunpack.c.l.b16 %v662
      %v720 = vunpack.c.l.b16 %v663
      %v721 = vunpack.c.l.b16 %v664
      %v722 = vunpack.c.l.b16 %v665
      %v723 = vunpack.c.l.b16 %v666
      %v724 = vunpack.c.l.b16 %v667
      %v725 = vunpack.c.l.b16 %v668
      %v726 = vunpack.c.l.b16 %v669
      %v727 = vunpack.c.l.b16 %v670
      %v728 = vunpack.c.l.b16 %v671
      %v729 = vunpack.c.l.b16 %v672
      %v730 = vunpack.c.l.b16 %v673
      %v731 = vunpack.c.l.b16 %v674
      %v732 = vunpack.c.l.b16 %v675
      %v733 = vunpack.c.l.b16 %v676
      %v734 = vunpack.c.l.b16 %v677
      %v735 = vpack.c.b16 %v720, %v719
      %v736 = vpack.c.b16 %v722, %v721
      %v737 = vpack.c.b16 %v724, %v723
      %v738 = vpack.c.b16 %v726, %v725
      %v739 = vpack.c.b16 %v728, %v727
      %v740 = vpack.c.b16 %v730, %v729
      %v741 = vpack.c.b16 %v732, %v731
      %v742 = vpack.c.b16 %v734, %v733
      %751 = vmatprep.subr.bf16.mxu0 0
      %752 = vmatpush1.bf16.msra.mxu0 %v735
      %753 = vmatprep.subr.bf16.mxu0 0
      %754 = vmatpush1.bf16.msra.mxu0 %v736
      %755 = vmatprep.subr.bf16.mxu0 0
      %756 = vmatpush1.bf16.msra.mxu0 %v737
      %757 = vmatprep.subr.bf16.mxu0 0
      %758 = vmatpush1.bf16.msra.mxu0 %v738
      %759 = vmatprep.subr.bf16.mxu0 0
      %760 = vmatpush1.bf16.msra.mxu0 %v739
      %761 = vmatprep.subr.bf16.mxu0 0
      %762 = vmatpush1.bf16.msra.mxu0 %v740
      %763 = vmatprep.subr.bf16.mxu0 0
      %764 = vmatpush1.bf16.msra.mxu0 %v741
      %765 = vmatprep.subr.bf16.mxu0 0
      %766 = vmatpush1.bf16.msra.mxu0 %v742
      %767 = vmatprep.subr.bf16.mxu0 0
      %768 = vmatpush1.bf16.msra.mxu0 0
      %769 = vmatprep.subr.bf16.mxu0 0
      %770 = vmatpush1.bf16.msra.mxu0 0
      %771 = vmatprep.subr.bf16.mxu0 0
      %772 = vmatpush1.bf16.msra.mxu0 0
      %773 = vmatprep.subr.bf16.mxu0 0
      %774 = vmatpush1.bf16.msra.mxu0 0
      %775 = vmatprep.subr.bf16.mxu0 0
      %776 = vmatpush1.bf16.msra.mxu0 0
      %777 = vmatprep.subr.bf16.mxu0 0
      %778 = vmatpush1.bf16.msra.mxu0 0
      %779 = vmatprep.subr.bf16.mxu0 0
      %780 = vmatpush1.bf16.msra.mxu0 0
      %781 = vmatprep.subr.bf16.mxu0 0
      %782 = vmatpush1.bf16.msra.mxu0 0
      %783 = vmatprep.mubr.bf16.mxu0 0
      %784 = vmatmul.mubr.bf16.gmra.mrb[0].mxu0 %v696
      %v785 = vpop.f32.mrb[0].mxu0
      %v786 = vadd.f32 %v701, %v785
      %v787 = vpop.f32.mrb[0].mxu0
      %v788 = vpop.f32.mrb[0].mxu0
      %v789 = vpop.f32.mrb[0].mxu0
      %790 = vdwg.mxu0
      %791 = vst [vmem:[#allocation2] sm:$0xff] %v786
      %v792 = vld [vmem:[%s587] sm:$0x3]
      %793 = vmatprep.subr.bf16.mxu0 0
      %794 = vmatpush1.bf16.msra.mxu0 %v735
      %795 = vmatprep.subr.bf16.mxu0 0
      %796 = vmatpush1.bf16.msra.mxu0 %v736
      %797 = vmatprep.subr.bf16.mxu0 0
      %798 = vmatpush1.bf16.msra.mxu0 %v737
      %799 = vmatprep.subr.bf16.mxu0 0
      %800 = vmatpush1.bf16.msra.mxu0 %v738
      %801 = vmatprep.subr.bf16.mxu0 0
      %802 = vmatpush1.bf16.msra.mxu0 %v739
      %803 = vmatprep.subr.bf16.mxu0 0
      %804 = vmatpush1.bf16.msra.mxu0 %v740
      %805 = vmatprep.subr.bf16.mxu0 0
      %806 = vmatpush1.bf16.msra.mxu0 %v741
      %807 = vmatprep.subr.bf16.mxu0 0
      %808 = vmatpush1.bf16.msra.mxu0 %v742
      %809 = vmatprep.subr.bf16.mxu0 0
      %810 = vmatpush1.bf16.msra.mxu0 0
      %811 = vmatprep.subr.bf16.mxu0 0
      %812 = vmatpush1.bf16.msra.mxu0 0
      %813 = vmatprep.subr.bf16.mxu0 0
      %814 = vmatpush1.bf16.msra.mxu0 0
      %815 = vmatprep.subr.bf16.mxu0 0
      %816 = vmatpush1.bf16.msra.mxu0 0
      %817 = vmatprep.subr.bf16.mxu0 0
      %818 = vmatpush1.bf16.msra.mxu0 0
      %819 = vmatprep.subr.bf16.mxu0 0
      %820 = vmatpush1.bf16.msra.mxu0 0
      %821 = vmatprep.subr.bf16.mxu0 0
      %822 = vmatpush1.bf16.msra.mxu0 0
      %823 = vmatprep.subr.bf16.mxu0 0
      %824 = vmatpush1.bf16.msra.mxu0 0
      %825 = vmatprep.mubr.bf16.mxu0 0
      %826 = vmatmul.mubr.bf16.gmra.mrb[0].mxu0 %v792
      %v827 = vpop.f32.mrb[0].mxu0
      %v828 = vadd.f32 %v701, %v827
      %v829 = vpop.f32.mrb[0].mxu0
      %v830 = vpop.f32.mrb[0].mxu0
      %v831 = vpop.f32.mrb[0].mxu0
      %832 = vdwg.mxu0
      %v833 = vstv %s661
      %v834 = vmul.f32 %v833, %v828
      %835 = vst [vmem:[#allocation2 + $0x8] sm:$0xf] %v834
      %v836 = vld [vmem:[%s600] sm:$0xf]
      %v837 = vld [vmem:[%s600 + $0x4] sm:$0xf]
      %v839 = vlaneseq
      %v840 = vshrl.u32 %v839, 7
      %v841 = vsub.s32 0, %v840
      %v842 = vrot.slane %v695, %v841
      %v846 = vunpack.c.l.b16 %v836
      %v847 = vunpack.c.l.b16 %v837
      %v848 = vpack.c.b16 %v847, %v846
      %v866 = vunpack.c.l.b16 %v679
      %v867 = vunpack.c.l.b16 %v680
      %v868 = vunpack.c.l.b16 %v681
      %v869 = vunpack.c.l.b16 %v682
      %v870 = vunpack.c.l.b16 %v683
      %v871 = vunpack.c.l.b16 %v684
      %v872 = vunpack.c.l.b16 %v685
      %v873 = vunpack.c.l.b16 %v686
      %v874 = vunpack.c.l.b16 %v687
      %v875 = vunpack.c.l.b16 %v688
      %v876 = vunpack.c.l.b16 %v689
      %v877 = vunpack.c.l.b16 %v690
      %v878 = vunpack.c.l.b16 %v691
      %v879 = vunpack.c.l.b16 %v692
      %v880 = vunpack.c.l.b16 %v693
      %v881 = vunpack.c.l.b16 %v694
      %v882 = vpack.c.b16 %v867, %v866
      %v883 = vpack.c.b16 %v869, %v868
      %v884 = vpack.c.b16 %v871, %v870
      %v885 = vpack.c.b16 %v873, %v872
      %v886 = vpack.c.b16 %v875, %v874
      %v887 = vpack.c.b16 %v877, %v876
      %v888 = vpack.c.b16 %v879, %v878
      %v889 = vpack.c.b16 %v881, %v880
      %898 = vmatprep.subr.bf16.mxu0 0
      %899 = vmatpush1.bf16.msra.mxu0 %v882
      %900 = vmatprep.subr.bf16.mxu0 0
      %901 = vmatpush1.bf16.msra.mxu0 %v883
      %902 = vmatprep.subr.bf16.mxu0 0
      %903 = vmatpush1.bf16.msra.mxu0 %v884
      %904 = vmatprep.subr.bf16.mxu0 0
      %905 = vmatpush1.bf16.msra.mxu0 %v885
      %906 = vmatprep.subr.bf16.mxu0 0
      %907 = vmatpush1.bf16.msra.mxu0 %v886
      %908 = vmatprep.subr.bf16.mxu0 0
      %909 = vmatpush1.bf16.msra.mxu0 %v887
      %910 = vmatprep.subr.bf16.mxu0 0
      %911 = vmatpush1.bf16.msra.mxu0 %v888
      %912 = vmatprep.subr.bf16.mxu0 0
      %913 = vmatpush1.bf16.msra.mxu0 %v889
      %914 = vmatprep.subr.bf16.mxu0 0
      %915 = vmatpush1.bf16.msra.mxu0 0
      %916 = vmatprep.subr.bf16.mxu0 0
      %917 = vmatpush1.bf16.msra.mxu0 0
      %918 = vmatprep.subr.bf16.mxu0 0
      %919 = vmatpush1.bf16.msra.mxu0 0
      %920 = vmatprep.subr.bf16.mxu0 0
      %921 = vmatpush1.bf16.msra.mxu0 0
      %922 = vmatprep.subr.bf16.mxu0 0
      %923 = vmatpush1.bf16.msra.mxu0 0
      %924 = vmatprep.subr.bf16.mxu0 0
      %925 = vmatpush1.bf16.msra.mxu0 0
      %926 = vmatprep.subr.bf16.mxu0 0
      %927 = vmatpush1.bf16.msra.mxu0 0
      %928 = vmatprep.subr.bf16.mxu0 0
      %929 = vmatpush1.bf16.msra.mxu0 0
      %930 = vmatprep.mubr.bf16.mxu0 0
      %931 = vmatmul.mubr.bf16.gmra.mrb[0].mxu0 %v848
      %v932 = vpop.f32.mrb[0].mxu0
      %v933 = vadd.f32 %v842, %v932
      %v934 = vpop.f32.mrb[0].mxu0
      %v935 = vpop.f32.mrb[0].mxu0
      %v936 = vadd.f32 %v842, %v935
      %v937 = vpop.f32.mrb[0].mxu0
      %938 = vdwg.mxu0
      %939 = vst [vmem:[#allocation3] sm:$0xff] %v933
      %940 = vst [vmem:[#allocation3 + $0x8] sm:$0xff] %v936
      %v941 = vld [vmem:[%s613] sm:$0x3]
      %942 = vmatprep.subr.bf16.mxu0 0
      %943 = vmatpush1.bf16.msra.mxu0 %v882
      %944 = vmatprep.subr.bf16.mxu0 0
      %945 = vmatpush1.bf16.msra.mxu0 %v883
      %946 = vmatprep.subr.bf16.mxu0 0
      %947 = vmatpush1.bf16.msra.mxu0 %v884
      %948 = vmatprep.subr.bf16.mxu0 0
      %949 = vmatpush1.bf16.msra.mxu0 %v885
      %950 = vmatprep.subr.bf16.mxu0 0
      %951 = vmatpush1.bf16.msra.mxu0 %v886
      %952 = vmatprep.subr.bf16.mxu0 0
      %953 = vmatpush1.bf16.msra.mxu0 %v887
      %954 = vmatprep.subr.bf16.mxu0 0
      %955 = vmatpush1.bf16.msra.mxu0 %v888
      %956 = vmatprep.subr.bf16.mxu0 0
      %957 = vmatpush1.bf16.msra.mxu0 %v889
      %958 = vmatprep.subr.bf16.mxu0 0
      %959 = vmatpush1.bf16.msra.mxu0 0
      %960 = vmatprep.subr.bf16.mxu0 0
      %961 = vmatpush1.bf16.msra.mxu0 0
      %962 = vmatprep.subr.bf16.mxu0 0
      %963 = vmatpush1.bf16.msra.mxu0 0
      %964 = vmatprep.subr.bf16.mxu0 0
      %965 = vmatpush1.bf16.msra.mxu0 0
      %966 = vmatprep.subr.bf16.mxu0 0
      %967 = vmatpush1.bf16.msra.mxu0 0
      %968 = vmatprep.subr.bf16.mxu0 0
      %969 = vmatpush1.bf16.msra.mxu0 0
      %970 = vmatprep.subr.bf16.mxu0 0
      %971 = vmatpush1.bf16.msra.mxu0 0
      %972 = vmatprep.subr.bf16.mxu0 0
      %973 = vmatpush1.bf16.msra.mxu0 0
      %974 = vmatprep.mubr.bf16.mxu0 0
      %975 = vmatmul.mubr.bf16.gmra.mrb[0].mxu0 %v941
      %v976 = vpop.f32.mrb[0].mxu0
      %v977 = vadd.f32 %v842, %v976
      %v978 = vpop.f32.mrb[0].mxu0
      %v979 = vpop.f32.mrb[0].mxu0
      %v980 = vpop.f32.mrb[0].mxu0
      %981 = vdwg.mxu0
      %v982 = vmul.f32 %v833, %v977
      %983 = vst [vmem:[#allocation3 + $0x10] sm:$0xf] %v982
      %v984 = vld [vmem:[%s627] sm:$0xf]
      %v985 = vld [vmem:[%s627 + $0x4] sm:$0xf]
      %v988 = vunpack.c.l.b16 %v984
      %v989 = vunpack.c.l.b16 %v985
      %v990 = vpack.c.b16 %v989, %v988
      %992 = vmatprep.subr.bf16.mxu0 0
      %993 = vmatpush1.bf16.msra.mxu0 %v882
      %994 = vmatprep.subr.bf16.mxu0 0
      %995 = vmatpush1.bf16.msra.mxu0 %v883
      %996 = vmatprep.subr.bf16.mxu0 0
      %997 = vmatpush1.bf16.msra.mxu0 %v884
      %998 = vmatprep.subr.bf16.mxu0 0
      %999 = vmatpush1.bf16.msra.mxu0 %v885
      %1000 = vmatprep.subr.bf16.mxu0 0
      %1001 = vmatpush1.bf16.msra.mxu0 %v886
      %1002 = vmatprep.subr.bf16.mxu0 0
      %1003 = vmatpush1.bf16.msra.mxu0 %v887
      %1004 = vmatprep.subr.bf16.mxu0 0
      %1005 = vmatpush1.bf16.msra.mxu0 %v888
      %1006 = vmatprep.subr.bf16.mxu0 0
      %1007 = vmatpush1.bf16.msra.mxu0 %v889
      %1008 = vmatprep.subr.bf16.mxu0 0
      %1009 = vmatpush1.bf16.msra.mxu0 0
      %1010 = vmatprep.subr.bf16.mxu0 0
      %1011 = vmatpush1.bf16.msra.mxu0 0
      %1012 = vmatprep.subr.bf16.mxu0 0
      %1013 = vmatpush1.bf16.msra.mxu0 0
      %1014 = vmatprep.subr.bf16.mxu0 0
      %1015 = vmatpush1.bf16.msra.mxu0 0
      %1016 = vmatprep.subr.bf16.mxu0 0
      %1017 = vmatpush1.bf16.msra.mxu0 0
      %1018 = vmatprep.subr.bf16.mxu0 0
      %1019 = vmatpush1.bf16.msra.mxu0 0
      %1020 = vmatprep.subr.bf16.mxu0 0
      %1021 = vmatpush1.bf16.msra.mxu0 0
      %1022 = vmatprep.subr.bf16.mxu0 0
      %1023 = vmatpush1.bf16.msra.mxu0 0
      %1024 = vmatprep.mubr.bf16.mxu0 0
      %1025 = vmatmul.mubr.bf16.gmra.mrb[0].mxu0 %v990
      %v1026 = vpop.f32.mrb[0].mxu0
      %v1027 = vadd.f32 %v842, %v1026
      %v1028 = vpop.f32.mrb[0].mxu0
      %v1029 = vpop.f32.mrb[0].mxu0
      %v1030 = vadd.f32 %v842, %v1029
      %v1031 = vpop.f32.mrb[0].mxu0
      %1032 = vdwg.mxu0
      %1033 = vst [vmem:[#allocation4] sm:$0xff] %v1027
      %1034 = vst [vmem:[#allocation4 + $0x8] sm:$0xff] %v1030
      %v1035 = vld [vmem:[%s642] sm:$0x3]
      %1036 = vmatprep.subr.bf16.mxu0 0
      %1037 = vmatpush1.bf16.msra.mxu0 %v882
      %1038 = vmatprep.subr.bf16.mxu0 0
      %1039 = vmatpush1.bf16.msra.mxu0 %v883
      %1040 = vmatprep.subr.bf16.mxu0 0
      %1041 = vmatpush1.bf16.msra.mxu0 %v884
      %1042 = vmatprep.subr.bf16.mxu0 0
      %1043 = vmatpush1.bf16.msra.mxu0 %v885
      %1044 = vmatprep.subr.bf16.mxu0 0
      %1045 = vmatpush1.bf16.msra.mxu0 %v886
      %1046 = vmatprep.subr.bf16.mxu0 0
      %1047 = vmatpush1.bf16.msra.mxu0 %v887
      %1048 = vmatprep.subr.bf16.mxu0 0
      %1049 = vmatpush1.bf16.msra.mxu0 %v888
      %1050 = vmatprep.subr.bf16.mxu0 0
      %1051 = vmatpush1.bf16.msra.mxu0 %v889
      %1052 = vmatprep.subr.bf16.mxu0 0
      %1053 = vmatpush1.bf16.msra.mxu0 0
      %1054 = vmatprep.subr.bf16.mxu0 0
      %1055 = vmatpush1.bf16.msra.mxu0 0
      %1056 = vmatprep.subr.bf16.mxu0 0
      %1057 = vmatpush1.bf16.msra.mxu0 0
      %1058 = vmatprep.subr.bf16.mxu0 0
      %1059 = vmatpush1.bf16.msra.mxu0 0
      %1060 = vmatprep.subr.bf16.mxu0 0
      %1061 = vmatpush1.bf16.msra.mxu0 0
      %1062 = vmatprep.subr.bf16.mxu0 0
      %1063 = vmatpush1.bf16.msra.mxu0 0
      %1064 = vmatprep.subr.bf16.mxu0 0
      %1065 = vmatpush1.bf16.msra.mxu0 0
      %1066 = vmatprep.subr.bf16.mxu0 0
      %1067 = vmatpush1.bf16.msra.mxu0 0
      %1068 = vmatprep.mubr.bf16.mxu0 0
      %1069 = vmatmul.mubr.bf16.gmra.mrb[0].mxu0 %v1035
      %v1070 = vpop.f32.mrb[0].mxu0
      %v1071 = vadd.f32 %v842, %v1070
      %v1072 = vpop.f32.mrb[0].mxu0
      %v1073 = vpop.f32.mrb[0].mxu0
      %v1074 = vpop.f32.mrb[0].mxu0
      %1075 = vdwg.mxu0
      %v1076 = vmul.f32 %v833, %v1071
      %1077 = vst [vmem:[#allocation4 + $0x10] sm:$0xf] %v1076
      %v1078 = vlaneseq
      %v1079 = vshrl.u32 %v1078, 7
      %vm1080 = vcmp.lt.s32.totalorder %v1079, 3
      %v1081 = vsel %vm1080, 1, 0
      %v1082 = vcvt.s32.f32 %v1081
      %v1083 = vld [vmem:[#allocation2] sm:$0xf]
      %v1084 = vld [vmem:[#allocation3] sm:$0xf]
      %v1085 = vadd.f32 %v1084, %v1083
      %v1086 = vld [vmem:[#allocation4] sm:$0xf]
      %vm1087 = vcmask 1047556
      %v1088 = vrot.slane %v1083, 4
      %v1089 = vsel %vm1087, %v1088, %v1083
      %v1090 = vrot.slane %v1089, 4
      %v1091 = vsel %vm1087, %v1090, %v1083
      %v1093 = vrot.slane %v1091, 1
      %v1095 = vmul.f32 %v1082, %v1093
      %v1096 = vadd.f32 %v1083, %v1095
      %v1097 = vmul.f32 %v1096, 0.5
      %v1098 = vadd.f32 %v1086, %v1097
      %v1099 = vrot.slane %v1085, 4
      %v1100 = vsel %vm1087, %v1099, %v1085
      %v1101 = vrot.slane %v1100, 4
      %v1102 = vsel %vm1087, %v1101, %v1085
      %v1104 = vrot.slane %v1102, 1
      %v1106 = vmul.f32 %v1082, %v1104
      %v1107 = vld [vmem:[#allocation2 + $0x4] sm:$0xf]
      %v1108 = vadd.f32 %v1083, %v1107
      %v1109 = vmul.f32 %v1108, 0.5
      %v1110 = vld [vmem:[#allocation3 + $0x4] sm:$0xf]
      %v1111 = vadd.f32 %v1110, %v1109
      %v1112 = vld [vmem:[#allocation4 + $0x4] sm:$0xf]
      %v1113 = vrot.slane %v1109, 4
      %v1114 = vsel %vm1087, %v1113, %v1109
      %v1115 = vrot.slane %v1114, 4
      %v1116 = vsel %vm1087, %v1115, %v1109
      %v1118 = vrot.slane %v1116, 1
      %v1120 = vmul.f32 %v1082, %v1118
      %v1121 = vadd.f32 %v1109, %v1120
      %v1122 = vmul.f32 %v1121, 0.5
      %v1123 = vadd.f32 %v1112, %v1122
      %v1124 = vrot.slane %v1111, 4
      %v1125 = vsel %vm1087, %v1124, %v1111
      %v1126 = vrot.slane %v1125, 4
      %v1127 = vsel %vm1087, %v1126, %v1111
      %v1129 = vrot.slane %v1127, 1
      %v1131 = vmul.f32 %v1082, %v1129
      %vm1132 = vcmask 27648
      %1133 = vst.msk [vmem:[%s657] sm:$0xf] %vm1132, %v1085
      %v1134 = vadd.f32 %v1085, %v1098
      %v1135 = vmul.f32 %v1134, 0.5
      %s1136 = scalar_lea.vmem %s657, 4
      %1137 = vst.msk [vmem:[%s1136] sm:$0xf] %vm1132, %v1135
      %s1138 = scalar_lea.vmem %s657, 8
      %1139 = vst.msk [vmem:[%s1138] sm:$0xf] %vm1132, %v1098
      %v1140 = vadd.f32 %v1098, %v1106
      %v1141 = vmul.f32 %v1140, 0.5
      %s1142 = scalar_lea.vmem %s657, 12
      %1143 = vst.msk [vmem:[%s1142] sm:$0xf] %vm1132, %v1141
      %v1144 = vadd.f32 %v1085, %v1111
      %v1145 = vmul.f32 %v1144, 0.5
      %v1146 = vadd.f32 %v1098, %v1123
      %v1147 = vmul.f32 %v1146, 0.5
      %v1148 = vadd.f32 %v1106, %v1131
      %v1149 = vmul.f32 %v1148, 0.5
      %s1150 = scalar_lea.vmem %s657, 16
      %1151 = vst.msk [vmem:[%s1150] sm:$0xf] %vm1132, %v1145
      %v1152 = vadd.f32 %v1145, %v1147
      %v1153 = vmul.f32 %v1152, 0.5
      %s1154 = scalar_lea.vmem %s657, 20
      %1155 = vst.msk [vmem:[%s1154] sm:$0xf] %vm1132, %v1153
      %s1156 = scalar_lea.vmem %s657, 24
      %1157 = vst.msk [vmem:[%s1156] sm:$0xf] %vm1132, %v1147
      %v1158 = vadd.f32 %v1147, %v1149
      %v1159 = vmul.f32 %v1158, 0.5
      %s1160 = scalar_lea.vmem %s657, 28
      %1161 = vst.msk [vmem:[%s1160] sm:$0xf] %vm1132, %v1159
      %v1162 = vld [vmem:[#allocation2 + $0x4] sm:$0xf]
      %v1163 = vld [vmem:[#allocation3 + $0x8] sm:$0xf]
      %v1164 = vadd.f32 %v1163, %v1162
      %v1165 = vld [vmem:[#allocation4 + $0x8] sm:$0xf]
      %v1166 = vrot.slane %v1162, 4
      %v1167 = vsel %vm1087, %v1166, %v1162
      %v1168 = vrot.slane %v1167, 4
      %v1169 = vsel %vm1087, %v1168, %v1162
      %v1171 = vrot.slane %v1169, 1
      %v1173 = vmul.f32 %v1082, %v1171
      %v1174 = vadd.f32 %v1162, %v1173
      %v1175 = vmul.f32 %v1174, 0.5
      %v1176 = vadd.f32 %v1165, %v1175
      %v1177 = vrot.slane %v1164, 4
      %v1178 = vsel %vm1087, %v1177, %v1164
      %v1179 = vrot.slane %v1178, 4
      %v1180 = vsel %vm1087, %v1179, %v1164
      %v1182 = vrot.slane %v1180, 1
      %v1184 = vmul.f32 %v1082, %v1182
      %s1185 = scalar_lea.vmem %s657, 32
      %1186 = vst.msk [vmem:[%s1185] sm:$0xf] %vm1132, %v1111
      %v1187 = vadd.f32 %v1111, %v1123
      %v1188 = vmul.f32 %v1187, 0.5
      %s1189 = scalar_lea.vmem %s657, 36
      %1190 = vst.msk [vmem:[%s1189] sm:$0xf] %vm1132, %v1188
      %s1191 = scalar_lea.vmem %s657, 40
      %1192 = vst.msk [vmem:[%s1191] sm:$0xf] %vm1132, %v1123
      %v1193 = vadd.f32 %v1123, %v1131
      %v1194 = vmul.f32 %v1193, 0.5
      %s1195 = scalar_lea.vmem %s657, 44
      %1196 = vst.msk [vmem:[%s1195] sm:$0xf] %vm1132, %v1194
      %v1197 = vadd.f32 %v1111, %v1164
      %v1198 = vmul.f32 %v1197, 0.5
      %v1199 = vadd.f32 %v1123, %v1176
      %v1200 = vmul.f32 %v1199, 0.5
      %v1201 = vadd.f32 %v1131, %v1184
      %v1202 = vmul.f32 %v1201, 0.5
      %s1203 = scalar_lea.vmem %s657, 48
      %1204 = vst.msk [vmem:[%s1203] sm:$0xf] %vm1132, %v1198
      %v1205 = vadd.f32 %v1198, %v1200
      %v1206 = vmul.f32 %v1205, 0.5
      %s1207 = scalar_lea.vmem %s657, 52
      %1208 = vst.msk [vmem:[%s1207] sm:$0xf] %vm1132, %v1206
      %s1209 = scalar_lea.vmem %s657, 56
      %1210 = vst.msk [vmem:[%s1209] sm:$0xf] %vm1132, %v1200
      %v1211 = vadd.f32 %v1200, %v1202
      %v1212 = vmul.f32 %v1211, 0.5
      %s1213 = scalar_lea.vmem %s657, 60
      %1214 = vst.msk [vmem:[%s1213] sm:$0xf] %vm1132, %v1212
      %v1215 = vld [vmem:[#allocation2 + $0x4] sm:$0xf]
      %v1216 = vld [vmem:[#allocation2 + $0x8] sm:$0xf]
      %v1217 = vadd.f32 %v1215, %v1216
      %v1218 = vmul.f32 %v1217, 0.5
      %v1219 = vld [vmem:[#allocation3 + $0xc] sm:$0xf]
      %v1220 = vadd.f32 %v1219, %v1218
      %v1221 = vld [vmem:[#allocation4 + $0xc] sm:$0xf]
      %v1222 = vrot.slane %v1218, 4
      %v1223 = vsel %vm1087, %v1222, %v1218
      %v1224 = vrot.slane %v1223, 4
      %v1225 = vsel %vm1087, %v1224, %v1218
      %v1227 = vrot.slane %v1225, 1
      %v1229 = vmul.f32 %v1082, %v1227
      %v1230 = vadd.f32 %v1218, %v1229
      %v1231 = vmul.f32 %v1230, 0.5
      %v1232 = vadd.f32 %v1221, %v1231
      %v1233 = vrot.slane %v1220, 4
      %v1234 = vsel %vm1087, %v1233, %v1220
      %v1235 = vrot.slane %v1234, 4
      %v1236 = vsel %vm1087, %v1235, %v1220
      %v1238 = vrot.slane %v1236, 1
      %v1240 = vmul.f32 %v1082, %v1238
      %s1241 = scalar_lea.vmem %s657, 64
      %1242 = vst.msk [vmem:[%s1241] sm:$0xf] %vm1132, %v1164
      %v1243 = vadd.f32 %v1164, %v1176
      %v1244 = vmul.f32 %v1243, 0.5
      %s1245 = scalar_lea.vmem %s657, 68
      %1246 = vst.msk [vmem:[%s1245] sm:$0xf] %vm1132, %v1244
      %s1247 = scalar_lea.vmem %s657, 72
      %1248 = vst.msk [vmem:[%s1247] sm:$0xf] %vm1132, %v1176
      %v1249 = vadd.f32 %v1176, %v1184
      %v1250 = vmul.f32 %v1249, 0.5
      %s1251 = scalar_lea.vmem %s657, 76
      %1252 = vst.msk [vmem:[%s1251] sm:$0xf] %vm1132, %v1250
      %v1253 = vadd.f32 %v1164, %v1220
      %v1254 = vmul.f32 %v1253, 0.5
      %v1255 = vadd.f32 %v1176, %v1232
      %v1256 = vmul.f32 %v1255, 0.5
      %v1257 = vadd.f32 %v1184, %v1240
      %v1258 = vmul.f32 %v1257, 0.5
      %s1259 = scalar_lea.vmem %s657, 80
      %1260 = vst.msk [vmem:[%s1259] sm:$0xf] %vm1132, %v1254
      %v1261 = vadd.f32 %v1254, %v1256
      %v1262 = vmul.f32 %v1261, 0.5
      %s1263 = scalar_lea.vmem %s657, 84
      %1264 = vst.msk [vmem:[%s1263] sm:$0xf] %vm1132, %v1262
      %s1265 = scalar_lea.vmem %s657, 88
      %1266 = vst.msk [vmem:[%s1265] sm:$0xf] %vm1132, %v1256
      %v1267 = vadd.f32 %v1256, %v1258
      %v1268 = vmul.f32 %v1267, 0.5
      %s1269 = scalar_lea.vmem %s657, 92
      %1270 = vst.msk [vmem:[%s1269] sm:$0xf] %vm1132, %v1268
      %v1271 = vld [vmem:[#allocation2 + $0x8] sm:$0xf]
      %v1272 = vld [vmem:[#allocation3 + $0x10] sm:$0xf]
      %v1273 = vadd.f32 %v1272, %v1271
      %v1274 = vld [vmem:[#allocation4 + $0x10] sm:$0xf]
      %v1275 = vrot.slane %v1271, 4
      %v1276 = vsel %vm1087, %v1275, %v1271
      %v1277 = vrot.slane %v1276, 4
      %v1278 = vsel %vm1087, %v1277, %v1271
      %v1280 = vrot.slane %v1278, 1
      %v1282 = vmul.f32 %v1082, %v1280
      %v1283 = vadd.f32 %v1271, %v1282
      %v1284 = vmul.f32 %v1283, 0.5
      %v1285 = vadd.f32 %v1274, %v1284
      %v1286 = vrot.slane %v1273, 4
      %v1287 = vsel %vm1087, %v1286, %v1273
      %v1288 = vrot.slane %v1287, 4
      %v1289 = vsel %vm1087, %v1288, %v1273
      %v1291 = vrot.slane %v1289, 1
      %v1293 = vmul.f32 %v1082, %v1291
      %s1294 = scalar_lea.vmem %s657, 96
      %1295 = vst.msk [vmem:[%s1294] sm:$0xf] %vm1132, %v1220
      %v1296 = vadd.f32 %v1220, %v1232
      %v1297 = vmul.f32 %v1296, 0.5
      %s1298 = scalar_lea.vmem %s657, 100
      %1299 = vst.msk [vmem:[%s1298] sm:$0xf] %vm1132, %v1297
      %s1300 = scalar_lea.vmem %s657, 104
      %1301 = vst.msk [vmem:[%s1300] sm:$0xf] %vm1132, %v1232
      %v1302 = vadd.f32 %v1232, %v1240
      %v1303 = vmul.f32 %v1302, 0.5
      %s1304 = scalar_lea.vmem %s657, 108
      %1305 = vst.msk [vmem:[%s1304] sm:$0xf] %vm1132, %v1303
      %v1306 = vadd.f32 %v1220, %v1273
      %v1307 = vmul.f32 %v1306, 0.5
      %v1308 = vadd.f32 %v1232, %v1285
      %v1309 = vmul.f32 %v1308, 0.5
      %v1310 = vadd.f32 %v1240, %v1293
      %v1311 = vmul.f32 %v1310, 0.5
      %s1312 = scalar_lea.vmem %s657, 112
      %1313 = vst.msk [vmem:[%s1312] sm:$0xf] %vm1132, %v1307
      %v1314 = vadd.f32 %v1307, %v1309
      %v1315 = vmul.f32 %v1314, 0.5
      %s1316 = scalar_lea.vmem %s657, 116
      %1317 = vst.msk [vmem:[%s1316] sm:$0xf] %vm1132, %v1315
      %s1318 = scalar_lea.vmem %s657, 120
      %1319 = vst.msk [vmem:[%s1318] sm:$0xf] %vm1132, %v1309
      %v1320 = vadd.f32 %v1309, %v1311
      %v1321 = vmul.f32 %v1320, 0.5
      %s1322 = scalar_lea.vmem %s657, 124
      %1323 = vst.msk [vmem:[%s1322] sm:$0xf] %vm1132, %v1321
      %s1324 = smul.u32 8, %s26
      %p1325 = scmp.lt.s32.totalorder %s25, 1
      %s1326 = scalar_select %p1325, %s25, 1
      %p1327 = scmp.lt.s32.totalorder %s1324, 15
      %s1328 = scalar_select %p1327, %s1324, 15
      %s1329 = smul.addr %s1328, 4
      %s1330 = smul.addr %s1326, 64
      %s1331 = sadd.s32 %s1329, %s1330
      %s1332 = smul.addr %s1331, 4
      %s1333 = scalar_lea.vmem %s10, %s1332
      // Predicated region
      $region61: #{skip_arch_forward.5} parent=59 // pred_check
        %p1334 = pneg %p333
      $region62: #{skip_arch_forward.5} parent=59 // pred_check_branch
        %1336 = sbr.rel (%p1334) target = $region64
      $region63: #{skip_arch_forward.5} parent=59 // pred_region
        %s1337 = smul.u32 8, %s26
      $region64: #{skip_arch_forward.5} parent=59 // pred_fallthru
        _
    $region60: #{skip_arch_forward.5} parent=5 // pred_fallthru
      _
    %p1338 = scmp.le.s32.totalorder 2, %s16
    // Predicated region
    $region65: #{skip_arch_forward.5} parent=5 // pred_check
      %p1339 = pneg %p1338
    $region66: #{skip_arch_forward.5} parent=5 // pred_check_branch
      %1341 = sbr.rel (%p1339) target = $region68
    $region67: #{skip_arch_forward.5} parent=5 // pred_region
      %s1342 = ssub.s32 %s16, 2
      // Predicated region
      $region69: #{skip_arch_forward.5} parent=67 // pred_check
        %p1343 = pneg %p339
      $region70: #{skip_arch_forward.5} parent=67 // pred_check_branch
        %1345 = sbr.rel (%p1343) target = $region72
      $region71: #{skip_arch_forward.5} parent=67 // pred_region
        %s1346 = smul.u32 8, %s28
        %p1347 = scmp.lt.s32.totalorder %s27, 1
        %s1348 = scalar_select %p1347, %s27, 1
        %p1349 = scmp.lt.s32.totalorder %s1346, 15
        %s1350 = scalar_select %p1349, %s1346, 15
        %s1351 = smul.addr %s1350, 4
        %s1352 = smul.addr %s1348, 64
        %s1353 = sadd.s32 %s1351, %s1352
        %s1354 = smul.addr %s1353, 4
        %s1355 = scalar_lea.vmem %s10, %s1354
      $region72: #{skip_arch_forward.5} parent=67 // pred_fallthru
        _
    $region68: #{skip_arch_forward.5} parent=5 // pred_fallthru
      _
  $region6: #{skip_arch_forward.5} parent=0 // loop_footer
    %s20 = sadd.s32 1, %s16
  $region7: #{skip_arch_forward.5} parent=0 // loop_footer_branch
    %15 = sbr.rel target = $region3
  $region8: #{skip_arch_forward.5} parent=0 // loop_exit
    _

</llo_original>
